<compile_context>
chip_gen: v6e
topology: v6e:2x2x1
jax: 0.10.0
libtpu: 0.0.40
codegen_flags: <defaults>
</compile_context>

<pallas_src>
import jax
import jax.numpy as jnp
from jax.experimental import pallas as pl
from jax.experimental.pallas import tpu as pltpu

# Keep f32 matmuls exact on both the Pallas side and the XLA reference side so
# the correctness check can use a tight tolerance.
jax.config.update("jax_default_matmul_precision", "highest")


# ---------------------------------------------------------------------------
# Kernel 1: pointwise conv + (folded) BN + ReLU on a (C, tile_n) slab.
# ---------------------------------------------------------------------------
def _pw_conv_bn_relu_kernel(x_ref, w_ref, b_ref, out_ref):
    x = x_ref[0].astype(jnp.float32)                               # (Cin, TN)
    y = jnp.dot(w_ref[...], x, preferred_element_type=jnp.float32) + b_ref[...]
    out_ref[0] = jnp.maximum(y, 0.0).astype(out_ref.dtype)


# ---------------------------------------------------------------------------
# Kernel 2: Encoding3D reductions for one (batch, n-tile) block.
#   R        = x - codewords                          (K, C, TN)
#   A        = softmax_K(scale * R^2)                 (never materialized)
#   e2 tile  = sum_K (A * R)                          (C, TN)
#   e1 acc  += sum_N (A * R)                          (K, C)  accumulated across
#                                                     the last ('arbitrary') axis
# ---------------------------------------------------------------------------
def _encoding_stage1_kernel(x_ref, cw_ref, sc_ref, e2_ref, e1_ref):
    ni = pl.program_id(2)

    x = x_ref[0].astype(jnp.float32)                               # (C, TN)
    cw = cw_ref[...]                                               # (K, C)
    sc = sc_ref[...]                                               # (K, C)

    r = x[None, :, :] - cw[:, :, None]                             # (K, C, TN)
    logits = sc[:, :, None] * (r * r)                              # (K, C, TN)

    # softmax over K: K is the leading (slab) axis -> elementwise VPU max/sum,
    # no cross-lane shuffles.
    m = jnp.max(logits, axis=0, keepdims=True)                     # (1, C, TN)
    ex = jnp.exp(logits - m)
    # One reciprocal per (c, n) instead of K divides; approx=True would move it
    # to the otherwise-idle EUP slot at ~1e-4 rel. error (loosen the check if used).
    inv = pl.reciprocal(jnp.sum(ex, axis=0, keepdims=True), approx=False)
    ar = (ex * inv) * r                                            # A*R, (K, C, TN)

    # lane-dense (full 128-lane) e2 store in the (B, C, N) layout
    e2_ref[0] = jnp.sum(ar, axis=0).astype(e2_ref.dtype)           # (C, TN)

    @pl.when(ni == 0)
    def _():
        e1_ref[...] = jnp.zeros_like(e1_ref)

    e1_ref[0] += jnp.sum(ar, axis=2)                               # (K, C)


# ---------------------------------------------------------------------------
# Kernel 3: fused tail on a (C, tile_n) slab.
#   h   = relu(a * relu(e2) + sh)      # (1+gamma) gate + BN2 + ReLU
#                                      # a = bn2_scale*(1+gamma); folding is exact
#                                      # since 1+gamma = 1+sigmoid(.) > 0
#   out = relu(Wx @ x + Wh @ h + b)    # concat-free conv2 (split weights) + BN3 + ReLU
# ---------------------------------------------------------------------------
def _gate_conv_bn_relu_kernel(x_ref, e2_ref, a_ref, sh_ref, wx_ref, wh_ref,
                              b_ref, out_ref):
    x = x_ref[0].astype(jnp.float32)                               # (C, TN)
    e2 = e2_ref[0].astype(jnp.float32)                             # (C, TN)
    h = jnp.maximum(a_ref[0] * jnp.maximum(e2, 0.0) + sh_ref[0], 0.0)
    y = (jnp.dot(wx_ref[...], x, preferred_element_type=jnp.float32)
         + jnp.dot(wh_ref[...], h, preferred_element_type=jnp.float32)
         + b_ref[...])
    out_ref[0] = jnp.maximum(y, 0.0).astype(out_ref.dtype)


# ---------------------------------------------------------------------------
# Wrapper
# ---------------------------------------------------------------------------
def _pick_tile_n(n, k, d, tile_n=None, vmem_budget_bytes=12 * 1024 * 1024):
    """Largest lane-dense (multiple-of-128) n tile whose stage-1 temporaries fit."""
    if tile_n is not None:
        assert n % tile_n == 0, "N must be divisible by tile_n"
        return tile_n
    # ~4 live f32 (K, C, tile_n) temporaries dominate the Encoding3D kernel's VMEM.
    cap = max(128, vmem_budget_bytes // (4 * k * d * 4))
    for t in (1024, 512, 256, 128):
        if t <= cap and n % t == 0:
            return t
    return n  # small / irregular N: single full-width tile


def embedding_module3d_forward(x, params, *, tile_n=None, n_outer=1,
                               stream_dtype=jnp.float32, eps=1e-5):
    """EmbeddingModule3D forward (eval-mode BatchNorm).  x: (B, C, T, H, W).

    stream_dtype: dtype of the h1/e2 intermediates streamed through HBM.  Set to
      jnp.bfloat16 on v6e/v7x to halve that traffic (loosen tolerances); keep
      f32 on v5e (no bf16 VPU).
    n_outer: splits the N axis of the Encoding3D kernel into an extra 'parallel'
      grid axis (use >1 on v7x's 2 TensorCores when B is small); e1 partials are
      reduced in plain JAX afterwards.
    """
    B, C, T, H, W = x.shape
    N = T * H * W
    K, D = params["codewords"].shape
    assert D == C

    xf = x.reshape(B, C, N).astype(jnp.float32)          # channel-on-sublane, no transpose

    tile_n = _pick_tile_n(N, K, C, tile_n)
    n_tiles = N // tile_n
    assert n_tiles % n_outer == 0, "n_outer must divide N // tile_n"
    tpo = n_tiles // n_outer                             # n tiles per outer step
    f32 = jnp.float32

    # ---- fold BN1 (eval) into conv1 ---------------------------------------
    s1 = params["bn1_gamma"] * jax.lax.rsqrt(params["bn1_var"] + eps)
    w1 = (s1[:, None] * params["conv1_w"]).astype(f32)                     # (C, C)
    c1b = (params["bn1_beta"] - s1 * params["bn1_mean"]).reshape(C, 1).astype(f32)

    row_spec = pl.BlockSpec((1, C, tile_n), lambda b, n: (b, 0, n))

    h1 = pl.pallas_call(
        _pw_conv_bn_relu_kernel,
        out_shape=jax.ShapeDtypeStruct((B, C, N), stream_dtype),
        grid_spec=pltpu.PrefetchScalarGridSpec(
            num_scalar_prefetch=0,
            grid=(B, n_tiles),
            in_specs=[
                row_spec,
                pl.BlockSpec((C, C), lambda b, n: (0, 0)),
                pl.BlockSpec((C, 1), lambda b, n: (0, 0)),
            ],
            out_specs=row_spec,
        ),
        compiler_params=pltpu.CompilerParams(
            dimension_semantics=("parallel", "parallel")),
    )(xf, w1, c1b)

    # ---- Encoding3D reductions --------------------------------------------
    enc_row = pl.BlockSpec((1, C, tile_n),
                           lambda b, no, ni: (b, 0, no * tpo + ni))
    e2, e1p = pl.pallas_call(
        _encoding_stage1_kernel,
        out_shape=(jax.ShapeDtypeStruct((B, C, N), stream_dtype),
                   jax.ShapeDtypeStruct((B * n_outer, K, C), f32)),
        grid_spec=pltpu.PrefetchScalarGridSpec(
            num_scalar_prefetch=0,
            grid=(B, n_outer, tpo),
            in_specs=[
                enc_row,
                pl.BlockSpec((K, C), lambda b, no, ni: (0, 0)),
                pl.BlockSpec((K, C), lambda b, no, ni: (0, 0)),
            ],
            out_specs=[
                enc_row,
                pl.BlockSpec((1, K, C), lambda b, no, ni: (b * n_outer + no, 0, 0)),
            ],
        ),
        compiler_params=pltpu.CompilerParams(
            dimension_semantics=("parallel", "parallel", "arbitrary"),
            vmem_limit_bytes=32 * 1024 * 1024),
    )(h1, params["codewords"].astype(f32), params["scale"].astype(f32))

    # ---- channel gate: tiny per-batch matmul, hoisted out of the grid ------
    e1 = e1p.reshape(B, n_outer, K, C).sum(axis=1)       # (B, K, C)
    gamma = jax.nn.sigmoid(e1.mean(axis=1) @ params["fc_w"].T + params["fc_b"])  # (B, C)

    # ---- fold BN2 into the gate, BN3 + conv2 bias into the split conv2 -----
    s2 = params["bn2_gamma"] * jax.lax.rsqrt(params["bn2_var"] + eps)
    sh2 = params["bn2_beta"] - s2 * params["bn2_mean"]
    a_gate = (s2[None, :] * (1.0 + gamma))[:, :, None].astype(f32)         # (B, C, 1)
    sh_gate = sh2.reshape(1, C, 1).astype(f32)

    s3 = params["bn3_gamma"] * jax.lax.rsqrt(params["bn3_var"] + eps)
    wx = (s3[:, None] * params["conv2_w"][:, :C]).astype(f32)              # (C, C)
    wh = (s3[:, None] * params["conv2_w"][:, C:]).astype(f32)              # (C, C)
    bo = (s3 * (params["conv2_b"] - params["bn3_mean"])
          + params["bn3_beta"]).reshape(C, 1).astype(f32)

    # TODO(synk): if xprof still shows exposed DMA on this pure streaming pass,
    # add pipeline_mode=pl.Buffered(3) on the x/e2/out row specs.
    out = pl.pallas_call(
        _gate_conv_bn_relu_kernel,
        out_shape=jax.ShapeDtypeStruct((B, C, N), jnp.float32),
        grid_spec=pltpu.PrefetchScalarGridSpec(
            num_scalar_prefetch=0,
            grid=(B, n_tiles),
            in_specs=[
                row_spec,                                          # x
                row_spec,                                          # e2
                pl.BlockSpec((1, C, 1), lambda b, n: (b, 0, 0)),   # gate scale
                pl.BlockSpec((1, C, 1), lambda b, n: (0, 0, 0)),   # gate shift
                pl.BlockSpec((C, C), lambda b, n: (0, 0)),         # Wx
                pl.BlockSpec((C, C), lambda b, n: (0, 0)),         # Wh
                pl.BlockSpec((C, 1), lambda b, n: (0, 0)),         # bias
            ],
            out_specs=row_spec,
        ),
        compiler_params=pltpu.CompilerParams(
            dimension_semantics=("parallel", "parallel")),
    )(xf, e2, a_gate, sh_gate, wx, wh, bo)

    return out.reshape(B, C, T, H, W)


# ---------------------------------------------------------------------------
# Pure-JAX reference mirroring the PyTorch EmbeddingModule3D forward
# (BatchNorm in eval mode).
# ---------------------------------------------------------------------------
def embedding_module3d_reference(x, params, eps=1e-5):
    B, C, T, H, W = x.shape
    N = T * H * W

    def bn(v, g, b, m, var):                              # v: (B, C, N)
        s = g / jnp.sqrt(var + eps)
        return s[None, :, None] * (v - m[None, :, None]) + b[None, :, None]

    xf = x.reshape(B, C, N)
    h = jnp.einsum("oc,bcn->bon", params["conv1_w"], xf)
    h = jnp.maximum(bn(h, params["bn1_gamma"], params["bn1_beta"],
                       params["bn1_mean"], params["bn1_var"]), 0.0)

    # Encoding3D (encoding=False branch)
    I = jnp.transpose(h, (0, 2, 1))                        # (B, N, C)
    R = I[:, :, None, :] - params["codewords"][None, None]
    A = jax.nn.softmax(params["scale"][None, None] * R ** 2, axis=2)
    E1 = (A * R).sum(axis=1)                               # (B, K, C)
    gamma = jax.nn.sigmoid(E1.mean(axis=1) @ params["fc_w"].T + params["fc_b"])
    E2 = jnp.transpose((A * R).sum(axis=2), (0, 2, 1))     # (B, C, N)
    enc = jnp.maximum(E2 + E2 * gamma[:, :, None], 0.0)

    h3 = jnp.maximum(bn(enc, params["bn2_gamma"], params["bn2_beta"],
                        params["bn2_mean"], params["bn2_var"]), 0.0)
    cat = jnp.concatenate([xf, h3], axis=1)                # (B, 2C, N)
    out = (jnp.einsum("oc,bcn->bon", params["conv2_w"], cat)
           + params["conv2_b"][None, :, None])
    out = jnp.maximum(bn(out, params["bn3_gamma"], params["bn3_beta"],
                         params["bn3_mean"], params["bn3_var"]), 0.0)
    return out.reshape(B, C, T, H, W)


if __name__ == "__main__":
    B, C, K = 2, 16, 24            # in_channels=16, ncodes=24 (module default)
    T, H, W = 4, 8, 8              # N = 256 spatial positions (multiple of 128)

    key = jax.random.PRNGKey(0)
    ks = jax.random.split(key, 20)

    def u(k, shape, lo, hi):
        return jax.random.uniform(k, shape, jnp.float32, lo, hi)

    std1 = 1.0 / (K * C) ** 0.5
    bfc = 1.0 / C ** 0.5
    bw1 = 1.0 / C ** 0.5
    bw2 = 1.0 / (2 * C) ** 0.5

    params = {
        "conv1_w": u(ks[0], (C, C), -bw1, bw1),
        "bn1_gamma": u(ks[1], (C,), 0.6, 1.4),
        "bn1_beta": u(ks[2], (C,), -0.3, 0.3),
        "bn1_mean": u(ks[3], (C,), -0.3, 0.3),
        "bn1_var": u(ks[4], (C,), 0.5, 1.5),
        "codewords": u(ks[5], (K, C), -std1, std1),
        "scale": u(ks[6], (K, C), -1.0, 0.0),
        "fc_w": u(ks[7], (C, C), -bfc, bfc),
        "fc_b": u(ks[8], (C,), -bfc, bfc),
        "bn2_gamma": u(ks[9], (C,), 0.6, 1.4),
        "bn2_beta": u(ks[10], (C,), -0.3, 0.3),
        "bn2_mean": u(ks[11], (C,), -0.3, 0.3),
        "bn2_var": u(ks[12], (C,), 0.5, 1.5),
        "conv2_w": u(ks[13], (C, 2 * C), -bw2, bw2),
        "conv2_b": u(ks[14], (C,), -bw2, bw2),
        "bn3_gamma": u(ks[15], (C,), 0.6, 1.4),
        "bn3_beta": u(ks[16], (C,), -0.3, 0.3),
        "bn3_mean": u(ks[17], (C,), -0.3, 0.3),
        "bn3_var": u(ks[18], (C,), 0.5, 1.5),
    }
    x = jax.random.normal(ks[19], (B, C, T, H, W), jnp.float32)

    fwd = jax.jit(embedding_module3d_forward)
    out = jax.block_until_ready(fwd(x, params))

    ref = embedding_module3d_reference(x, params)
    assert out.shape == (B, C, T, H, W)
    assert jnp.allclose(out, ref, rtol=1e-3, atol=1e-3), (
        "mismatch vs reference, max abs err = "
        f"{float(jnp.max(jnp.abs(out - ref)))}")

    print("KERNEL_OK")
</pallas_src>

<mosaic_0001>
module attributes {stable_mosaic.version = 11 : i64} {
  func.func @_pw_conv_bn_relu_kernel(%arg0: i32, %arg1: i32, %arg2: memref<1x16x256xf32, #tpu.memory_space<vmem>>, %arg3: memref<16x16xf32, #tpu.memory_space<vmem>>, %arg4: memref<16x1xf32, #tpu.memory_space<vmem>>, %arg5: memref<1x16x256xf32, #tpu.memory_space<vmem>>) attributes {dimension_semantics = [#tpu.dimension_semantics<parallel>, #tpu.dimension_semantics<parallel>], iteration_bounds = array<i64: 2, 1>, scalar_prefetch = 0 : i64, scratch_operands = 0 : i64, tpu.core_type = #tpu.core_type<tc>, window_params = [{transform_indices = @transform_0, window_bounds = array<i64: 1, 16, 256>}, {pipeline_mode = #tpu.pipeline_mode<synchronous>, transform_indices = @transform_1, window_bounds = array<i64: 16, 16>}, {pipeline_mode = #tpu.pipeline_mode<synchronous>, transform_indices = @transform_2, window_bounds = array<i64: 16, 1>}, {transform_indices = @transform_3, window_bounds = array<i64: 1, 16, 256>}]} {
    %c0 = arith.constant 0 : index
    %c0_0 = arith.constant 0 : index
    %c0_1 = arith.constant 0 : index
    %0 = vector.load %arg2[%c0, %c0_0, %c0_1] : memref<1x16x256xf32, #tpu.memory_space<vmem>>, vector<1x16x256xf32>
    %1 = vector.shape_cast %0 : vector<1x16x256xf32> to vector<16x256xf32>
    %c0_2 = arith.constant 0 : index
    %c0_3 = arith.constant 0 : index
    %2 = vector.load %arg3[%c0_2, %c0_3] : memref<16x16xf32, #tpu.memory_space<vmem>>, vector<16x16xf32>
    %cst = arith.constant dense<0.000000e+00> : vector<16x256xf32>
    %3 = tpu.matmul %2, %1, %cst {dimension_numbers = #tpu.dot_dimension_numbers<[1], [0], [0], [1], [0, 0, 1, 1], [], []>, precision = #tpu.contract_precision<fp32>} : vector<16x16xf32>, vector<16x256xf32>, vector<16x256xf32> -> vector<16x256xf32>
    %c0_4 = arith.constant 0 : index
    %c0_5 = arith.constant 0 : index
    %4 = vector.load %arg4[%c0_4, %c0_5] : memref<16x1xf32, #tpu.memory_space<vmem>>, vector<16x1xf32>
    %5 = vector.broadcast %4 : vector<16x1xf32> to vector<16x256xf32>
    %6 = arith.addf %3, %5 : vector<16x256xf32>
    %cst_6 = arith.constant 0.000000e+00 : f32
    %7 = vector.broadcast %cst_6 : f32 to vector<16x256xf32>
    %8 = arith.maximumf %6, %7 : vector<16x256xf32>
    %c0_7 = arith.constant 0 : index
    %c0_8 = arith.constant 0 : index
    %c0_9 = arith.constant 0 : index
    %9 = vector.load %arg5[%c0_7, %c0_8, %c0_9] : memref<1x16x256xf32, #tpu.memory_space<vmem>>, vector<1x16x256xf32>
    %10 = vector.shape_cast %9 : vector<1x16x256xf32> to vector<16x256xf32>
    %11 = vector.shape_cast %8 : vector<16x256xf32> to vector<1x16x256xf32>
    tpu.vector_store %arg5[%c0_7, %c0_8, %c0_9], %11 {strides = array<i32>} : memref<1x16x256xf32, #tpu.memory_space<vmem>>, vector<1x16x256xf32>,
    return
  }
  func.func @transform_0(%arg0: i32, %arg1: i32) -> (i32, i32, i32) {
    %c0_i32 = arith.constant 0 : i32
    %c0_i32_0 = arith.constant 0 : i32
    return %arg0, %c0_i32, %arg1 : i32, i32, i32
  }
  func.func @transform_1(%arg0: i32, %arg1: i32) -> (i32, i32) {
    %c0_i32 = arith.constant 0 : i32
    %c0_i32_0 = arith.constant 0 : i32
    %c0_i32_1 = arith.constant 0 : i32
    return %c0_i32, %c0_i32_0 : i32, i32
  }
  func.func @transform_2(%arg0: i32, %arg1: i32) -> (i32, i32) {
    %c0_i32 = arith.constant 0 : i32
    %c0_i32_0 = arith.constant 0 : i32
    %c0_i32_1 = arith.constant 0 : i32
    return %c0_i32, %c0_i32_0 : i32, i32
  }
  func.func @transform_3(%arg0: i32, %arg1: i32) -> (i32, i32, i32) {
    %c0_i32 = arith.constant 0 : i32
    %c0_i32_0 = arith.constant 0 : i32
    return %arg0, %c0_i32, %arg1 : i32, i32, i32
  }
}

module attributes {stable_mosaic.version = 11 : i64} {
  func.func @_encoding_stage1_kernel(%arg0: i32, %arg1: i32, %arg2: i32, %arg3: memref<1x16x256xf32, #tpu.memory_space<vmem>>, %arg4: memref<24x16xf32, #tpu.memory_space<vmem>>, %arg5: memref<24x16xf32, #tpu.memory_space<vmem>>, %arg6: memref<1x16x256xf32, #tpu.memory_space<vmem>>, %arg7: memref<1x24x16xf32, #tpu.memory_space<vmem>>) attributes {dimension_semantics = [#tpu.dimension_semantics<parallel>, #tpu.dimension_semantics<parallel>, #tpu.dimension_semantics<arbitrary>], iteration_bounds = array<i64: 2, 1, 1>, scalar_prefetch = 0 : i64, scratch_operands = 0 : i64, tpu.core_type = #tpu.core_type<tc>, window_params = [{transform_indices = @transform_0, window_bounds = array<i64: 1, 16, 256>}, {pipeline_mode = #tpu.pipeline_mode<synchronous>, transform_indices = @transform_1, window_bounds = array<i64: 24, 16>}, {pipeline_mode = #tpu.pipeline_mode<synchronous>, transform_indices = @transform_2, window_bounds = array<i64: 24, 16>}, {transform_indices = @transform_3, window_bounds = array<i64: 1, 16, 256>}, {transform_indices = @transform_4, window_bounds = array<i64: 1, 24, 16>}]} {
    %c0 = arith.constant 0 : index
    %c0_0 = arith.constant 0 : index
    %c0_1 = arith.constant 0 : index
    %0 = vector.load %arg3[%c0, %c0_0, %c0_1] : memref<1x16x256xf32, #tpu.memory_space<vmem>>, vector<1x16x256xf32>
    %1 = vector.shape_cast %0 : vector<1x16x256xf32> to vector<16x256xf32>
    %c0_2 = arith.constant 0 : index
    %c0_3 = arith.constant 0 : index
    %2 = vector.load %arg4[%c0_2, %c0_3] : memref<24x16xf32, #tpu.memory_space<vmem>>, vector<24x16xf32>
    %c0_4 = arith.constant 0 : index
    %c0_5 = arith.constant 0 : index
    %3 = vector.load %arg5[%c0_4, %c0_5] : memref<24x16xf32, #tpu.memory_space<vmem>>, vector<24x16xf32>
    %4 = vector.shape_cast %1 : vector<16x256xf32> to vector<1x16x256xf32>
    %5 = vector.shape_cast %2 : vector<24x16xf32> to vector<24x16x1xf32>
    %6 = vector.broadcast %4 : vector<1x16x256xf32> to vector<24x16x256xf32>
    %7 = vector.broadcast %5 : vector<24x16x1xf32> to vector<24x16x256xf32>
    %8 = arith.subf %6, %7 : vector<24x16x256xf32>
    %9 = vector.shape_cast %3 : vector<24x16xf32> to vector<24x16x1xf32>
    %10 = arith.mulf %8, %8 : vector<24x16x256xf32>
    %11 = vector.broadcast %9 : vector<24x16x1xf32> to vector<24x16x256xf32>
    %12 = arith.mulf %11, %10 : vector<24x16x256xf32>
    %cst = arith.constant dense<0xFF800000> : vector<16x256xf32>
    %13 = vector.multi_reduction <maximumf>, %12, %cst [0] : vector<24x16x256xf32> to vector<16x256xf32>
    %14 = vector.shape_cast %13 : vector<16x256xf32> to vector<1x16x256xf32>
    %15 = vector.broadcast %14 : vector<1x16x256xf32> to vector<24x16x256xf32>
    %16 = arith.subf %12, %15 : vector<24x16x256xf32>
    %17 = math.exp %16 : vector<24x16x256xf32>
    %cst_6 = arith.constant dense<0.000000e+00> : vector<16x256xf32>
    %18 = vector.multi_reduction <add>, %17, %cst_6 [0] : vector<24x16x256xf32> to vector<16x256xf32>
    %19 = vector.shape_cast %18 : vector<16x256xf32> to vector<1x16x256xf32>
    %20 = tpu.reciprocal %19 : vector<1x16x256xf32> -> vector<1x16x256xf32>
    %21 = vector.broadcast %20 : vector<1x16x256xf32> to vector<24x16x256xf32>
    %22 = arith.mulf %17, %21 : vector<24x16x256xf32>
    %23 = arith.mulf %22, %8 : vector<24x16x256xf32>
    %cst_7 = arith.constant dense<0.000000e+00> : vector<16x256xf32>
    %24 = vector.multi_reduction <add>, %23, %cst_7 [0] : vector<24x16x256xf32> to vector<16x256xf32>
    %c0_8 = arith.constant 0 : index
    %c0_9 = arith.constant 0 : index
    %c0_10 = arith.constant 0 : index
    %25 = vector.load %arg6[%c0_8, %c0_9, %c0_10] : memref<1x16x256xf32, #tpu.memory_space<vmem>>, vector<1x16x256xf32>
    %26 = vector.shape_cast %25 : vector<1x16x256xf32> to vector<16x256xf32>
    %27 = vector.shape_cast %24 : vector<16x256xf32> to vector<1x16x256xf32>
    tpu.vector_store %arg6[%c0_8, %c0_9, %c0_10], %27 {strides = array<i32>} : memref<1x16x256xf32, #tpu.memory_space<vmem>>, vector<1x16x256xf32>,
    %c0_i32 = arith.constant 0 : i32
    %28 = arith.cmpi eq, %arg2, %c0_i32 : i32
    %29 = arith.extui %28 : i1 to i32
    %c0_i32_11 = arith.constant 0 : i32
    %30 = arith.cmpi ne, %29, %c0_i32_11 : i32
    scf.if %30 {
      %cst_19 = arith.constant 0.000000e+00 : f32
      %38 = vector.broadcast %cst_19 : f32 to vector<1x24x16xf32>
      %c0_20 = arith.constant 0 : index
      %c0_21 = arith.constant 0 : index
      %c0_22 = arith.constant 0 : index
      %39 = vector.load %arg7[%c0_20, %c0_21, %c0_22] : memref<1x24x16xf32, #tpu.memory_space<vmem>>, vector<1x24x16xf32>
      tpu.vector_store %arg7[%c0_20, %c0_21, %c0_22], %38 {strides = array<i32>} : memref<1x24x16xf32, #tpu.memory_space<vmem>>, vector<1x24x16xf32>,
    } else {
    }
    %c0_12 = arith.constant 0 : index
    %c0_13 = arith.constant 0 : index
    %c0_14 = arith.constant 0 : index
    %31 = vector.load %arg7[%c0_12, %c0_13, %c0_14] : memref<1x24x16xf32, #tpu.memory_space<vmem>>, vector<1x24x16xf32>
    %32 = vector.shape_cast %31 : vector<1x24x16xf32> to vector<24x16xf32>
    %cst_15 = arith.constant dense<0.000000e+00> : vector<24x16xf32>
    %33 = vector.multi_reduction <add>, %23, %cst_15 [2] : vector<24x16x256xf32> to vector<24x16xf32>
    %34 = arith.addf %32, %33 : vector<24x16xf32>
    %c0_16 = arith.constant 0 : index
    %c0_17 = arith.constant 0 : index
    %c0_18 = arith.constant 0 : index
    %35 = vector.load %arg7[%c0_16, %c0_17, %c0_18] : memref<1x24x16xf32, #tpu.memory_space<vmem>>, vector<1x24x16xf32>
    %36 = vector.shape_cast %35 : vector<1x24x16xf32> to vector<24x16xf32>
    %37 = vector.shape_cast %34 : vector<24x16xf32> to vector<1x24x16xf32>
    tpu.vector_store %arg7[%c0_16, %c0_17, %c0_18], %37 {strides = array<i32>} : memref<1x24x16xf32, #tpu.memory_space<vmem>>, vector<1x24x16xf32>,
    return
  }
  func.func @transform_0(%arg0: i32, %arg1: i32, %arg2: i32) -> (i32, i32, i32) {
    %c1_i32 = arith.constant 1 : i32
    %0 = arith.muli %arg1, %c1_i32 : i32
    %1 = arith.addi %0, %arg2 : i32
    %c0_i32 = arith.constant 0 : i32
    %c0_i32_0 = arith.constant 0 : i32
    return %arg0, %c0_i32, %1 : i32, i32, i32
  }
  func.func @transform_1(%arg0: i32, %arg1: i32, %arg2: i32) -> (i32, i32) {
    %c0_i32 = arith.constant 0 : i32
    %c0_i32_0 = arith.constant 0 : i32
    %c0_i32_1 = arith.constant 0 : i32
    return %c0_i32, %c0_i32_0 : i32, i32
  }
  func.func @transform_2(%arg0: i32, %arg1: i32, %arg2: i32) -> (i32, i32) {
    %c0_i32 = arith.constant 0 : i32
    %c0_i32_0 = arith.constant 0 : i32
    %c0_i32_1 = arith.constant 0 : i32
    return %c0_i32, %c0_i32_0 : i32, i32
  }
  func.func @transform_3(%arg0: i32, %arg1: i32, %arg2: i32) -> (i32, i32, i32) {
    %c1_i32 = arith.constant 1 : i32
    %0 = arith.muli %arg1, %c1_i32 : i32
    %1 = arith.addi %0, %arg2 : i32
    %c0_i32 = arith.constant 0 : i32
    %c0_i32_0 = arith.constant 0 : i32
    return %arg0, %c0_i32, %1 : i32, i32, i32
  }
  func.func @transform_4(%arg0: i32, %arg1: i32, %arg2: i32) -> (i32, i32, i32) {
    %c1_i32 = arith.constant 1 : i32
    %0 = arith.muli %arg0, %c1_i32 : i32
    %1 = arith.addi %0, %arg1 : i32
    %c0_i32 = arith.constant 0 : i32
    %c0_i32_0 = arith.constant 0 : i32
    %c0_i32_1 = arith.constant 0 : i32
    return %1, %c0_i32, %c0_i32_0 : i32, i32, i32
  }
}

module attributes {stable_mosaic.version = 11 : i64} {
  func.func @_gate_conv_bn_relu_kernel(%arg0: i32, %arg1: i32, %arg2: memref<1x16x256xf32, #tpu.memory_space<vmem>>, %arg3: memref<1x16x256xf32, #tpu.memory_space<vmem>>, %arg4: memref<1x16x1xf32, #tpu.memory_space<vmem>>, %arg5: memref<1x16x1xf32, #tpu.memory_space<vmem>>, %arg6: memref<16x16xf32, #tpu.memory_space<vmem>>, %arg7: memref<16x16xf32, #tpu.memory_space<vmem>>, %arg8: memref<16x1xf32, #tpu.memory_space<vmem>>, %arg9: memref<1x16x256xf32, #tpu.memory_space<vmem>>) attributes {dimension_semantics = [#tpu.dimension_semantics<parallel>, #tpu.dimension_semantics<parallel>], iteration_bounds = array<i64: 2, 1>, scalar_prefetch = 0 : i64, scratch_operands = 0 : i64, tpu.core_type = #tpu.core_type<tc>, window_params = [{transform_indices = @transform_0, window_bounds = array<i64: 1, 16, 256>}, {transform_indices = @transform_1, window_bounds = array<i64: 1, 16, 256>}, {transform_indices = @transform_2, window_bounds = array<i64: 1, 16, 1>}, {pipeline_mode = #tpu.pipeline_mode<synchronous>, transform_indices = @transform_3, window_bounds = array<i64: 1, 16, 1>}, {pipeline_mode = #tpu.pipeline_mode<synchronous>, transform_indices = @transform_4, window_bounds = array<i64: 16, 16>}, {pipeline_mode = #tpu.pipeline_mode<synchronous>, transform_indices = @transform_5, window_bounds = array<i64: 16, 16>}, {pipeline_mode = #tpu.pipeline_mode<synchronous>, transform_indices = @transform_6, window_bounds = array<i64: 16, 1>}, {transform_indices = @transform_7, window_bounds = array<i64: 1, 16, 256>}]} {
    %c0 = arith.constant 0 : index
    %c0_0 = arith.constant 0 : index
    %c0_1 = arith.constant 0 : index
    %0 = vector.load %arg2[%c0, %c0_0, %c0_1] : memref<1x16x256xf32, #tpu.memory_space<vmem>>, vector<1x16x256xf32>
    %1 = vector.shape_cast %0 : vector<1x16x256xf32> to vector<16x256xf32>
    %c0_2 = arith.constant 0 : index
    %c0_3 = arith.constant 0 : index
    %c0_4 = arith.constant 0 : index
    %2 = vector.load %arg3[%c0_2, %c0_3, %c0_4] : memref<1x16x256xf32, #tpu.memory_space<vmem>>, vector<1x16x256xf32>
    %3 = vector.shape_cast %2 : vector<1x16x256xf32> to vector<16x256xf32>
    %c0_5 = arith.constant 0 : index
    %c0_6 = arith.constant 0 : index
    %c0_7 = arith.constant 0 : index
    %4 = vector.load %arg4[%c0_5, %c0_6, %c0_7] : memref<1x16x1xf32, #tpu.memory_space<vmem>>, vector<1x16x1xf32>
    %5 = vector.shape_cast %4 : vector<1x16x1xf32> to vector<16x1xf32>
    %cst = arith.constant 0.000000e+00 : f32
    %6 = vector.broadcast %cst : f32 to vector<16x256xf32>
    %7 = arith.maximumf %3, %6 : vector<16x256xf32>
    %8 = vector.broadcast %5 : vector<16x1xf32> to vector<16x256xf32>
    %9 = arith.mulf %8, %7 : vector<16x256xf32>
    %c0_8 = arith.constant 0 : index
    %c0_9 = arith.constant 0 : index
    %c0_10 = arith.constant 0 : index
    %10 = vector.load %arg5[%c0_8, %c0_9, %c0_10] : memref<1x16x1xf32, #tpu.memory_space<vmem>>, vector<1x16x1xf32>
    %11 = vector.shape_cast %10 : vector<1x16x1xf32> to vector<16x1xf32>
    %12 = vector.broadcast %11 : vector<16x1xf32> to vector<16x256xf32>
    %13 = arith.addf %9, %12 : vector<16x256xf32>
    %cst_11 = arith.constant 0.000000e+00 : f32
    %14 = vector.broadcast %cst_11 : f32 to vector<16x256xf32>
    %15 = arith.maximumf %13, %14 : vector<16x256xf32>
    %c0_12 = arith.constant 0 : index
    %c0_13 = arith.constant 0 : index
    %16 = vector.load %arg6[%c0_12, %c0_13] : memref<16x16xf32, #tpu.memory_space<vmem>>, vector<16x16xf32>
    %cst_14 = arith.constant dense<0.000000e+00> : vector<16x256xf32>
    %17 = tpu.matmul %16, %1, %cst_14 {dimension_numbers = #tpu.dot_dimension_numbers<[1], [0], [0], [1], [0, 0, 1, 1], [], []>, precision = #tpu.contract_precision<fp32>} : vector<16x16xf32>, vector<16x256xf32>, vector<16x256xf32> -> vector<16x256xf32>
    %c0_15 = arith.constant 0 : index
    %c0_16 = arith.constant 0 : index
    %18 = vector.load %arg7[%c0_15, %c0_16] : memref<16x16xf32, #tpu.memory_space<vmem>>, vector<16x16xf32>
    %cst_17 = arith.constant dense<0.000000e+00> : vector<16x256xf32>
    %19 = tpu.matmul %18, %15, %cst_17 {dimension_numbers = #tpu.dot_dimension_numbers<[1], [0], [0], [1], [0, 0, 1, 1], [], []>, precision = #tpu.contract_precision<fp32>} : vector<16x16xf32>, vector<16x256xf32>, vector<16x256xf32> -> vector<16x256xf32>
    %20 = arith.addf %17, %19 : vector<16x256xf32>
    %c0_18 = arith.constant 0 : index
    %c0_19 = arith.constant 0 : index
    %21 = vector.load %arg8[%c0_18, %c0_19] : memref<16x1xf32, #tpu.memory_space<vmem>>, vector<16x1xf32>
    %22 = vector.broadcast %21 : vector<16x1xf32> to vector<16x256xf32>
    %23 = arith.addf %20, %22 : vector<16x256xf32>
    %cst_20 = arith.constant 0.000000e+00 : f32
    %24 = vector.broadcast %cst_20 : f32 to vector<16x256xf32>
    %25 = arith.maximumf %23, %24 : vector<16x256xf32>
    %c0_21 = arith.constant 0 : index
    %c0_22 = arith.constant 0 : index
    %c0_23 = arith.constant 0 : index
    %26 = vector.load %arg9[%c0_21, %c0_22, %c0_23] : memref<1x16x256xf32, #tpu.memory_space<vmem>>, vector<1x16x256xf32>
    %27 = vector.shape_cast %26 : vector<1x16x256xf32> to vector<16x256xf32>
    %28 = vector.shape_cast %25 : vector<16x256xf32> to vector<1x16x256xf32>
    tpu.vector_store %arg9[%c0_21, %c0_22, %c0_23], %28 {strides = array<i32>} : memref<1x16x256xf32, #tpu.memory_space<vmem>>, vector<1x16x256xf32>,
    return
  }
  func.func @transform_0(%arg0: i32, %arg1: i32) -> (i32, i32, i32) {
    %c0_i32 = arith.constant 0 : i32
    %c0_i32_0 = arith.constant 0 : i32
    return %arg0, %c0_i32, %arg1 : i32, i32, i32
  }
  func.func @transform_1(%arg0: i32, %arg1: i32) -> (i32, i32, i32) {
    %c0_i32 = arith.constant 0 : i32
    %c0_i32_0 = arith.constant 0 : i32
    return %arg0, %c0_i32, %arg1 : i32, i32, i32
  }
  func.func @transform_2(%arg0: i32, %arg1: i32) -> (i32, i32, i32) {
    %c0_i32 = arith.constant 0 : i32
    %c0_i32_0 = arith.constant 0 : i32
    %c0_i32_1 = arith.constant 0 : i32
    return %arg0, %c0_i32, %c0_i32_0 : i32, i32, i32
  }
  func.func @transform_3(%arg0: i32, %arg1: i32) -> (i32, i32, i32) {
    %c0_i32 = arith.constant 0 : i32
    %c0_i32_0 = arith.constant 0 : i32
    %c0_i32_1 = arith.constant 0 : i32
    %c0_i32_2 = arith.constant 0 : i32
    return %c0_i32, %c0_i32_0, %c0_i32_1 : i32, i32, i32
  }
  func.func @transform_4(%arg0: i32, %arg1: i32) -> (i32, i32) {
    %c0_i32 = arith.constant 0 : i32
    %c0_i32_0 = arith.constant 0 : i32
    %c0_i32_1 = arith.constant 0 : i32
    return %c0_i32, %c0_i32_0 : i32, i32
  }
  func.func @transform_5(%arg0: i32, %arg1: i32) -> (i32, i32) {
    %c0_i32 = arith.constant 0 : i32
    %c0_i32_0 = arith.constant 0 : i32
    %c0_i32_1 = arith.constant 0 : i32
    return %c0_i32, %c0_i32_0 : i32, i32
  }
  func.func @transform_6(%arg0: i32, %arg1: i32) -> (i32, i32) {
    %c0_i32 = arith.constant 0 : i32
    %c0_i32_0 = arith.constant 0 : i32
    %c0_i32_1 = arith.constant 0 : i32
    return %c0_i32, %c0_i32_0 : i32, i32
  }
  func.func @transform_7(%arg0: i32, %arg1: i32) -> (i32, i32, i32) {
    %c0_i32 = arith.constant 0 : i32
    %c0_i32_0 = arith.constant 0 : i32
    return %arg0, %c0_i32, %arg1 : i32, i32, i32
  }
}

</mosaic_0001>

<llo_original>
// kernel: embedding_module3d_forward.3
$region0: #{embedding_module3d_forward.3}
  #allocation0 [shape = 'u32[]', space=smem, size = 0x4, offset = 0x4, fixed_abs, tag = 'smem constant byte address 0x4 - core index']
  #allocation1 [shape = 'u32[144,128]{1,0:T(1,128)}', space=vmem, size = 0x12000, scoped, tag = 'internal scratch']
  %s0 = inlined_call_operand.vmem [shape: f32[2,16,256], index: 0, kind: input, shape index: {}]
  %s1 = inlined_call_operand.vmem [shape: f32[16,16], index: 1, kind: input, shape index: {}]
  %s2 = inlined_call_operand.vmem [shape: f32[16,1], index: 2, kind: input, shape index: {}]
  %s3 = inlined_call_operand.vmem [shape: f32[2,16,256], index: 3, kind: output, shape index: {}]
  %s4 = sld [smem:[#allocation0]]
  $region45: #{embedding_module3d_forward.3} parent=0
    _
  %s6 = ssub.s32 1, %s4
  %s7 = scalar_select 0, %s6, %s4
  loop: start=0, step=1, limit=4
  $region2: #{embedding_module3d_forward.3} parent=0 // loop_pre_header
    _
  $region3: #{embedding_module3d_forward.3} parent=0 // loop_header
    %s9 = sphi 0, %s13
    %p10 = scmp.ge.s32.totalorder %s9, 4
    %s16 = sphi 0, %s28
    %s17 = sphi 0, %s24
    %s18 = sphi 0, %s16
    %s19 = sphi 0, %s17
    %s20 = sphi 0, %s18
    %s21 = sphi 0, %s19
    %s33 = sphi 0, %s35
    %s36 = sphi 0, %s33
    %s37 = sphi 0, %s36
    %s53 = sphi 0, %s37
    %s57 = sphi 0, %s57
    %s59 = sphi 0, %s57
    %s60 = sphi 0, %s59
    %s74 = sphi 0, %s60
    %s78 = sphi 0, %s78
    %s80 = sphi 0, %s78
    %s81 = sphi 0, %s80
    %s95 = sphi 0, %s81
    %s103 = sphi 0, %s105
    %s106 = sphi 0, %s103
    %s107 = sphi 0, %s106
    %s123 = sphi 0, %s107
  $region4: #{embedding_module3d_forward.3} parent=0 // loop_header_branch
    %12 = sbr.rel (%p10) target = $region8
  $region5: #{embedding_module3d_forward.3} parent=0 // loop_body
    %s14 = ssub.s32 %s9, 1
    %s15 = ssub.s32 %s9, 2
    %s22 = sadd.s32 1, %s17
    %p23 = scmp.ge.s32.totalorder %s22, 1
    %s24 = scalar_select %p23, 0, %s22
    %s25 = sadd.s32 1, %s16
    %s26 = scalar_select %p23, %s25, %s16
    %p27 = scmp.ge.s32.totalorder %s26, 2
    %s28 = scalar_select %p27, 0, %s26
    %s29 = ssub.s32 %s16, %s28
    %s30 = ssub.s32 %s17, %s24
    %s31 = sor.u32 %s29, %s30
    %p32 = scmp.eq.s32.totalorder %s31, 0
    %s34 = sadd.s32 %s33, 1
    %s35 = scalar_select %p32, %s33, %s34
    %p38 = pneg %p32
    %p39 = scmp.eq.s32.totalorder %s9, 1
    %p40 = por %p38, %p39
    %p41 = scmp.ne.s32.totalorder %s33, %s36
    %p42 = scmp.eq.s32.totalorder %s9, 0
    %p43 = por %p41, %p42
    %p44 = scmp.ne.s32.totalorder %s33, %s36
    %p45 = scmp.eq.s32.totalorder %s14, 1
    %p46 = por %p44, %p45
    %p47 = scmp.ne.s32.totalorder %s36, %s37
    %p48 = scmp.eq.s32.totalorder %s14, 0
    %p49 = por %p47, %p48
    %p50 = scmp.ne.s32.totalorder %s36, %s37
    %p51 = scmp.eq.s32.totalorder %s15, 1
    %p52 = por %p50, %p51
    %p54 = scmp.ne.s32.totalorder %s37, %s53
    %p55 = scmp.eq.s32.totalorder %s15, 0
    %p56 = por %p54, %p55
    %s58 = sadd.s32 %s57, 1
    %p61 = scmp.eq.s32.totalorder %s9, 1
    %p62 = scmp.ne.s32.totalorder %s57, %s59
    %p63 = scmp.eq.s32.totalorder %s9, 0
    %p64 = por %p62, %p63
    %p65 = scmp.ne.s32.totalorder %s57, %s59
    %p66 = scmp.eq.s32.totalorder %s14, 1
    %p67 = por %p65, %p66
    %p68 = scmp.ne.s32.totalorder %s59, %s60
    %p69 = scmp.eq.s32.totalorder %s14, 0
    %p70 = por %p68, %p69
    %p71 = scmp.ne.s32.totalorder %s59, %s60
    %p72 = scmp.eq.s32.totalorder %s15, 1
    %p73 = por %p71, %p72
    %p75 = scmp.ne.s32.totalorder %s60, %s74
    %p76 = scmp.eq.s32.totalorder %s15, 0
    %p77 = por %p75, %p76
    %s79 = sadd.s32 %s78, 1
    %p82 = scmp.eq.s32.totalorder %s9, 1
    %p83 = scmp.ne.s32.totalorder %s78, %s80
    %p84 = scmp.eq.s32.totalorder %s9, 0
    %p85 = por %p83, %p84
    %p86 = scmp.ne.s32.totalorder %s78, %s80
    %p87 = scmp.eq.s32.totalorder %s14, 1
    %p88 = por %p86, %p87
    %p89 = scmp.ne.s32.totalorder %s80, %s81
    %p90 = scmp.eq.s32.totalorder %s14, 0
    %p91 = por %p89, %p90
    %p92 = scmp.ne.s32.totalorder %s80, %s81
    %p93 = scmp.eq.s32.totalorder %s15, 1
    %p94 = por %p92, %p93
    %p96 = scmp.ne.s32.totalorder %s81, %s95
    %p97 = scmp.eq.s32.totalorder %s15, 0
    %p98 = por %p96, %p97
    %s99 = ssub.s32 %s16, %s28
    %s100 = ssub.s32 %s17, %s24
    %s101 = sor.u32 %s99, %s100
    %p102 = scmp.eq.s32.totalorder %s101, 0
    %s104 = sadd.s32 %s103, 1
    %s105 = scalar_select %p102, %s103, %s104
    %p108 = pneg %p102
    %p109 = scmp.eq.s32.totalorder %s9, 1
    %p110 = por %p108, %p109
    %p111 = scmp.ne.s32.totalorder %s103, %s106
    %p112 = scmp.eq.s32.totalorder %s9, 0
    %p113 = por %p111, %p112
    %p114 = scmp.ne.s32.totalorder %s103, %s106
    %p115 = scmp.eq.s32.totalorder %s14, 1
    %p116 = por %p114, %p115
    %p117 = scmp.ne.s32.totalorder %s106, %s107
    %p118 = scmp.eq.s32.totalorder %s14, 0
    %p119 = por %p117, %p118
    %p120 = scmp.ne.s32.totalorder %s106, %s107
    %p121 = scmp.eq.s32.totalorder %s15, 1
    %p122 = por %p120, %p121
    %p124 = scmp.ne.s32.totalorder %s107, %s123
    %p125 = scmp.eq.s32.totalorder %s15, 0
    %p126 = por %p124, %p125
    %p127 = scmp.le.s32.totalorder 1, %s9
    %p128 = scmp.lt.s32.totalorder %s9, 3
    %p129 = pnand %p127, %p128
    %p130 = pneg %p129
    // Predicated region
    $region9: #{embedding_module3d_forward.3} parent=5 // pred_check
      _
    $region10: #{embedding_module3d_forward.3} parent=5 // pred_check_branch
      %132 = sbr.rel (%p129) target = $region12
    $region11: #{embedding_module3d_forward.3} parent=5 // pred_region
      %s133 = ssub.s32 %s9, 1
      // Predicated region
      $region13: #{embedding_module3d_forward.3} parent=11 // pred_check
        %p134 = pneg %p70
      $region14: #{embedding_module3d_forward.3} parent=11 // pred_check_branch
        %136 = sbr.rel (%p134) target = $region16
      $region15: #{embedding_module3d_forward.3} parent=11 // pred_region
        _
      $region16: #{embedding_module3d_forward.3} parent=11 // pred_fallthru
        _
      // Predicated region
      $region17: #{embedding_module3d_forward.3} parent=11 // pred_check
        %p137 = pneg %p91
      $region18: #{embedding_module3d_forward.3} parent=11 // pred_check_branch
        %139 = sbr.rel (%p137) target = $region20
      $region19: #{embedding_module3d_forward.3} parent=11 // pred_region
        _
      $region20: #{embedding_module3d_forward.3} parent=11 // pred_fallthru
        _
    $region12: #{embedding_module3d_forward.3} parent=5 // pred_fallthru
      _
    %p140 = scmp.lt.s32.totalorder %s9, 2
    // Predicated region
    $region21: #{embedding_module3d_forward.3} parent=5 // pred_check
      %p141 = pneg %p140
    $region22: #{embedding_module3d_forward.3} parent=5 // pred_check_branch
      %143 = sbr.rel (%p141) target = $region24
    $region23: #{embedding_module3d_forward.3} parent=5 // pred_region
      // Predicated region
      $region25: #{embedding_module3d_forward.3} parent=23 // pred_check
        %p144 = pneg %p43
      $region26: #{embedding_module3d_forward.3} parent=23 // pred_check_branch
        %146 = sbr.rel (%p144) target = $region28
      $region27: #{embedding_module3d_forward.3} parent=23 // pred_region
        %s147 = smul.u32 2, %s17
        %p148 = scmp.lt.s32.totalorder %s16, 1
        %s149 = scalar_select %p148, %s16, 1
        %p150 = scmp.lt.s32.totalorder %s147, 1
        %s151 = scalar_select %p150, %s147, 1
        %s152 = smul.addr %s149, 4
        %s153 = sadd.s32 %s151, %s152
        %s154 = smul.addr %s153, 8
        %s155 = scalar_lea.vmem %s0, %s154
        %s156 = smul.u32 2, %s17
      $region28: #{embedding_module3d_forward.3} parent=23 // pred_fallthru
        _
    $region24: #{embedding_module3d_forward.3} parent=5 // pred_fallthru
      _
    %p157 = scmp.le.s32.totalorder 1, %s9
    %p158 = scmp.lt.s32.totalorder %s9, 3
    %p159 = pnand %p157, %p158
    %p160 = pneg %p159
    // Predicated region
    $region29: #{embedding_module3d_forward.3} parent=5 // pred_check
      _
    $region30: #{embedding_module3d_forward.3} parent=5 // pred_check_branch
      %162 = sbr.rel (%p159) target = $region32
    $region31: #{embedding_module3d_forward.3} parent=5 // pred_region
      %s163 = ssub.s32 %s9, 1
      %s164 = smul.u32 2, %s19
      %p165 = scmp.lt.s32.totalorder %s18, 1
      %s166 = scalar_select %p165, %s18, 1
      %p167 = scmp.lt.s32.totalorder %s164, 1
      %s168 = scalar_select %p167, %s164, 1
      %s169 = smul.addr %s166, 4
      %s170 = sadd.s32 %s168, %s169
      %s171 = smul.addr %s170, 8
      %s172 = scalar_lea.vmem %s0, %s171
      %p173 = pneg %p49
      %p174 = pneg %p46
      %p175 = pneg %p70
      %p176 = pneg %p67
      %p177 = pneg %p91
      %p178 = pneg %p88
      %p179 = pneg %p119
      %p180 = pneg %p116
      %s181 = smul.u32 2, %s19
      %p182 = scmp.lt.s32.totalorder %s18, 1
      %s183 = scalar_select %p182, %s18, 1
      %p184 = scmp.lt.s32.totalorder %s181, 1
      %s185 = scalar_select %p184, %s181, 1
      %s186 = smul.addr %s183, 4
      %s187 = sadd.s32 %s185, %s186
      %s188 = smul.addr %s187, 8
      %s189 = scalar_lea.vmem %s3, %s188
      %s190 = smul.u32 2, %s19
      %p191 = scmp.lt.s32.totalorder %s18, 1
      %s192 = scalar_select %p191, %s18, 1
      %p193 = scmp.lt.s32.totalorder %s190, 1
      %s194 = scalar_select %p193, %s190, 1
      %s195 = smul.addr %s192, 4
      %s196 = sadd.s32 %s194, %s195
      %s197 = smul.addr %s196, 8
      %s198 = scalar_lea.vmem %s0, %s197
      %s199 = smul.u32 2, %s19
      %s200 = smul.u32 2, %s19
      %p201 = scmp.lt.s32.totalorder %s18, 1
      %s202 = scalar_select %p201, %s18, 1
      %p203 = scmp.lt.s32.totalorder %s200, 1
      %s204 = scalar_select %p203, %s200, 1
      %s205 = smul.addr %s202, 4
      %s206 = sadd.s32 %s204, %s205
      %s207 = smul.addr %s206, 8
      %s208 = scalar_lea.vmem %s3, %s207
      %s209 = smul.u32 2, %s19
      %v210 = vld [vmem:[%s198] sm:$0xff]
      %v211 = vld [vmem:[%s198 + $0x8] sm:$0xff]
      %v212 = vld [vmem:[%s198 + $0x10] sm:$0xff]
      %v213 = vld [vmem:[%s198 + $0x18] sm:$0xff]
      %v214 = vld [vmem:[%s1] sm:$0xff]
      %v215 = vld [vmem:[%s1 + $0x8] sm:$0xff]
      %v216 = vld [vmem:[%s2] sm:$0xff]
      %v217 = vld [vmem:[%s2 + $0x8] sm:$0xff]
      %219 = vset.pattern.permute.xlu0 0
      %220 = vperm.xlu0 %219, %v216
      %v221 = vpop.permute.xlu0 %220
      %224 = vset.pattern.permute.xlu0 0
      %225 = vperm.xlu0 %224, %v217
      %v226 = vpop.permute.xlu0 %225
      %vm228 = vcmask 130048
      %v230 = vsel %vm228, %v214, 0
      %v233 = vsel %vm228, %v215, 0
      %235 = vmatprep.subr.mxu0 0.0
      %236 = vmatpush1.msra.mxu0 0.0
      %237 = vmatprep.subr.mxu0 0.0
      %238 = vmatpush1.msra.mxu0 0.0
      %239 = vmatprep.subr.mxu0 0.0
      %240 = vmatpush1.msra.mxu0 0.0
      %241 = vmatprep.subr.mxu0 0.0
      %242 = vmatpush1.msra.mxu0 0.0
      %243 = vmatprep.subr.mxu0 0.0
      %244 = vmatpush1.msra.mxu0 0.0
      %245 = vmatprep.subr.mxu0 0.0
      %246 = vmatpush1.msra.mxu0 0.0
      %247 = vmatprep.subr.mxu0 0.0
      %248 = vmatpush1.msra.mxu0 0.0
      %249 = vmatprep.subr.mxu0 0.0
      %250 = vmatpush1.msra.mxu0 0.0
      %251 = vmatprep.subr.mxu0 0.0
      %252 = vmatpush1.msra.mxu0 0.0
      %253 = vmatprep.subr.mxu0 0.0
      %254 = vmatpush1.msra.mxu0 0.0
      %255 = vmatprep.subr.mxu0 0.0
      %256 = vmatpush1.msra.mxu0 0.0
      %257 = vmatprep.subr.mxu0 0.0
      %258 = vmatpush1.msra.mxu0 0.0
      %259 = vmatprep.subr.mxu0 0.0
      %260 = vmatpush1.msra.mxu0 0.0
      %261 = vmatprep.subr.mxu0 0.0
      %262 = vmatpush1.msra.mxu0 0.0
      %v263 = vand.u32 %v213, 4294901760
      %264 = vmatprep.subr.mxu0 %v263
      %v265 = vand.u32 %v212, 4294901760
      %266 = vmatpush1.msra.mxu0 %v265
      %v267 = vand.u32 %v211, 4294901760
      %268 = vmatprep.subr.mxu0 %v267
      %v269 = vand.u32 %v210, 4294901760
      %270 = vmatpush1.msra.mxu0 %v269
      %271 = vmatprep.subr.mxu0 0.0
      %272 = vmatpush2.msra.mxu0 0.0
      %273 = vmatprep.subr.mxu0 0.0
      %274 = vmatpush2.msra.mxu0 0.0
      %275 = vmatprep.subr.mxu0 0.0
      %276 = vmatpush2.msra.mxu0 0.0
      %277 = vmatprep.subr.mxu0 0.0
      %278 = vmatpush2.msra.mxu0 0.0
      %279 = vmatprep.subr.mxu0 0.0
      %280 = vmatpush2.msra.mxu0 0.0
      %281 = vmatprep.subr.mxu0 0.0
      %282 = vmatpush2.msra.mxu0 0.0
      %283 = vmatprep.subr.mxu0 0.0
      %284 = vmatpush2.msra.mxu0 0.0
      %285 = vmatprep.subr.mxu0 0.0
      %286 = vmatpush2.msra.mxu0 0.0
      %287 = vmatprep.subr.mxu0 0.0
      %288 = vmatpush2.msra.mxu0 0.0
      %289 = vmatprep.subr.mxu0 0.0
      %290 = vmatpush2.msra.mxu0 0.0
      %291 = vmatprep.subr.mxu0 0.0
      %292 = vmatpush2.msra.mxu0 0.0
      %293 = vmatprep.subr.mxu0 0.0
      %294 = vmatpush2.msra.mxu0 0.0
      %295 = vmatprep.subr.mxu0 0.0
      %296 = vmatpush2.msra.mxu0 0.0
      %297 = vmatprep.subr.mxu0 0.0
      %298 = vmatpush2.msra.mxu0 0.0
      %299 = vmatprep.subr.mxu0 0.0
      %300 = vmatpush2.msra.mxu0 0.0
      %301 = vmatprep.subr.mxu0 0.0
      %302 = vmatpush2.msra.mxu0 0.0
      %303 = vmatprep.mubr.f32.mxu0 0.0
      %v304 = vand.u32 %v230, 4294901760
      %v305 = vsub.f32 %v230, %v304
      %v306 = vand.u32 %v305, 4294901760
      %v307 = vsub.f32 %v305, %v306
      %v308 = vand.u32 %v307, 4294901760
      %309 = vmatmul.mubr.f32.gmra.mxu0 %v308
      %v310 = vpop.f32.mrf.mxu0
      %v311 = vadd.f32 %v221, %v310
      %v312 = vpop.f32.mrf.mxu0
      %v313 = vadd.f32 %v221, %v312
      %314 = vmatprep.mubr.f32.mxu0 0.0
      %v315 = vand.u32 %v233, 4294901760
      %v316 = vsub.f32 %v233, %v315
      %v317 = vand.u32 %v316, 4294901760
      %v318 = vsub.f32 %v316, %v317
      %v319 = vand.u32 %v318, 4294901760
      %320 = vmatmul.mubr.f32.gmra.mxu0 %v319
      %v321 = vpop.f32.mrf.mxu0
      %v322 = vadd.f32 %v226, %v321
      %v323 = vpop.f32.mrf.mxu0
      %v324 = vadd.f32 %v226, %v323
      %325 = vdwg.mxu0
      %326 = vmatprep.subr.mxu0 0.0
      %327 = vmatpush1.msra.mxu0 0.0
      %328 = vmatprep.subr.mxu0 0.0
      %329 = vmatpush1.msra.mxu0 0.0
      %330 = vmatprep.subr.mxu0 0.0
      %331 = vmatpush1.msra.mxu0 0.0
      %332 = vmatprep.subr.mxu0 0.0
      %333 = vmatpush1.msra.mxu0 0.0
      %334 = vmatprep.subr.mxu0 0.0
      %335 = vmatpush1.msra.mxu0 0.0
      %336 = vmatprep.subr.mxu0 0.0
      %337 = vmatpush1.msra.mxu0 0.0
      %338 = vmatprep.subr.mxu0 0.0
      %339 = vmatpush1.msra.mxu0 0.0
      %340 = vmatprep.subr.mxu0 0.0
      %341 = vmatpush1.msra.mxu0 0.0
      %342 = vmatprep.subr.mxu0 0.0
      %343 = vmatpush1.msra.mxu0 0.0
      %344 = vmatprep.subr.mxu0 0.0
      %345 = vmatpush1.msra.mxu0 0.0
      %346 = vmatprep.subr.mxu0 0.0
      %347 = vmatpush1.msra.mxu0 0.0
      %348 = vmatprep.subr.mxu0 0.0
      %349 = vmatpush1.msra.mxu0 0.0
      %350 = vmatprep.subr.mxu0 0.0
      %351 = vmatpush1.msra.mxu0 0.0
      %352 = vmatprep.subr.mxu0 0.0
      %353 = vmatpush1.msra.mxu0 0.0
      %v354 = vand.u32 %v213, 4294901760
      %v355 = vsub.f32 %v213, %v354
      %v356 = vand.u32 %v355, 4294901760
      %v357 = vsub.f32 %v355, %v356
      %v358 = vand.u32 %v357, 4294901760
      %359 = vmatprep.subr.mxu0 %v358
      %v360 = vand.u32 %v212, 4294901760
      %v361 = vsub.f32 %v212, %v360
      %v362 = vand.u32 %v361, 4294901760
      %v363 = vsub.f32 %v361, %v362
      %v364 = vand.u32 %v363, 4294901760
      %365 = vmatpush1.msra.mxu0 %v364
      %v366 = vand.u32 %v211, 4294901760
      %v367 = vsub.f32 %v211, %v366
      %v368 = vand.u32 %v367, 4294901760
      %v369 = vsub.f32 %v367, %v368
      %v370 = vand.u32 %v369, 4294901760
      %371 = vmatprep.subr.mxu0 %v370
      %v372 = vand.u32 %v210, 4294901760
      %v373 = vsub.f32 %v210, %v372
      %v374 = vand.u32 %v373, 4294901760
      %v375 = vsub.f32 %v373, %v374
      %v376 = vand.u32 %v375, 4294901760
      %377 = vmatpush1.msra.mxu0 %v376
      %378 = vmatprep.subr.mxu0 0.0
      %379 = vmatpush2.msra.mxu0 0.0
      %380 = vmatprep.subr.mxu0 0.0
      %381 = vmatpush2.msra.mxu0 0.0
      %382 = vmatprep.subr.mxu0 0.0
      %383 = vmatpush2.msra.mxu0 0.0
      %384 = vmatprep.subr.mxu0 0.0
      %385 = vmatpush2.msra.mxu0 0.0
      %386 = vmatprep.subr.mxu0 0.0
      %387 = vmatpush2.msra.mxu0 0.0
      %388 = vmatprep.subr.mxu0 0.0
      %389 = vmatpush2.msra.mxu0 0.0
      %390 = vmatprep.subr.mxu0 0.0
      %391 = vmatpush2.msra.mxu0 0.0
      %392 = vmatprep.subr.mxu0 0.0
      %393 = vmatpush2.msra.mxu0 0.0
      %394 = vmatprep.subr.mxu0 0.0
      %395 = vmatpush2.msra.mxu0 0.0
      %396 = vmatprep.subr.mxu0 0.0
      %397 = vmatpush2.msra.mxu0 0.0
      %398 = vmatprep.subr.mxu0 0.0
      %399 = vmatpush2.msra.mxu0 0.0
      %400 = vmatprep.subr.mxu0 0.0
      %401 = vmatpush2.msra.mxu0 0.0
      %402 = vmatprep.subr.mxu0 0.0
      %403 = vmatpush2.msra.mxu0 0.0
      %404 = vmatprep.subr.mxu0 0.0
      %405 = vmatpush2.msra.mxu0 0.0
      %406 = vmatprep.subr.mxu0 0.0
      %407 = vmatpush2.msra.mxu0 0.0
      %408 = vmatprep.subr.mxu0 0.0
      %409 = vmatpush2.msra.mxu0 0.0
      %410 = vmatprep.mubr.f32.mxu0 0.0
      %v411 = vand.u32 %v230, 4294901760
      %412 = vmatmul.mubr.f32.gmra.mxu0 %v411
      %v413 = vpop.f32.mrf.mxu0
      %v414 = vadd.f32 %v311, %v413
      %v415 = vpop.f32.mrf.mxu0
      %v416 = vadd.f32 %v313, %v415
      %417 = vmatprep.mubr.f32.mxu0 0.0
      %v418 = vand.u32 %v233, 4294901760
      %419 = vmatmul.mubr.f32.gmra.mxu0 %v418
      %v420 = vpop.f32.mrf.mxu0
      %v421 = vadd.f32 %v322, %v420
      %v422 = vpop.f32.mrf.mxu0
      %v423 = vadd.f32 %v324, %v422
      %424 = vdwg.mxu0
      %425 = vmatprep.subr.mxu0 0.0
      %426 = vmatpush1.msra.mxu0 0.0
      %427 = vmatprep.subr.mxu0 0.0
      %428 = vmatpush1.msra.mxu0 0.0
      %429 = vmatprep.subr.mxu0 0.0
      %430 = vmatpush1.msra.mxu0 0.0
      %431 = vmatprep.subr.mxu0 0.0
      %432 = vmatpush1.msra.mxu0 0.0
      %433 = vmatprep.subr.mxu0 0.0
      %434 = vmatpush1.msra.mxu0 0.0
      %435 = vmatprep.subr.mxu0 0.0
      %436 = vmatpush1.msra.mxu0 0.0
      %437 = vmatprep.subr.mxu0 0.0
      %438 = vmatpush1.msra.mxu0 0.0
      %439 = vmatprep.subr.mxu0 0.0
      %440 = vmatpush1.msra.mxu0 0.0
      %441 = vmatprep.subr.mxu0 0.0
      %442 = vmatpush1.msra.mxu0 0.0
      %443 = vmatprep.subr.mxu0 0.0
      %444 = vmatpush1.msra.mxu0 0.0
      %445 = vmatprep.subr.mxu0 0.0
      %446 = vmatpush1.msra.mxu0 0.0
      %447 = vmatprep.subr.mxu0 0.0
      %448 = vmatpush1.msra.mxu0 0.0
      %449 = vmatprep.subr.mxu0 0.0
      %450 = vmatpush1.msra.mxu0 0.0
      %451 = vmatprep.subr.mxu0 0.0
      %452 = vmatpush1.msra.mxu0 0.0
      %v453 = vand.u32 %v213, 4294901760
      %v454 = vsub.f32 %v213, %v453
      %455 = vmatprep.subr.mxu0 %v454
      %v456 = vand.u32 %v212, 4294901760
      %v457 = vsub.f32 %v212, %v456
      %458 = vmatpush1.msra.mxu0 %v457
      %v459 = vand.u32 %v211, 4294901760
      %v460 = vsub.f32 %v211, %v459
      %461 = vmatprep.subr.mxu0 %v460
      %v462 = vand.u32 %v210, 4294901760
      %v463 = vsub.f32 %v210, %v462
      %464 = vmatpush1.msra.mxu0 %v463
      %465 = vmatprep.subr.mxu0 0.0
      %466 = vmatpush2.msra.mxu0 0.0
      %467 = vmatprep.subr.mxu0 0.0
      %468 = vmatpush2.msra.mxu0 0.0
      %469 = vmatprep.subr.mxu0 0.0
      %470 = vmatpush2.msra.mxu0 0.0
      %471 = vmatprep.subr.mxu0 0.0
      %472 = vmatpush2.msra.mxu0 0.0
      %473 = vmatprep.subr.mxu0 0.0
      %474 = vmatpush2.msra.mxu0 0.0
      %475 = vmatprep.subr.mxu0 0.0
      %476 = vmatpush2.msra.mxu0 0.0
      %477 = vmatprep.subr.mxu0 0.0
      %478 = vmatpush2.msra.mxu0 0.0
      %479 = vmatprep.subr.mxu0 0.0
      %480 = vmatpush2.msra.mxu0 0.0
      %481 = vmatprep.subr.mxu0 0.0
      %482 = vmatpush2.msra.mxu0 0.0
      %483 = vmatprep.subr.mxu0 0.0
      %484 = vmatpush2.msra.mxu0 0.0
      %485 = vmatprep.subr.mxu0 0.0
      %486 = vmatpush2.msra.mxu0 0.0
      %487 = vmatprep.subr.mxu0 0.0
      %488 = vmatpush2.msra.mxu0 0.0
      %489 = vmatprep.subr.mxu0 0.0
      %490 = vmatpush2.msra.mxu0 0.0
      %491 = vmatprep.subr.mxu0 0.0
      %492 = vmatpush2.msra.mxu0 0.0
      %493 = vmatprep.subr.mxu0 0.0
      %494 = vmatpush2.msra.mxu0 0.0
      %495 = vmatprep.subr.mxu0 0.0
      %496 = vmatpush2.msra.mxu0 0.0
      %497 = vmatprep.mubr.f32.mxu0 0.0
      %v498 = vand.u32 %v230, 4294901760
      %v499 = vsub.f32 %v230, %v498
      %500 = vmatmul.mubr.f32.gmra.mxu0 %v499
      %v501 = vpop.f32.mrf.mxu0
      %v502 = vadd.f32 %v414, %v501
      %v503 = vpop.f32.mrf.mxu0
      %v504 = vadd.f32 %v416, %v503
      %505 = vmatprep.mubr.f32.mxu0 0.0
      %v506 = vand.u32 %v233, 4294901760
      %v507 = vsub.f32 %v233, %v506
      %508 = vmatmul.mubr.f32.gmra.mxu0 %v507
      %v509 = vpop.f32.mrf.mxu0
      %v510 = vadd.f32 %v421, %v509
      %v511 = vpop.f32.mrf.mxu0
      %v512 = vadd.f32 %v423, %v511
      %513 = vdwg.mxu0
      %514 = vmatprep.subr.mxu0 0.0
      %515 = vmatpush1.msra.mxu0 0.0
      %516 = vmatprep.subr.mxu0 0.0
      %517 = vmatpush1.msra.mxu0 0.0
      %518 = vmatprep.subr.mxu0 0.0
      %519 = vmatpush1.msra.mxu0 0.0
      %520 = vmatprep.subr.mxu0 0.0
      %521 = vmatpush1.msra.mxu0 0.0
      %522 = vmatprep.subr.mxu0 0.0
      %523 = vmatpush1.msra.mxu0 0.0
      %524 = vmatprep.subr.mxu0 0.0
      %525 = vmatpush1.msra.mxu0 0.0
      %526 = vmatprep.subr.mxu0 0.0
      %527 = vmatpush1.msra.mxu0 0.0
      %528 = vmatprep.subr.mxu0 0.0
      %529 = vmatpush1.msra.mxu0 0.0
      %530 = vmatprep.subr.mxu0 0.0
      %531 = vmatpush1.msra.mxu0 0.0
      %532 = vmatprep.subr.mxu0 0.0
      %533 = vmatpush1.msra.mxu0 0.0
      %534 = vmatprep.subr.mxu0 0.0
      %535 = vmatpush1.msra.mxu0 0.0
      %536 = vmatprep.subr.mxu0 0.0
      %537 = vmatpush1.msra.mxu0 0.0
      %538 = vmatprep.subr.mxu0 0.0
      %539 = vmatpush1.msra.mxu0 0.0
      %540 = vmatprep.subr.mxu0 0.0
      %541 = vmatpush1.msra.mxu0 0.0
      %v542 = vand.u32 %v213, 4294901760
      %543 = vmatprep.subr.mxu0 %v542
      %v544 = vand.u32 %v212, 4294901760
      %545 = vmatpush1.msra.mxu0 %v544
      %v546 = vand.u32 %v211, 4294901760
      %547 = vmatprep.subr.mxu0 %v546
      %v548 = vand.u32 %v210, 4294901760
      %549 = vmatpush1.msra.mxu0 %v548
      %550 = vmatprep.subr.mxu0 0.0
      %551 = vmatpush2.msra.mxu0 0.0
      %552 = vmatprep.subr.mxu0 0.0
      %553 = vmatpush2.msra.mxu0 0.0
      %554 = vmatprep.subr.mxu0 0.0
      %555 = vmatpush2.msra.mxu0 0.0
      %556 = vmatprep.subr.mxu0 0.0
      %557 = vmatpush2.msra.mxu0 0.0
      %558 = vmatprep.subr.mxu0 0.0
      %559 = vmatpush2.msra.mxu0 0.0
      %560 = vmatprep.subr.mxu0 0.0
      %561 = vmatpush2.msra.mxu0 0.0
      %562 = vmatprep.subr.mxu0 0.0
      %563 = vmatpush2.msra.mxu0 0.0
      %564 = vmatprep.subr.mxu0 0.0
      %565 = vmatpush2.msra.mxu0 0.0
      %566 = vmatprep.subr.mxu0 0.0
      %567 = vmatpush2.msra.mxu0 0.0
      %568 = vmatprep.subr.mxu0 0.0
      %569 = vmatpush2.msra.mxu0 0.0
      %570 = vmatprep.subr.mxu0 0.0
      %571 = vmatpush2.msra.mxu0 0.0
      %572 = vmatprep.subr.mxu0 0.0
      %573 = vmatpush2.msra.mxu0 0.0
      %574 = vmatprep.subr.mxu0 0.0
      %575 = vmatpush2.msra.mxu0 0.0
      %576 = vmatprep.subr.mxu0 0.0
      %577 = vmatpush2.msra.mxu0 0.0
      %578 = vmatprep.subr.mxu0 0.0
      %579 = vmatpush2.msra.mxu0 0.0
      %580 = vmatprep.subr.mxu0 0.0
      %581 = vmatpush2.msra.mxu0 0.0
      %582 = vmatprep.mubr.f32.mxu0 0.0
      %v583 = vand.u32 %v230, 4294901760
      %v584 = vsub.f32 %v230, %v583
      %v585 = vand.u32 %v584, 4294901760
      %586 = vmatmul.mubr.f32.gmra.mxu0 %v585
      %v587 = vpop.f32.mrf.mxu0
      %v588 = vadd.f32 %v502, %v587
      %v589 = vpop.f32.mrf.mxu0
      %v590 = vadd.f32 %v504, %v589
      %591 = vmatprep.mubr.f32.mxu0 0.0
      %v592 = vand.u32 %v233, 4294901760
      %v593 = vsub.f32 %v233, %v592
      %v594 = vand.u32 %v593, 4294901760
      %595 = vmatmul.mubr.f32.gmra.mxu0 %v594
      %v596 = vpop.f32.mrf.mxu0
      %v597 = vadd.f32 %v510, %v596
      %v598 = vpop.f32.mrf.mxu0
      %v599 = vadd.f32 %v512, %v598
      %600 = vdwg.mxu0
      %601 = vmatprep.subr.mxu0 0.0
      %602 = vmatpush1.msra.mxu0 0.0
      %603 = vmatprep.subr.mxu0 0.0
      %604 = vmatpush1.msra.mxu0 0.0
      %605 = vmatprep.subr.mxu0 0.0
      %606 = vmatpush1.msra.mxu0 0.0
      %607 = vmatprep.subr.mxu0 0.0
      %608 = vmatpush1.msra.mxu0 0.0
      %609 = vmatprep.subr.mxu0 0.0
      %610 = vmatpush1.msra.mxu0 0.0
      %611 = vmatprep.subr.mxu0 0.0
      %612 = vmatpush1.msra.mxu0 0.0
      %613 = vmatprep.subr.mxu0 0.0
      %614 = vmatpush1.msra.mxu0 0.0
      %615 = vmatprep.subr.mxu0 0.0
      %616 = vmatpush1.msra.mxu0 0.0
      %617 = vmatprep.subr.mxu0 0.0
      %618 = vmatpush1.msra.mxu0 0.0
      %619 = vmatprep.subr.mxu0 0.0
      %620 = vmatpush1.msra.mxu0 0.0
      %621 = vmatprep.subr.mxu0 0.0
      %622 = vmatpush1.msra.mxu0 0.0
      %623 = vmatprep.subr.mxu0 0.0
      %624 = vmatpush1.msra.mxu0 0.0
      %625 = vmatprep.subr.mxu0 0.0
      %626 = vmatpush1.msra.mxu0 0.0
      %627 = vmatprep.subr.mxu0 0.0
      %628 = vmatpush1.msra.mxu0 0.0
      %v629 = vand.u32 %v213, 4294901760
      %v630 = vsub.f32 %v213, %v629
      %v631 = vand.u32 %v630, 4294901760
      %632 = vmatprep.subr.mxu0 %v631
      %v633 = vand.u32 %v212, 4294901760
      %v634 = vsub.f32 %v212, %v633
      %v635 = vand.u32 %v634, 4294901760
      %636 = vmatpush1.msra.mxu0 %v635
      %v637 = vand.u32 %v211, 4294901760
      %v638 = vsub.f32 %v211, %v637
      %v639 = vand.u32 %v638, 4294901760
      %640 = vmatprep.subr.mxu0 %v639
      %v641 = vand.u32 %v210, 4294901760
      %v642 = vsub.f32 %v210, %v641
      %v643 = vand.u32 %v642, 4294901760
      %644 = vmatpush1.msra.mxu0 %v643
      %645 = vmatprep.subr.mxu0 0.0
      %646 = vmatpush2.msra.mxu0 0.0
      %647 = vmatprep.subr.mxu0 0.0
      %648 = vmatpush2.msra.mxu0 0.0
      %649 = vmatprep.subr.mxu0 0.0
      %650 = vmatpush2.msra.mxu0 0.0
      %651 = vmatprep.subr.mxu0 0.0
      %652 = vmatpush2.msra.mxu0 0.0
      %653 = vmatprep.subr.mxu0 0.0
      %654 = vmatpush2.msra.mxu0 0.0
      %655 = vmatprep.subr.mxu0 0.0
      %656 = vmatpush2.msra.mxu0 0.0
      %657 = vmatprep.subr.mxu0 0.0
      %658 = vmatpush2.msra.mxu0 0.0
      %659 = vmatprep.subr.mxu0 0.0
      %660 = vmatpush2.msra.mxu0 0.0
      %661 = vmatprep.subr.mxu0 0.0
      %662 = vmatpush2.msra.mxu0 0.0
      %663 = vmatprep.subr.mxu0 0.0
      %664 = vmatpush2.msra.mxu0 0.0
      %665 = vmatprep.subr.mxu0 0.0
      %666 = vmatpush2.msra.mxu0 0.0
      %667 = vmatprep.subr.mxu0 0.0
      %668 = vmatpush2.msra.mxu0 0.0
      %669 = vmatprep.subr.mxu0 0.0
      %670 = vmatpush2.msra.mxu0 0.0
      %671 = vmatprep.subr.mxu0 0.0
      %672 = vmatpush2.msra.mxu0 0.0
      %673 = vmatprep.subr.mxu0 0.0
      %674 = vmatpush2.msra.mxu0 0.0
      %675 = vmatprep.subr.mxu0 0.0
      %676 = vmatpush2.msra.mxu0 0.0
      %677 = vmatprep.mubr.f32.mxu0 0.0
      %v678 = vand.u32 %v230, 4294901760
      %679 = vmatmul.mubr.f32.gmra.mxu0 %v678
      %v680 = vpop.f32.mrf.mxu0
      %v681 = vadd.f32 %v588, %v680
      %v682 = vpop.f32.mrf.mxu0
      %v683 = vadd.f32 %v590, %v682
      %684 = vmatprep.mubr.f32.mxu0 0.0
      %v685 = vand.u32 %v233, 4294901760
      %686 = vmatmul.mubr.f32.gmra.mxu0 %v685
      %v687 = vpop.f32.mrf.mxu0
      %v688 = vadd.f32 %v597, %v687
      %v689 = vpop.f32.mrf.mxu0
      %v690 = vadd.f32 %v599, %v689
      %691 = vdwg.mxu0
      %692 = vmatprep.subr.mxu0 0.0
      %693 = vmatpush1.msra.mxu0 0.0
      %694 = vmatprep.subr.mxu0 0.0
      %695 = vmatpush1.msra.mxu0 0.0
      %696 = vmatprep.subr.mxu0 0.0
      %697 = vmatpush1.msra.mxu0 0.0
      %698 = vmatprep.subr.mxu0 0.0
      %699 = vmatpush1.msra.mxu0 0.0
      %700 = vmatprep.subr.mxu0 0.0
      %701 = vmatpush1.msra.mxu0 0.0
      %702 = vmatprep.subr.mxu0 0.0
      %703 = vmatpush1.msra.mxu0 0.0
      %704 = vmatprep.subr.mxu0 0.0
      %705 = vmatpush1.msra.mxu0 0.0
      %706 = vmatprep.subr.mxu0 0.0
      %707 = vmatpush1.msra.mxu0 0.0
      %708 = vmatprep.subr.mxu0 0.0
      %709 = vmatpush1.msra.mxu0 0.0
      %710 = vmatprep.subr.mxu0 0.0
      %711 = vmatpush1.msra.mxu0 0.0
      %712 = vmatprep.subr.mxu0 0.0
      %713 = vmatpush1.msra.mxu0 0.0
      %714 = vmatprep.subr.mxu0 0.0
      %715 = vmatpush1.msra.mxu0 0.0
      %716 = vmatprep.subr.mxu0 0.0
      %717 = vmatpush1.msra.mxu0 0.0
      %718 = vmatprep.subr.mxu0 0.0
      %719 = vmatpush1.msra.mxu0 0.0
      %v720 = vand.u32 %v213, 4294901760
      %721 = vmatprep.subr.mxu0 %v720
      %v722 = vand.u32 %v212, 4294901760
      %723 = vmatpush1.msra.mxu0 %v722
      %v724 = vand.u32 %v211, 4294901760
      %725 = vmatprep.subr.mxu0 %v724
      %v726 = vand.u32 %v210, 4294901760
      %727 = vmatpush1.msra.mxu0 %v726
      %728 = vmatprep.subr.mxu0 0.0
      %729 = vmatpush2.msra.mxu0 0.0
      %730 = vmatprep.subr.mxu0 0.0
      %731 = vmatpush2.msra.mxu0 0.0
      %732 = vmatprep.subr.mxu0 0.0
      %733 = vmatpush2.msra.mxu0 0.0
      %734 = vmatprep.subr.mxu0 0.0
      %735 = vmatpush2.msra.mxu0 0.0
      %736 = vmatprep.subr.mxu0 0.0
      %737 = vmatpush2.msra.mxu0 0.0
      %738 = vmatprep.subr.mxu0 0.0
      %739 = vmatpush2.msra.mxu0 0.0
      %740 = vmatprep.subr.mxu0 0.0
      %741 = vmatpush2.msra.mxu0 0.0
      %742 = vmatprep.subr.mxu0 0.0
      %743 = vmatpush2.msra.mxu0 0.0
      %744 = vmatprep.subr.mxu0 0.0
      %745 = vmatpush2.msra.mxu0 0.0
      %746 = vmatprep.subr.mxu0 0.0
      %747 = vmatpush2.msra.mxu0 0.0
      %748 = vmatprep.subr.mxu0 0.0
      %749 = vmatpush2.msra.mxu0 0.0
      %750 = vmatprep.subr.mxu0 0.0
      %751 = vmatpush2.msra.mxu0 0.0
      %752 = vmatprep.subr.mxu0 0.0
      %753 = vmatpush2.msra.mxu0 0.0
      %754 = vmatprep.subr.mxu0 0.0
      %755 = vmatpush2.msra.mxu0 0.0
      %756 = vmatprep.subr.mxu0 0.0
      %757 = vmatpush2.msra.mxu0 0.0
      %758 = vmatprep.subr.mxu0 0.0
      %759 = vmatpush2.msra.mxu0 0.0
      %760 = vmatprep.mubr.f32.mxu0 0.0
      %v761 = vand.u32 %v230, 4294901760
      %762 = vmatmul.mubr.f32.gmra.mxu0 %v761
      %v763 = vpop.f32.mrf.mxu0
      %v764 = vadd.f32 %v681, %v763
      %v765 = vpop.f32.mrf.mxu0
      %v766 = vadd.f32 %v683, %v765
      %767 = vmatprep.mubr.f32.mxu0 0.0
      %v768 = vand.u32 %v233, 4294901760
      %769 = vmatmul.mubr.f32.gmra.mxu0 %v768
      %v770 = vpop.f32.mrf.mxu0
      %v771 = vadd.f32 %v688, %v770
      %v772 = vpop.f32.mrf.mxu0
      %v773 = vadd.f32 %v690, %v772
      %774 = vdwg.mxu0
      %v775 = vmax.f32 %v764, 0.0
      %v776 = vmax.f32 %v766, 0.0
      %v777 = vmax.f32 %v771, 0.0
      %v778 = vmax.f32 %v773, 0.0
      %779 = vst [vmem:[%s208] sm:$0xff] %v775
      %780 = vst [vmem:[%s208 + $0x8] sm:$0xff] %v776
      %781 = vst [vmem:[%s208 + $0x10] sm:$0xff] %v777
      %782 = vst [vmem:[%s208 + $0x18] sm:$0xff] %v778
      %s783 = smul.u32 2, %s19
      %p784 = scmp.lt.s32.totalorder %s18, 1
      %s785 = scalar_select %p784, %s18, 1
      %p786 = scmp.lt.s32.totalorder %s783, 1
      %s787 = scalar_select %p786, %s783, 1
      %s788 = smul.addr %s785, 4
      %s789 = sadd.s32 %s787, %s788
      %s790 = smul.addr %s789, 8
      %s791 = scalar_lea.vmem %s3, %s790
      // Predicated region
      $region33: #{embedding_module3d_forward.3} parent=31 // pred_check
        %p792 = pneg %p116
      $region34: #{embedding_module3d_forward.3} parent=31 // pred_check_branch
        %794 = sbr.rel (%p792) target = $region36
      $region35: #{embedding_module3d_forward.3} parent=31 // pred_region
        %s795 = smul.u32 2, %s19
      $region36: #{embedding_module3d_forward.3} parent=31 // pred_fallthru
        _
    $region32: #{embedding_module3d_forward.3} parent=5 // pred_fallthru
      _
    %p796 = scmp.le.s32.totalorder 2, %s9
    // Predicated region
    $region37: #{embedding_module3d_forward.3} parent=5 // pred_check
      %p797 = pneg %p796
    $region38: #{embedding_module3d_forward.3} parent=5 // pred_check_branch
      %799 = sbr.rel (%p797) target = $region40
    $region39: #{embedding_module3d_forward.3} parent=5 // pred_region
      %s800 = ssub.s32 %s9, 2
      // Predicated region
      $region41: #{embedding_module3d_forward.3} parent=39 // pred_check
        %p801 = pneg %p122
      $region42: #{embedding_module3d_forward.3} parent=39 // pred_check_branch
        %803 = sbr.rel (%p801) target = $region44
      $region43: #{embedding_module3d_forward.3} parent=39 // pred_region
        %s804 = smul.u32 2, %s21
        %p805 = scmp.lt.s32.totalorder %s20, 1
        %s806 = scalar_select %p805, %s20, 1
        %p807 = scmp.lt.s32.totalorder %s804, 1
        %s808 = scalar_select %p807, %s804, 1
        %s809 = smul.addr %s806, 4
        %s810 = sadd.s32 %s808, %s809
        %s811 = smul.addr %s810, 8
        %s812 = scalar_lea.vmem %s3, %s811
      $region44: #{embedding_module3d_forward.3} parent=39 // pred_fallthru
        _
    $region40: #{embedding_module3d_forward.3} parent=5 // pred_fallthru
      _
  $region6: #{embedding_module3d_forward.3} parent=0 // loop_footer
    %s13 = sadd.s32 1, %s9
  $region7: #{embedding_module3d_forward.3} parent=0 // loop_footer_branch
    %8 = sbr.rel target = $region3
  $region8: #{embedding_module3d_forward.3} parent=0 // loop_exit
    _

// kernel: embedding_module3d_forward.5
$region0: #{embedding_module3d_forward.5}
  #allocation0 [shape = 'u32[]', space=smem, size = 0x4, offset = 0x4, fixed_abs, tag = 'smem constant byte address 0x4 - core index']
  #allocation1 [shape = 'u32[144,128]{1,0:T(1,128)}', space=vmem, size = 0x12000, scoped, tag = 'internal scratch']
  %s0 = inlined_call_operand.vmem [shape: f32[2,16,256], index: 0, kind: input, shape index: {}]
  %s1 = inlined_call_operand.vmem [shape: f32[2,16,256], index: 1, kind: input, shape index: {}]
  %s2 = inlined_call_operand.vmem [shape: f32[2,16,1], index: 2, kind: input, shape index: {}]
  %s3 = inlined_call_operand.vmem [shape: f32[1,16,1], index: 3, kind: input, shape index: {}]
  %s4 = inlined_call_operand.vmem [shape: f32[16,16], index: 4, kind: input, shape index: {}]
  %s5 = inlined_call_operand.vmem [shape: f32[16,16], index: 5, kind: input, shape index: {}]
  %s6 = inlined_call_operand.vmem [shape: f32[16,1], index: 6, kind: input, shape index: {}]
  %s7 = inlined_call_operand.vmem [shape: f32[2,16,256], index: 7, kind: output, shape index: {}]
  %s8 = sld [smem:[#allocation0]]
  $region61: #{embedding_module3d_forward.5} parent=0
    _
  %s10 = ssub.s32 1, %s8
  %s11 = scalar_select 0, %s10, %s8
  loop: start=0, step=1, limit=4
  $region2: #{embedding_module3d_forward.5} parent=0 // loop_pre_header
    _
  $region3: #{embedding_module3d_forward.5} parent=0 // loop_header
    %s13 = sphi 0, %s17
    %p14 = scmp.ge.s32.totalorder %s13, 4
    %s20 = sphi 0, %s32
    %s21 = sphi 0, %s28
    %s22 = sphi 0, %s20
    %s23 = sphi 0, %s21
    %s24 = sphi 0, %s22
    %s25 = sphi 0, %s23
    %s37 = sphi 0, %s39
    %s40 = sphi 0, %s37
    %s41 = sphi 0, %s40
    %s57 = sphi 0, %s41
    %s65 = sphi 0, %s67
    %s68 = sphi 0, %s65
    %s69 = sphi 0, %s68
    %s85 = sphi 0, %s69
    %s91 = sphi 0, %s93
    %s94 = sphi 0, %s91
    %s95 = sphi 0, %s94
    %s111 = sphi 0, %s95
    %s115 = sphi 0, %s115
    %s117 = sphi 0, %s115
    %s118 = sphi 0, %s117
    %s132 = sphi 0, %s118
    %s136 = sphi 0, %s136
    %s138 = sphi 0, %s136
    %s139 = sphi 0, %s138
    %s153 = sphi 0, %s139
    %s157 = sphi 0, %s157
    %s159 = sphi 0, %s157
    %s160 = sphi 0, %s159
    %s174 = sphi 0, %s160
    %s178 = sphi 0, %s178
    %s180 = sphi 0, %s178
    %s181 = sphi 0, %s180
    %s195 = sphi 0, %s181
    %s203 = sphi 0, %s205
    %s206 = sphi 0, %s203
    %s207 = sphi 0, %s206
    %s223 = sphi 0, %s207
  $region4: #{embedding_module3d_forward.5} parent=0 // loop_header_branch
    %16 = sbr.rel (%p14) target = $region8
  $region5: #{embedding_module3d_forward.5} parent=0 // loop_body
    %s18 = ssub.s32 %s13, 1
    %s19 = ssub.s32 %s13, 2
    %s26 = sadd.s32 1, %s21
    %p27 = scmp.ge.s32.totalorder %s26, 1
    %s28 = scalar_select %p27, 0, %s26
    %s29 = sadd.s32 1, %s20
    %s30 = scalar_select %p27, %s29, %s20
    %p31 = scmp.ge.s32.totalorder %s30, 2
    %s32 = scalar_select %p31, 0, %s30
    %s33 = ssub.s32 %s20, %s32
    %s34 = ssub.s32 %s21, %s28
    %s35 = sor.u32 %s33, %s34
    %p36 = scmp.eq.s32.totalorder %s35, 0
    %s38 = sadd.s32 %s37, 1
    %s39 = scalar_select %p36, %s37, %s38
    %p42 = pneg %p36
    %p43 = scmp.eq.s32.totalorder %s13, 1
    %p44 = por %p42, %p43
    %p45 = scmp.ne.s32.totalorder %s37, %s40
    %p46 = scmp.eq.s32.totalorder %s13, 0
    %p47 = por %p45, %p46
    %p48 = scmp.ne.s32.totalorder %s37, %s40
    %p49 = scmp.eq.s32.totalorder %s18, 1
    %p50 = por %p48, %p49
    %p51 = scmp.ne.s32.totalorder %s40, %s41
    %p52 = scmp.eq.s32.totalorder %s18, 0
    %p53 = por %p51, %p52
    %p54 = scmp.ne.s32.totalorder %s40, %s41
    %p55 = scmp.eq.s32.totalorder %s19, 1
    %p56 = por %p54, %p55
    %p58 = scmp.ne.s32.totalorder %s41, %s57
    %p59 = scmp.eq.s32.totalorder %s19, 0
    %p60 = por %p58, %p59
    %s61 = ssub.s32 %s20, %s32
    %s62 = ssub.s32 %s21, %s28
    %s63 = sor.u32 %s61, %s62
    %p64 = scmp.eq.s32.totalorder %s63, 0
    %s66 = sadd.s32 %s65, 1
    %s67 = scalar_select %p64, %s65, %s66
    %p70 = pneg %p64
    %p71 = scmp.eq.s32.totalorder %s13, 1
    %p72 = por %p70, %p71
    %p73 = scmp.ne.s32.totalorder %s65, %s68
    %p74 = scmp.eq.s32.totalorder %s13, 0
    %p75 = por %p73, %p74
    %p76 = scmp.ne.s32.totalorder %s65, %s68
    %p77 = scmp.eq.s32.totalorder %s18, 1
    %p78 = por %p76, %p77
    %p79 = scmp.ne.s32.totalorder %s68, %s69
    %p80 = scmp.eq.s32.totalorder %s18, 0
    %p81 = por %p79, %p80
    %p82 = scmp.ne.s32.totalorder %s68, %s69
    %p83 = scmp.eq.s32.totalorder %s19, 1
    %p84 = por %p82, %p83
    %p86 = scmp.ne.s32.totalorder %s69, %s85
    %p87 = scmp.eq.s32.totalorder %s19, 0
    %p88 = por %p86, %p87
    %s89 = ssub.s32 %s20, %s32
    %p90 = scmp.eq.s32.totalorder %s89, 0
    %s92 = sadd.s32 %s91, 1
    %s93 = scalar_select %p90, %s91, %s92
    %p96 = pneg %p90
    %p97 = scmp.eq.s32.totalorder %s13, 1
    %p98 = por %p96, %p97
    %p99 = scmp.ne.s32.totalorder %s91, %s94
    %p100 = scmp.eq.s32.totalorder %s13, 0
    %p101 = por %p99, %p100
    %p102 = scmp.ne.s32.totalorder %s91, %s94
    %p103 = scmp.eq.s32.totalorder %s18, 1
    %p104 = por %p102, %p103
    %p105 = scmp.ne.s32.totalorder %s94, %s95
    %p106 = scmp.eq.s32.totalorder %s18, 0
    %p107 = por %p105, %p106
    %p108 = scmp.ne.s32.totalorder %s94, %s95
    %p109 = scmp.eq.s32.totalorder %s19, 1
    %p110 = por %p108, %p109
    %p112 = scmp.ne.s32.totalorder %s95, %s111
    %p113 = scmp.eq.s32.totalorder %s19, 0
    %p114 = por %p112, %p113
    %s116 = sadd.s32 %s115, 1
    %p119 = scmp.eq.s32.totalorder %s13, 1
    %p120 = scmp.ne.s32.totalorder %s115, %s117
    %p121 = scmp.eq.s32.totalorder %s13, 0
    %p122 = por %p120, %p121
    %p123 = scmp.ne.s32.totalorder %s115, %s117
    %p124 = scmp.eq.s32.totalorder %s18, 1
    %p125 = por %p123, %p124
    %p126 = scmp.ne.s32.totalorder %s117, %s118
    %p127 = scmp.eq.s32.totalorder %s18, 0
    %p128 = por %p126, %p127
    %p129 = scmp.ne.s32.totalorder %s117, %s118
    %p130 = scmp.eq.s32.totalorder %s19, 1
    %p131 = por %p129, %p130
    %p133 = scmp.ne.s32.totalorder %s118, %s132
    %p134 = scmp.eq.s32.totalorder %s19, 0
    %p135 = por %p133, %p134
    %s137 = sadd.s32 %s136, 1
    %p140 = scmp.eq.s32.totalorder %s13, 1
    %p141 = scmp.ne.s32.totalorder %s136, %s138
    %p142 = scmp.eq.s32.totalorder %s13, 0
    %p143 = por %p141, %p142
    %p144 = scmp.ne.s32.totalorder %s136, %s138
    %p145 = scmp.eq.s32.totalorder %s18, 1
    %p146 = por %p144, %p145
    %p147 = scmp.ne.s32.totalorder %s138, %s139
    %p148 = scmp.eq.s32.totalorder %s18, 0
    %p149 = por %p147, %p148
    %p150 = scmp.ne.s32.totalorder %s138, %s139
    %p151 = scmp.eq.s32.totalorder %s19, 1
    %p152 = por %p150, %p151
    %p154 = scmp.ne.s32.totalorder %s139, %s153
    %p155 = scmp.eq.s32.totalorder %s19, 0
    %p156 = por %p154, %p155
    %s158 = sadd.s32 %s157, 1
    %p161 = scmp.eq.s32.totalorder %s13, 1
    %p162 = scmp.ne.s32.totalorder %s157, %s159
    %p163 = scmp.eq.s32.totalorder %s13, 0
    %p164 = por %p162, %p163
    %p165 = scmp.ne.s32.totalorder %s157, %s159
    %p166 = scmp.eq.s32.totalorder %s18, 1
    %p167 = por %p165, %p166
    %p168 = scmp.ne.s32.totalorder %s159, %s160
    %p169 = scmp.eq.s32.totalorder %s18, 0
    %p170 = por %p168, %p169
    %p171 = scmp.ne.s32.totalorder %s159, %s160
    %p172 = scmp.eq.s32.totalorder %s19, 1
    %p173 = por %p171, %p172
    %p175 = scmp.ne.s32.totalorder %s160, %s174
    %p176 = scmp.eq.s32.totalorder %s19, 0
    %p177 = por %p175, %p176
    %s179 = sadd.s32 %s178, 1
    %p182 = scmp.eq.s32.totalorder %s13, 1
    %p183 = scmp.ne.s32.totalorder %s178, %s180
    %p184 = scmp.eq.s32.totalorder %s13, 0
    %p185 = por %p183, %p184
    %p186 = scmp.ne.s32.totalorder %s178, %s180
    %p187 = scmp.eq.s32.totalorder %s18, 1
    %p188 = por %p186, %p187
    %p189 = scmp.ne.s32.totalorder %s180, %s181
    %p190 = scmp.eq.s32.totalorder %s18, 0
    %p191 = por %p189, %p190
    %p192 = scmp.ne.s32.totalorder %s180, %s181
    %p193 = scmp.eq.s32.totalorder %s19, 1
    %p194 = por %p192, %p193
    %p196 = scmp.ne.s32.totalorder %s181, %s195
    %p197 = scmp.eq.s32.totalorder %s19, 0
    %p198 = por %p196, %p197
    %s199 = ssub.s32 %s20, %s32
    %s200 = ssub.s32 %s21, %s28
    %s201 = sor.u32 %s199, %s200
    %p202 = scmp.eq.s32.totalorder %s201, 0
    %s204 = sadd.s32 %s203, 1
    %s205 = scalar_select %p202, %s203, %s204
    %p208 = pneg %p202
    %p209 = scmp.eq.s32.totalorder %s13, 1
    %p210 = por %p208, %p209
    %p211 = scmp.ne.s32.totalorder %s203, %s206
    %p212 = scmp.eq.s32.totalorder %s13, 0
    %p213 = por %p211, %p212
    %p214 = scmp.ne.s32.totalorder %s203, %s206
    %p215 = scmp.eq.s32.totalorder %s18, 1
    %p216 = por %p214, %p215
    %p217 = scmp.ne.s32.totalorder %s206, %s207
    %p218 = scmp.eq.s32.totalorder %s18, 0
    %p219 = por %p217, %p218
    %p220 = scmp.ne.s32.totalorder %s206, %s207
    %p221 = scmp.eq.s32.totalorder %s19, 1
    %p222 = por %p220, %p221
    %p224 = scmp.ne.s32.totalorder %s207, %s223
    %p225 = scmp.eq.s32.totalorder %s19, 0
    %p226 = por %p224, %p225
    %p227 = scmp.le.s32.totalorder 1, %s13
    %p228 = scmp.lt.s32.totalorder %s13, 3
    %p229 = pnand %p227, %p228
    %p230 = pneg %p229
    // Predicated region
    $region9: #{embedding_module3d_forward.5} parent=5 // pred_check
      _
    $region10: #{embedding_module3d_forward.5} parent=5 // pred_check_branch
      %232 = sbr.rel (%p229) target = $region12
    $region11: #{embedding_module3d_forward.5} parent=5 // pred_region
      %s233 = ssub.s32 %s13, 1
      // Predicated region
      $region13: #{embedding_module3d_forward.5} parent=11 // pred_check
        %p234 = pneg %p128
      $region14: #{embedding_module3d_forward.5} parent=11 // pred_check_branch
        %236 = sbr.rel (%p234) target = $region16
      $region15: #{embedding_module3d_forward.5} parent=11 // pred_region
        _
      $region16: #{embedding_module3d_forward.5} parent=11 // pred_fallthru
        _
      // Predicated region
      $region17: #{embedding_module3d_forward.5} parent=11 // pred_check
        %p237 = pneg %p149
      $region18: #{embedding_module3d_forward.5} parent=11 // pred_check_branch
        %239 = sbr.rel (%p237) target = $region20
      $region19: #{embedding_module3d_forward.5} parent=11 // pred_region
        _
      $region20: #{embedding_module3d_forward.5} parent=11 // pred_fallthru
        _
      // Predicated region
      $region21: #{embedding_module3d_forward.5} parent=11 // pred_check
        %p240 = pneg %p170
      $region22: #{embedding_module3d_forward.5} parent=11 // pred_check_branch
        %242 = sbr.rel (%p240) target = $region24
      $region23: #{embedding_module3d_forward.5} parent=11 // pred_region
        _
      $region24: #{embedding_module3d_forward.5} parent=11 // pred_fallthru
        _
      // Predicated region
      $region25: #{embedding_module3d_forward.5} parent=11 // pred_check
        %p243 = pneg %p191
      $region26: #{embedding_module3d_forward.5} parent=11 // pred_check_branch
        %245 = sbr.rel (%p243) target = $region28
      $region27: #{embedding_module3d_forward.5} parent=11 // pred_region
        _
      $region28: #{embedding_module3d_forward.5} parent=11 // pred_fallthru
        _
    $region12: #{embedding_module3d_forward.5} parent=5 // pred_fallthru
      _
    %p246 = scmp.lt.s32.totalorder %s13, 2
    // Predicated region
    $region29: #{embedding_module3d_forward.5} parent=5 // pred_check
      %p247 = pneg %p246
    $region30: #{embedding_module3d_forward.5} parent=5 // pred_check_branch
      %249 = sbr.rel (%p247) target = $region32
    $region31: #{embedding_module3d_forward.5} parent=5 // pred_region
      // Predicated region
      $region33: #{embedding_module3d_forward.5} parent=31 // pred_check
        %p250 = pneg %p47
      $region34: #{embedding_module3d_forward.5} parent=31 // pred_check_branch
        %252 = sbr.rel (%p250) target = $region36
      $region35: #{embedding_module3d_forward.5} parent=31 // pred_region
        %s253 = smul.u32 2, %s21
        %p254 = scmp.lt.s32.totalorder %s20, 1
        %s255 = scalar_select %p254, %s20, 1
        %p256 = scmp.lt.s32.totalorder %s253, 1
        %s257 = scalar_select %p256, %s253, 1
        %s258 = smul.addr %s255, 4
        %s259 = sadd.s32 %s257, %s258
        %s260 = smul.addr %s259, 8
        %s261 = scalar_lea.vmem %s0, %s260
        %s262 = smul.u32 2, %s21
      $region36: #{embedding_module3d_forward.5} parent=31 // pred_fallthru
        _
      // Predicated region
      $region37: #{embedding_module3d_forward.5} parent=31 // pred_check
        %p263 = pneg %p75
      $region38: #{embedding_module3d_forward.5} parent=31 // pred_check_branch
        %265 = sbr.rel (%p263) target = $region40
      $region39: #{embedding_module3d_forward.5} parent=31 // pred_region
        %s266 = smul.u32 2, %s21
        %p267 = scmp.lt.s32.totalorder %s20, 1
        %s268 = scalar_select %p267, %s20, 1
        %p269 = scmp.lt.s32.totalorder %s266, 1
        %s270 = scalar_select %p269, %s266, 1
        %s271 = smul.addr %s268, 4
        %s272 = sadd.s32 %s270, %s271
        %s273 = smul.addr %s272, 8
        %s274 = scalar_lea.vmem %s1, %s273
        %s275 = smul.u32 2, %s21
      $region40: #{embedding_module3d_forward.5} parent=31 // pred_fallthru
        _
      // Predicated region
      $region41: #{embedding_module3d_forward.5} parent=31 // pred_check
        %p276 = pneg %p101
      $region42: #{embedding_module3d_forward.5} parent=31 // pred_check_branch
        %278 = sbr.rel (%p276) target = $region44
      $region43: #{embedding_module3d_forward.5} parent=31 // pred_region
        %p279 = scmp.lt.s32.totalorder %s20, 1
        %s280 = scalar_select %p279, %s20, 1
        %s281 = smul.addr %s280, 2
        %s282 = smul.addr %s281, 8
        %s283 = scalar_lea.vmem %s2, %s282
      $region44: #{embedding_module3d_forward.5} parent=31 // pred_fallthru
        _
    $region32: #{embedding_module3d_forward.5} parent=5 // pred_fallthru
      _
    %p284 = scmp.le.s32.totalorder 1, %s13
    %p285 = scmp.lt.s32.totalorder %s13, 3
    %p286 = pnand %p284, %p285
    %p287 = pneg %p286
    // Predicated region
    $region45: #{embedding_module3d_forward.5} parent=5 // pred_check
      _
    $region46: #{embedding_module3d_forward.5} parent=5 // pred_check_branch
      %289 = sbr.rel (%p286) target = $region48
    $region47: #{embedding_module3d_forward.5} parent=5 // pred_region
      %s290 = ssub.s32 %s13, 1
      %s291 = smul.u32 2, %s23
      %p292 = scmp.lt.s32.totalorder %s22, 1
      %s293 = scalar_select %p292, %s22, 1
      %p294 = scmp.lt.s32.totalorder %s291, 1
      %s295 = scalar_select %p294, %s291, 1
      %s296 = smul.addr %s293, 4
      %s297 = sadd.s32 %s295, %s296
      %s298 = smul.addr %s297, 8
      %s299 = scalar_lea.vmem %s0, %s298
      %p300 = pneg %p53
      %p301 = pneg %p50
      %s302 = smul.u32 2, %s23
      %p303 = scmp.lt.s32.totalorder %s22, 1
      %s304 = scalar_select %p303, %s22, 1
      %p305 = scmp.lt.s32.totalorder %s302, 1
      %s306 = scalar_select %p305, %s302, 1
      %s307 = smul.addr %s304, 4
      %s308 = sadd.s32 %s306, %s307
      %s309 = smul.addr %s308, 8
      %s310 = scalar_lea.vmem %s1, %s309
      %p311 = pneg %p81
      %p312 = pneg %p78
      %p313 = scmp.lt.s32.totalorder %s22, 1
      %s314 = scalar_select %p313, %s22, 1
      %s315 = smul.addr %s314, 2
      %s316 = smul.addr %s315, 8
      %s317 = scalar_lea.vmem %s2, %s316
      %p318 = pneg %p107
      %p319 = pneg %p104
      %p320 = pneg %p128
      %p321 = pneg %p125
      %p322 = pneg %p149
      %p323 = pneg %p146
      %p324 = pneg %p170
      %p325 = pneg %p167
      %p326 = pneg %p191
      %p327 = pneg %p188
      %p328 = pneg %p219
      %p329 = pneg %p216
      %s330 = smul.u32 2, %s23
      %p331 = scmp.lt.s32.totalorder %s22, 1
      %s332 = scalar_select %p331, %s22, 1
      %p333 = scmp.lt.s32.totalorder %s330, 1
      %s334 = scalar_select %p333, %s330, 1
      %s335 = smul.addr %s332, 4
      %s336 = sadd.s32 %s334, %s335
      %s337 = smul.addr %s336, 8
      %s338 = scalar_lea.vmem %s7, %s337
      %s339 = smul.u32 2, %s23
      %p340 = scmp.lt.s32.totalorder %s22, 1
      %s341 = scalar_select %p340, %s22, 1
      %p342 = scmp.lt.s32.totalorder %s339, 1
      %s343 = scalar_select %p342, %s339, 1
      %s344 = smul.addr %s341, 4
      %s345 = sadd.s32 %s343, %s344
      %s346 = smul.addr %s345, 8
      %s347 = scalar_lea.vmem %s0, %s346
      %s348 = smul.u32 2, %s23
      %s349 = smul.u32 2, %s23
      %p350 = scmp.lt.s32.totalorder %s22, 1
      %s351 = scalar_select %p350, %s22, 1
      %p352 = scmp.lt.s32.totalorder %s349, 1
      %s353 = scalar_select %p352, %s349, 1
      %s354 = smul.addr %s351, 4
      %s355 = sadd.s32 %s353, %s354
      %s356 = smul.addr %s355, 8
      %s357 = scalar_lea.vmem %s1, %s356
      %s358 = smul.u32 2, %s23
      %p359 = scmp.lt.s32.totalorder %s22, 1
      %s360 = scalar_select %p359, %s22, 1
      %s361 = smul.addr %s360, 2
      %s362 = smul.addr %s361, 8
      %s363 = scalar_lea.vmem %s2, %s362
      %s364 = smul.u32 2, %s23
      %p365 = scmp.lt.s32.totalorder %s22, 1
      %s366 = scalar_select %p365, %s22, 1
      %p367 = scmp.lt.s32.totalorder %s364, 1
      %s368 = scalar_select %p367, %s364, 1
      %s369 = smul.addr %s366, 4
      %s370 = sadd.s32 %s368, %s369
      %s371 = smul.addr %s370, 8
      %s372 = scalar_lea.vmem %s7, %s371
      %s373 = smul.u32 2, %s23
      %v374 = vld [vmem:[%s347] sm:$0xff]
      %v375 = vld [vmem:[%s347 + $0x8] sm:$0xff]
      %v376 = vld [vmem:[%s347 + $0x10] sm:$0xff]
      %v377 = vld [vmem:[%s347 + $0x18] sm:$0xff]
      %v378 = vld [vmem:[%s357] sm:$0xff]
      %v379 = vld [vmem:[%s357 + $0x8] sm:$0xff]
      %v380 = vld [vmem:[%s357 + $0x10] sm:$0xff]
      %v381 = vld [vmem:[%s357 + $0x18] sm:$0xff]
      %v382 = vld [vmem:[%s363] sm:$0xff]
      %v383 = vld [vmem:[%s363 + $0x8] sm:$0xff]
      %v384 = vmax.f32 %v378, 0.0
      %v385 = vmax.f32 %v379, 0.0
      %v386 = vmax.f32 %v380, 0.0
      %v387 = vmax.f32 %v381, 0.0
      %389 = vset.pattern.permute.xlu0 0
      %390 = vperm.xlu0 %389, %v382
      %v391 = vpop.permute.xlu0 %390
      %394 = vset.pattern.permute.xlu0 0
      %395 = vperm.xlu0 %394, %v383
      %v396 = vpop.permute.xlu0 %395
      %v398 = vmul.f32 %v391, %v384
      %v399 = vmul.f32 %v391, %v385
      %v400 = vmul.f32 %v396, %v386
      %v401 = vmul.f32 %v396, %v387
      %v402 = vld [vmem:[%s3] sm:$0xff]
      %v403 = vld [vmem:[%s3 + $0x8] sm:$0xff]
      %405 = vset.pattern.permute.xlu0 0
      %406 = vperm.xlu0 %405, %v402
      %v407 = vpop.permute.xlu0 %406
      %410 = vset.pattern.permute.xlu0 0
      %411 = vperm.xlu0 %410, %v403
      %v412 = vpop.permute.xlu0 %411
      %v414 = vadd.f32 %v398, %v407
      %v415 = vadd.f32 %v399, %v407
      %v416 = vadd.f32 %v400, %v412
      %v417 = vadd.f32 %v401, %v412
      %v418 = vmax.f32 %v414, 0.0
      %v419 = vmax.f32 %v415, 0.0
      %v420 = vmax.f32 %v416, 0.0
      %v421 = vmax.f32 %v417, 0.0
      %v422 = vld [vmem:[%s4] sm:$0xff]
      %v423 = vld [vmem:[%s4 + $0x8] sm:$0xff]
      %v424 = vld [vmem:[%s5] sm:$0xff]
      %v425 = vld [vmem:[%s5 + $0x8] sm:$0xff]
      %vm426 = vcmask 130048
      %v428 = vsel %vm426, %v424, 0
      %v431 = vsel %vm426, %v425, 0
      %433 = vmatprep.subr.mxu0 0.0
      %434 = vmatpush1.msra.mxu0 0.0
      %435 = vmatprep.subr.mxu0 0.0
      %436 = vmatpush1.msra.mxu0 0.0
      %437 = vmatprep.subr.mxu0 0.0
      %438 = vmatpush1.msra.mxu0 0.0
      %439 = vmatprep.subr.mxu0 0.0
      %440 = vmatpush1.msra.mxu0 0.0
      %441 = vmatprep.subr.mxu0 0.0
      %442 = vmatpush1.msra.mxu0 0.0
      %443 = vmatprep.subr.mxu0 0.0
      %444 = vmatpush1.msra.mxu0 0.0
      %445 = vmatprep.subr.mxu0 0.0
      %446 = vmatpush1.msra.mxu0 0.0
      %447 = vmatprep.subr.mxu0 0.0
      %448 = vmatpush1.msra.mxu0 0.0
      %449 = vmatprep.subr.mxu0 0.0
      %450 = vmatpush1.msra.mxu0 0.0
      %451 = vmatprep.subr.mxu0 0.0
      %452 = vmatpush1.msra.mxu0 0.0
      %453 = vmatprep.subr.mxu0 0.0
      %454 = vmatpush1.msra.mxu0 0.0
      %455 = vmatprep.subr.mxu0 0.0
      %456 = vmatpush1.msra.mxu0 0.0
      %457 = vmatprep.subr.mxu0 0.0
      %458 = vmatpush1.msra.mxu0 0.0
      %459 = vmatprep.subr.mxu0 0.0
      %460 = vmatpush1.msra.mxu0 0.0
      %v461 = vand.u32 %v421, 4294901760
      %462 = vmatprep.subr.mxu0 %v461
      %v463 = vand.u32 %v420, 4294901760
      %464 = vmatpush1.msra.mxu0 %v463
      %v465 = vand.u32 %v419, 4294901760
      %466 = vmatprep.subr.mxu0 %v465
      %v467 = vand.u32 %v418, 4294901760
      %468 = vmatpush1.msra.mxu0 %v467
      %469 = vmatprep.subr.mxu0 0.0
      %470 = vmatpush2.msra.mxu0 0.0
      %471 = vmatprep.subr.mxu0 0.0
      %472 = vmatpush2.msra.mxu0 0.0
      %473 = vmatprep.subr.mxu0 0.0
      %474 = vmatpush2.msra.mxu0 0.0
      %475 = vmatprep.subr.mxu0 0.0
      %476 = vmatpush2.msra.mxu0 0.0
      %477 = vmatprep.subr.mxu0 0.0
      %478 = vmatpush2.msra.mxu0 0.0
      %479 = vmatprep.subr.mxu0 0.0
      %480 = vmatpush2.msra.mxu0 0.0
      %481 = vmatprep.subr.mxu0 0.0
      %482 = vmatpush2.msra.mxu0 0.0
      %483 = vmatprep.subr.mxu0 0.0
      %484 = vmatpush2.msra.mxu0 0.0
      %485 = vmatprep.subr.mxu0 0.0
      %486 = vmatpush2.msra.mxu0 0.0
      %487 = vmatprep.subr.mxu0 0.0
      %488 = vmatpush2.msra.mxu0 0.0
      %489 = vmatprep.subr.mxu0 0.0
      %490 = vmatpush2.msra.mxu0 0.0
      %491 = vmatprep.subr.mxu0 0.0
      %492 = vmatpush2.msra.mxu0 0.0
      %493 = vmatprep.subr.mxu0 0.0
      %494 = vmatpush2.msra.mxu0 0.0
      %495 = vmatprep.subr.mxu0 0.0
      %496 = vmatpush2.msra.mxu0 0.0
      %497 = vmatprep.subr.mxu0 0.0
      %498 = vmatpush2.msra.mxu0 0.0
      %499 = vmatprep.subr.mxu0 0.0
      %500 = vmatpush2.msra.mxu0 0.0
      %501 = vmatprep.mubr.f32.mxu0 0.0
      %v502 = vand.u32 %v428, 4294901760
      %v503 = vsub.f32 %v428, %v502
      %v504 = vand.u32 %v503, 4294901760
      %v505 = vsub.f32 %v503, %v504
      %v506 = vand.u32 %v505, 4294901760
      %507 = vmatmul.mubr.f32.gmra.mxu0 %v506
      %v508 = vpop.f32.mrf.mxu0
      %v509 = vadd.f32 0.0, %v508
      %v510 = vpop.f32.mrf.mxu0
      %v511 = vadd.f32 0.0, %v510
      %512 = vmatprep.mubr.f32.mxu0 0.0
      %v513 = vand.u32 %v431, 4294901760
      %v514 = vsub.f32 %v431, %v513
      %v515 = vand.u32 %v514, 4294901760
      %v516 = vsub.f32 %v514, %v515
      %v517 = vand.u32 %v516, 4294901760
      %518 = vmatmul.mubr.f32.gmra.mxu0 %v517
      %v519 = vpop.f32.mrf.mxu0
      %v520 = vadd.f32 0.0, %v519
      %v521 = vpop.f32.mrf.mxu0
      %v522 = vadd.f32 0.0, %v521
      %523 = vdwg.mxu0
      %524 = vmatprep.subr.mxu0 0.0
      %525 = vmatpush1.msra.mxu0 0.0
      %526 = vmatprep.subr.mxu0 0.0
      %527 = vmatpush1.msra.mxu0 0.0
      %528 = vmatprep.subr.mxu0 0.0
      %529 = vmatpush1.msra.mxu0 0.0
      %530 = vmatprep.subr.mxu0 0.0
      %531 = vmatpush1.msra.mxu0 0.0
      %532 = vmatprep.subr.mxu0 0.0
      %533 = vmatpush1.msra.mxu0 0.0
      %534 = vmatprep.subr.mxu0 0.0
      %535 = vmatpush1.msra.mxu0 0.0
      %536 = vmatprep.subr.mxu0 0.0
      %537 = vmatpush1.msra.mxu0 0.0
      %538 = vmatprep.subr.mxu0 0.0
      %539 = vmatpush1.msra.mxu0 0.0
      %540 = vmatprep.subr.mxu0 0.0
      %541 = vmatpush1.msra.mxu0 0.0
      %542 = vmatprep.subr.mxu0 0.0
      %543 = vmatpush1.msra.mxu0 0.0
      %544 = vmatprep.subr.mxu0 0.0
      %545 = vmatpush1.msra.mxu0 0.0
      %546 = vmatprep.subr.mxu0 0.0
      %547 = vmatpush1.msra.mxu0 0.0
      %548 = vmatprep.subr.mxu0 0.0
      %549 = vmatpush1.msra.mxu0 0.0
      %550 = vmatprep.subr.mxu0 0.0
      %551 = vmatpush1.msra.mxu0 0.0
      %v552 = vand.u32 %v421, 4294901760
      %v553 = vsub.f32 %v421, %v552
      %v554 = vand.u32 %v553, 4294901760
      %v555 = vsub.f32 %v553, %v554
      %v556 = vand.u32 %v555, 4294901760
      %557 = vmatprep.subr.mxu0 %v556
      %v558 = vand.u32 %v420, 4294901760
      %v559 = vsub.f32 %v420, %v558
      %v560 = vand.u32 %v559, 4294901760
      %v561 = vsub.f32 %v559, %v560
      %v562 = vand.u32 %v561, 4294901760
      %563 = vmatpush1.msra.mxu0 %v562
      %v564 = vand.u32 %v419, 4294901760
      %v565 = vsub.f32 %v419, %v564
      %v566 = vand.u32 %v565, 4294901760
      %v567 = vsub.f32 %v565, %v566
      %v568 = vand.u32 %v567, 4294901760
      %569 = vmatprep.subr.mxu0 %v568
      %v570 = vand.u32 %v418, 4294901760
      %v571 = vsub.f32 %v418, %v570
      %v572 = vand.u32 %v571, 4294901760
      %v573 = vsub.f32 %v571, %v572
      %v574 = vand.u32 %v573, 4294901760
      %575 = vmatpush1.msra.mxu0 %v574
      %576 = vmatprep.subr.mxu0 0.0
      %577 = vmatpush2.msra.mxu0 0.0
      %578 = vmatprep.subr.mxu0 0.0
      %579 = vmatpush2.msra.mxu0 0.0
      %580 = vmatprep.subr.mxu0 0.0
      %581 = vmatpush2.msra.mxu0 0.0
      %582 = vmatprep.subr.mxu0 0.0
      %583 = vmatpush2.msra.mxu0 0.0
      %584 = vmatprep.subr.mxu0 0.0
      %585 = vmatpush2.msra.mxu0 0.0
      %586 = vmatprep.subr.mxu0 0.0
      %587 = vmatpush2.msra.mxu0 0.0
      %588 = vmatprep.subr.mxu0 0.0
      %589 = vmatpush2.msra.mxu0 0.0
      %590 = vmatprep.subr.mxu0 0.0
      %591 = vmatpush2.msra.mxu0 0.0
      %592 = vmatprep.subr.mxu0 0.0
      %593 = vmatpush2.msra.mxu0 0.0
      %594 = vmatprep.subr.mxu0 0.0
      %595 = vmatpush2.msra.mxu0 0.0
      %596 = vmatprep.subr.mxu0 0.0
      %597 = vmatpush2.msra.mxu0 0.0
      %598 = vmatprep.subr.mxu0 0.0
      %599 = vmatpush2.msra.mxu0 0.0
      %600 = vmatprep.subr.mxu0 0.0
      %601 = vmatpush2.msra.mxu0 0.0
      %602 = vmatprep.subr.mxu0 0.0
      %603 = vmatpush2.msra.mxu0 0.0
      %604 = vmatprep.subr.mxu0 0.0
      %605 = vmatpush2.msra.mxu0 0.0
      %606 = vmatprep.subr.mxu0 0.0
      %607 = vmatpush2.msra.mxu0 0.0
      %608 = vmatprep.mubr.f32.mxu0 0.0
      %v609 = vand.u32 %v428, 4294901760
      %610 = vmatmul.mubr.f32.gmra.mxu0 %v609
      %v611 = vpop.f32.mrf.mxu0
      %v612 = vadd.f32 %v509, %v611
      %v613 = vpop.f32.mrf.mxu0
      %v614 = vadd.f32 %v511, %v613
      %615 = vmatprep.mubr.f32.mxu0 0.0
      %v616 = vand.u32 %v431, 4294901760
      %617 = vmatmul.mubr.f32.gmra.mxu0 %v616
      %v618 = vpop.f32.mrf.mxu0
      %v619 = vadd.f32 %v520, %v618
      %v620 = vpop.f32.mrf.mxu0
      %v621 = vadd.f32 %v522, %v620
      %622 = vdwg.mxu0
      %623 = vmatprep.subr.mxu0 0.0
      %624 = vmatpush1.msra.mxu0 0.0
      %625 = vmatprep.subr.mxu0 0.0
      %626 = vmatpush1.msra.mxu0 0.0
      %627 = vmatprep.subr.mxu0 0.0
      %628 = vmatpush1.msra.mxu0 0.0
      %629 = vmatprep.subr.mxu0 0.0
      %630 = vmatpush1.msra.mxu0 0.0
      %631 = vmatprep.subr.mxu0 0.0
      %632 = vmatpush1.msra.mxu0 0.0
      %633 = vmatprep.subr.mxu0 0.0
      %634 = vmatpush1.msra.mxu0 0.0
      %635 = vmatprep.subr.mxu0 0.0
      %636 = vmatpush1.msra.mxu0 0.0
      %637 = vmatprep.subr.mxu0 0.0
      %638 = vmatpush1.msra.mxu0 0.0
      %639 = vmatprep.subr.mxu0 0.0
      %640 = vmatpush1.msra.mxu0 0.0
      %641 = vmatprep.subr.mxu0 0.0
      %642 = vmatpush1.msra.mxu0 0.0
      %643 = vmatprep.subr.mxu0 0.0
      %644 = vmatpush1.msra.mxu0 0.0
      %645 = vmatprep.subr.mxu0 0.0
      %646 = vmatpush1.msra.mxu0 0.0
      %647 = vmatprep.subr.mxu0 0.0
      %648 = vmatpush1.msra.mxu0 0.0
      %649 = vmatprep.subr.mxu0 0.0
      %650 = vmatpush1.msra.mxu0 0.0
      %v651 = vand.u32 %v421, 4294901760
      %v652 = vsub.f32 %v421, %v651
      %653 = vmatprep.subr.mxu0 %v652
      %v654 = vand.u32 %v420, 4294901760
      %v655 = vsub.f32 %v420, %v654
      %656 = vmatpush1.msra.mxu0 %v655
      %v657 = vand.u32 %v419, 4294901760
      %v658 = vsub.f32 %v419, %v657
      %659 = vmatprep.subr.mxu0 %v658
      %v660 = vand.u32 %v418, 4294901760
      %v661 = vsub.f32 %v418, %v660
      %662 = vmatpush1.msra.mxu0 %v661
      %663 = vmatprep.subr.mxu0 0.0
      %664 = vmatpush2.msra.mxu0 0.0
      %665 = vmatprep.subr.mxu0 0.0
      %666 = vmatpush2.msra.mxu0 0.0
      %667 = vmatprep.subr.mxu0 0.0
      %668 = vmatpush2.msra.mxu0 0.0
      %669 = vmatprep.subr.mxu0 0.0
      %670 = vmatpush2.msra.mxu0 0.0
      %671 = vmatprep.subr.mxu0 0.0
      %672 = vmatpush2.msra.mxu0 0.0
      %673 = vmatprep.subr.mxu0 0.0
      %674 = vmatpush2.msra.mxu0 0.0
      %675 = vmatprep.subr.mxu0 0.0
      %676 = vmatpush2.msra.mxu0 0.0
      %677 = vmatprep.subr.mxu0 0.0
      %678 = vmatpush2.msra.mxu0 0.0
      %679 = vmatprep.subr.mxu0 0.0
      %680 = vmatpush2.msra.mxu0 0.0
      %681 = vmatprep.subr.mxu0 0.0
      %682 = vmatpush2.msra.mxu0 0.0
      %683 = vmatprep.subr.mxu0 0.0
      %684 = vmatpush2.msra.mxu0 0.0
      %685 = vmatprep.subr.mxu0 0.0
      %686 = vmatpush2.msra.mxu0 0.0
      %687 = vmatprep.subr.mxu0 0.0
      %688 = vmatpush2.msra.mxu0 0.0
      %689 = vmatprep.subr.mxu0 0.0
      %690 = vmatpush2.msra.mxu0 0.0
      %691 = vmatprep.subr.mxu0 0.0
      %692 = vmatpush2.msra.mxu0 0.0
      %693 = vmatprep.subr.mxu0 0.0
      %694 = vmatpush2.msra.mxu0 0.0
      %695 = vmatprep.mubr.f32.mxu0 0.0
      %v696 = vand.u32 %v428, 4294901760
      %v697 = vsub.f32 %v428, %v696
      %698 = vmatmul.mubr.f32.gmra.mxu0 %v697
      %v699 = vpop.f32.mrf.mxu0
      %v700 = vadd.f32 %v612, %v699
      %v701 = vpop.f32.mrf.mxu0
      %v702 = vadd.f32 %v614, %v701
      %703 = vmatprep.mubr.f32.mxu0 0.0
      %v704 = vand.u32 %v431, 4294901760
      %v705 = vsub.f32 %v431, %v704
      %706 = vmatmul.mubr.f32.gmra.mxu0 %v705
      %v707 = vpop.f32.mrf.mxu0
      %v708 = vadd.f32 %v619, %v707
      %v709 = vpop.f32.mrf.mxu0
      %v710 = vadd.f32 %v621, %v709
      %711 = vdwg.mxu0
      %712 = vmatprep.subr.mxu0 0.0
      %713 = vmatpush1.msra.mxu0 0.0
      %714 = vmatprep.subr.mxu0 0.0
      %715 = vmatpush1.msra.mxu0 0.0
      %716 = vmatprep.subr.mxu0 0.0
      %717 = vmatpush1.msra.mxu0 0.0
      %718 = vmatprep.subr.mxu0 0.0
      %719 = vmatpush1.msra.mxu0 0.0
      %720 = vmatprep.subr.mxu0 0.0
      %721 = vmatpush1.msra.mxu0 0.0
      %722 = vmatprep.subr.mxu0 0.0
      %723 = vmatpush1.msra.mxu0 0.0
      %724 = vmatprep.subr.mxu0 0.0
      %725 = vmatpush1.msra.mxu0 0.0
      %726 = vmatprep.subr.mxu0 0.0
      %727 = vmatpush1.msra.mxu0 0.0
      %728 = vmatprep.subr.mxu0 0.0
      %729 = vmatpush1.msra.mxu0 0.0
      %730 = vmatprep.subr.mxu0 0.0
      %731 = vmatpush1.msra.mxu0 0.0
      %732 = vmatprep.subr.mxu0 0.0
      %733 = vmatpush1.msra.mxu0 0.0
      %734 = vmatprep.subr.mxu0 0.0
      %735 = vmatpush1.msra.mxu0 0.0
      %736 = vmatprep.subr.mxu0 0.0
      %737 = vmatpush1.msra.mxu0 0.0
      %738 = vmatprep.subr.mxu0 0.0
      %739 = vmatpush1.msra.mxu0 0.0
      %v740 = vand.u32 %v421, 4294901760
      %741 = vmatprep.subr.mxu0 %v740
      %v742 = vand.u32 %v420, 4294901760
      %743 = vmatpush1.msra.mxu0 %v742
      %v744 = vand.u32 %v419, 4294901760
      %745 = vmatprep.subr.mxu0 %v744
      %v746 = vand.u32 %v418, 4294901760
      %747 = vmatpush1.msra.mxu0 %v746
      %748 = vmatprep.subr.mxu0 0.0
      %749 = vmatpush2.msra.mxu0 0.0
      %750 = vmatprep.subr.mxu0 0.0
      %751 = vmatpush2.msra.mxu0 0.0
      %752 = vmatprep.subr.mxu0 0.0
      %753 = vmatpush2.msra.mxu0 0.0
      %754 = vmatprep.subr.mxu0 0.0
      %755 = vmatpush2.msra.mxu0 0.0
      %756 = vmatprep.subr.mxu0 0.0
      %757 = vmatpush2.msra.mxu0 0.0
      %758 = vmatprep.subr.mxu0 0.0
      %759 = vmatpush2.msra.mxu0 0.0
      %760 = vmatprep.subr.mxu0 0.0
      %761 = vmatpush2.msra.mxu0 0.0
      %762 = vmatprep.subr.mxu0 0.0
      %763 = vmatpush2.msra.mxu0 0.0
      %764 = vmatprep.subr.mxu0 0.0
      %765 = vmatpush2.msra.mxu0 0.0
      %766 = vmatprep.subr.mxu0 0.0
      %767 = vmatpush2.msra.mxu0 0.0
      %768 = vmatprep.subr.mxu0 0.0
      %769 = vmatpush2.msra.mxu0 0.0
      %770 = vmatprep.subr.mxu0 0.0
      %771 = vmatpush2.msra.mxu0 0.0
      %772 = vmatprep.subr.mxu0 0.0
      %773 = vmatpush2.msra.mxu0 0.0
      %774 = vmatprep.subr.mxu0 0.0
      %775 = vmatpush2.msra.mxu0 0.0
      %776 = vmatprep.subr.mxu0 0.0
      %777 = vmatpush2.msra.mxu0 0.0
      %778 = vmatprep.subr.mxu0 0.0
      %779 = vmatpush2.msra.mxu0 0.0
      %780 = vmatprep.mubr.f32.mxu0 0.0
      %v781 = vand.u32 %v428, 4294901760
      %v782 = vsub.f32 %v428, %v781
      %v783 = vand.u32 %v782, 4294901760
      %784 = vmatmul.mubr.f32.gmra.mxu0 %v783
      %v785 = vpop.f32.mrf.mxu0
      %v786 = vadd.f32 %v700, %v785
      %v787 = vpop.f32.mrf.mxu0
      %v788 = vadd.f32 %v702, %v787
      %789 = vmatprep.mubr.f32.mxu0 0.0
      %v790 = vand.u32 %v431, 4294901760
      %v791 = vsub.f32 %v431, %v790
      %v792 = vand.u32 %v791, 4294901760
      %793 = vmatmul.mubr.f32.gmra.mxu0 %v792
      %v794 = vpop.f32.mrf.mxu0
      %v795 = vadd.f32 %v708, %v794
      %v796 = vpop.f32.mrf.mxu0
      %v797 = vadd.f32 %v710, %v796
      %798 = vdwg.mxu0
      %799 = vmatprep.subr.mxu0 0.0
      %800 = vmatpush1.msra.mxu0 0.0
      %801 = vmatprep.subr.mxu0 0.0
      %802 = vmatpush1.msra.mxu0 0.0
      %803 = vmatprep.subr.mxu0 0.0
      %804 = vmatpush1.msra.mxu0 0.0
      %805 = vmatprep.subr.mxu0 0.0
      %806 = vmatpush1.msra.mxu0 0.0
      %807 = vmatprep.subr.mxu0 0.0
      %808 = vmatpush1.msra.mxu0 0.0
      %809 = vmatprep.subr.mxu0 0.0
      %810 = vmatpush1.msra.mxu0 0.0
      %811 = vmatprep.subr.mxu0 0.0
      %812 = vmatpush1.msra.mxu0 0.0
      %813 = vmatprep.subr.mxu0 0.0
      %814 = vmatpush1.msra.mxu0 0.0
      %815 = vmatprep.subr.mxu0 0.0
      %816 = vmatpush1.msra.mxu0 0.0
      %817 = vmatprep.subr.mxu0 0.0
      %818 = vmatpush1.msra.mxu0 0.0
      %819 = vmatprep.subr.mxu0 0.0
      %820 = vmatpush1.msra.mxu0 0.0
      %821 = vmatprep.subr.mxu0 0.0
      %822 = vmatpush1.msra.mxu0 0.0
      %823 = vmatprep.subr.mxu0 0.0
      %824 = vmatpush1.msra.mxu0 0.0
      %825 = vmatprep.subr.mxu0 0.0
      %826 = vmatpush1.msra.mxu0 0.0
      %v827 = vand.u32 %v421, 4294901760
      %v828 = vsub.f32 %v421, %v827
      %v829 = vand.u32 %v828, 4294901760
      %830 = vmatprep.subr.mxu0 %v829
      %v831 = vand.u32 %v420, 4294901760
      %v832 = vsub.f32 %v420, %v831
      %v833 = vand.u32 %v832, 4294901760
      %834 = vmatpush1.msra.mxu0 %v833
      %v835 = vand.u32 %v419, 4294901760
      %v836 = vsub.f32 %v419, %v835
      %v837 = vand.u32 %v836, 4294901760
      %838 = vmatprep.subr.mxu0 %v837
      %v839 = vand.u32 %v418, 4294901760
      %v840 = vsub.f32 %v418, %v839
      %v841 = vand.u32 %v840, 4294901760
      %842 = vmatpush1.msra.mxu0 %v841
      %843 = vmatprep.subr.mxu0 0.0
      %844 = vmatpush2.msra.mxu0 0.0
      %845 = vmatprep.subr.mxu0 0.0
      %846 = vmatpush2.msra.mxu0 0.0
      %847 = vmatprep.subr.mxu0 0.0
      %848 = vmatpush2.msra.mxu0 0.0
      %849 = vmatprep.subr.mxu0 0.0
      %850 = vmatpush2.msra.mxu0 0.0
      %851 = vmatprep.subr.mxu0 0.0
      %852 = vmatpush2.msra.mxu0 0.0
      %853 = vmatprep.subr.mxu0 0.0
      %854 = vmatpush2.msra.mxu0 0.0
      %855 = vmatprep.subr.mxu0 0.0
      %856 = vmatpush2.msra.mxu0 0.0
      %857 = vmatprep.subr.mxu0 0.0
      %858 = vmatpush2.msra.mxu0 0.0
      %859 = vmatprep.subr.mxu0 0.0
      %860 = vmatpush2.msra.mxu0 0.0
      %861 = vmatprep.subr.mxu0 0.0
      %862 = vmatpush2.msra.mxu0 0.0
      %863 = vmatprep.subr.mxu0 0.0
      %864 = vmatpush2.msra.mxu0 0.0
      %865 = vmatprep.subr.mxu0 0.0
      %866 = vmatpush2.msra.mxu0 0.0
      %867 = vmatprep.subr.mxu0 0.0
      %868 = vmatpush2.msra.mxu0 0.0
      %869 = vmatprep.subr.mxu0 0.0
      %870 = vmatpush2.msra.mxu0 0.0
      %871 = vmatprep.subr.mxu0 0.0
      %872 = vmatpush2.msra.mxu0 0.0
      %873 = vmatprep.subr.mxu0 0.0
      %874 = vmatpush2.msra.mxu0 0.0
      %875 = vmatprep.mubr.f32.mxu0 0.0
      %v876 = vand.u32 %v428, 4294901760
      %877 = vmatmul.mubr.f32.gmra.mxu0 %v876
      %v878 = vpop.f32.mrf.mxu0
      %v879 = vadd.f32 %v786, %v878
      %v880 = vpop.f32.mrf.mxu0
      %v881 = vadd.f32 %v788, %v880
      %882 = vmatprep.mubr.f32.mxu0 0.0
      %v883 = vand.u32 %v431, 4294901760
      %884 = vmatmul.mubr.f32.gmra.mxu0 %v883
      %v885 = vpop.f32.mrf.mxu0
      %v886 = vadd.f32 %v795, %v885
      %v887 = vpop.f32.mrf.mxu0
      %v888 = vadd.f32 %v797, %v887
      %889 = vdwg.mxu0
      %890 = vmatprep.subr.mxu0 0.0
      %891 = vmatpush1.msra.mxu0 0.0
      %892 = vmatprep.subr.mxu0 0.0
      %893 = vmatpush1.msra.mxu0 0.0
      %894 = vmatprep.subr.mxu0 0.0
      %895 = vmatpush1.msra.mxu0 0.0
      %896 = vmatprep.subr.mxu0 0.0
      %897 = vmatpush1.msra.mxu0 0.0
      %898 = vmatprep.subr.mxu0 0.0
      %899 = vmatpush1.msra.mxu0 0.0
      %900 = vmatprep.subr.mxu0 0.0
      %901 = vmatpush1.msra.mxu0 0.0
      %902 = vmatprep.subr.mxu0 0.0
      %903 = vmatpush1.msra.mxu0 0.0
      %904 = vmatprep.subr.mxu0 0.0
      %905 = vmatpush1.msra.mxu0 0.0
      %906 = vmatprep.subr.mxu0 0.0
      %907 = vmatpush1.msra.mxu0 0.0
      %908 = vmatprep.subr.mxu0 0.0
      %909 = vmatpush1.msra.mxu0 0.0
      %910 = vmatprep.subr.mxu0 0.0
      %911 = vmatpush1.msra.mxu0 0.0
      %912 = vmatprep.subr.mxu0 0.0
      %913 = vmatpush1.msra.mxu0 0.0
      %914 = vmatprep.subr.mxu0 0.0
      %915 = vmatpush1.msra.mxu0 0.0
      %916 = vmatprep.subr.mxu0 0.0
      %917 = vmatpush1.msra.mxu0 0.0
      %v918 = vand.u32 %v421, 4294901760
      %919 = vmatprep.subr.mxu0 %v918
      %v920 = vand.u32 %v420, 4294901760
      %921 = vmatpush1.msra.mxu0 %v920
      %v922 = vand.u32 %v419, 4294901760
      %923 = vmatprep.subr.mxu0 %v922
      %v924 = vand.u32 %v418, 4294901760
      %925 = vmatpush1.msra.mxu0 %v924
      %926 = vmatprep.subr.mxu0 0.0
      %927 = vmatpush2.msra.mxu0 0.0
      %928 = vmatprep.subr.mxu0 0.0
      %929 = vmatpush2.msra.mxu0 0.0
      %930 = vmatprep.subr.mxu0 0.0
      %931 = vmatpush2.msra.mxu0 0.0
      %932 = vmatprep.subr.mxu0 0.0
      %933 = vmatpush2.msra.mxu0 0.0
      %934 = vmatprep.subr.mxu0 0.0
      %935 = vmatpush2.msra.mxu0 0.0
      %936 = vmatprep.subr.mxu0 0.0
      %937 = vmatpush2.msra.mxu0 0.0
      %938 = vmatprep.subr.mxu0 0.0
      %939 = vmatpush2.msra.mxu0 0.0
      %940 = vmatprep.subr.mxu0 0.0
      %941 = vmatpush2.msra.mxu0 0.0
      %942 = vmatprep.subr.mxu0 0.0
      %943 = vmatpush2.msra.mxu0 0.0
      %944 = vmatprep.subr.mxu0 0.0
      %945 = vmatpush2.msra.mxu0 0.0
      %946 = vmatprep.subr.mxu0 0.0
      %947 = vmatpush2.msra.mxu0 0.0
      %948 = vmatprep.subr.mxu0 0.0
      %949 = vmatpush2.msra.mxu0 0.0
      %950 = vmatprep.subr.mxu0 0.0
      %951 = vmatpush2.msra.mxu0 0.0
      %952 = vmatprep.subr.mxu0 0.0
      %953 = vmatpush2.msra.mxu0 0.0
      %954 = vmatprep.subr.mxu0 0.0
      %955 = vmatpush2.msra.mxu0 0.0
      %956 = vmatprep.subr.mxu0 0.0
      %957 = vmatpush2.msra.mxu0 0.0
      %958 = vmatprep.mubr.f32.mxu0 0.0
      %v959 = vand.u32 %v428, 4294901760
      %960 = vmatmul.mubr.f32.gmra.mxu0 %v959
      %v961 = vpop.f32.mrf.mxu0
      %v962 = vadd.f32 %v879, %v961
      %v963 = vpop.f32.mrf.mxu0
      %v964 = vadd.f32 %v881, %v963
      %965 = vmatprep.mubr.f32.mxu0 0.0
      %v966 = vand.u32 %v431, 4294901760
      %967 = vmatmul.mubr.f32.gmra.mxu0 %v966
      %v968 = vpop.f32.mrf.mxu0
      %v969 = vadd.f32 %v886, %v968
      %v970 = vpop.f32.mrf.mxu0
      %v971 = vadd.f32 %v888, %v970
      %972 = vdwg.mxu0
      %v974 = vsel %vm426, %v422, 0
      %v977 = vsel %vm426, %v423, 0
      %979 = vmatprep.subr.mxu0 0.0
      %980 = vmatpush1.msra.mxu0 0.0
      %981 = vmatprep.subr.mxu0 0.0
      %982 = vmatpush1.msra.mxu0 0.0
      %983 = vmatprep.subr.mxu0 0.0
      %984 = vmatpush1.msra.mxu0 0.0
      %985 = vmatprep.subr.mxu0 0.0
      %986 = vmatpush1.msra.mxu0 0.0
      %987 = vmatprep.subr.mxu0 0.0
      %988 = vmatpush1.msra.mxu0 0.0
      %989 = vmatprep.subr.mxu0 0.0
      %990 = vmatpush1.msra.mxu0 0.0
      %991 = vmatprep.subr.mxu0 0.0
      %992 = vmatpush1.msra.mxu0 0.0
      %993 = vmatprep.subr.mxu0 0.0
      %994 = vmatpush1.msra.mxu0 0.0
      %995 = vmatprep.subr.mxu0 0.0
      %996 = vmatpush1.msra.mxu0 0.0
      %997 = vmatprep.subr.mxu0 0.0
      %998 = vmatpush1.msra.mxu0 0.0
      %999 = vmatprep.subr.mxu0 0.0
      %1000 = vmatpush1.msra.mxu0 0.0
      %1001 = vmatprep.subr.mxu0 0.0
      %1002 = vmatpush1.msra.mxu0 0.0
      %1003 = vmatprep.subr.mxu0 0.0
      %1004 = vmatpush1.msra.mxu0 0.0
      %1005 = vmatprep.subr.mxu0 0.0
      %1006 = vmatpush1.msra.mxu0 0.0
      %v1007 = vand.u32 %v377, 4294901760
      %1008 = vmatprep.subr.mxu0 %v1007
      %v1009 = vand.u32 %v376, 4294901760
      %1010 = vmatpush1.msra.mxu0 %v1009
      %v1011 = vand.u32 %v375, 4294901760
      %1012 = vmatprep.subr.mxu0 %v1011
      %v1013 = vand.u32 %v374, 4294901760
      %1014 = vmatpush1.msra.mxu0 %v1013
      %1015 = vmatprep.subr.mxu0 0.0
      %1016 = vmatpush2.msra.mxu0 0.0
      %1017 = vmatprep.subr.mxu0 0.0
      %1018 = vmatpush2.msra.mxu0 0.0
      %1019 = vmatprep.subr.mxu0 0.0
      %1020 = vmatpush2.msra.mxu0 0.0
      %1021 = vmatprep.subr.mxu0 0.0
      %1022 = vmatpush2.msra.mxu0 0.0
      %1023 = vmatprep.subr.mxu0 0.0
      %1024 = vmatpush2.msra.mxu0 0.0
      %1025 = vmatprep.subr.mxu0 0.0
      %1026 = vmatpush2.msra.mxu0 0.0
      %1027 = vmatprep.subr.mxu0 0.0
      %1028 = vmatpush2.msra.mxu0 0.0
      %1029 = vmatprep.subr.mxu0 0.0
      %1030 = vmatpush2.msra.mxu0 0.0
      %1031 = vmatprep.subr.mxu0 0.0
      %1032 = vmatpush2.msra.mxu0 0.0
      %1033 = vmatprep.subr.mxu0 0.0
      %1034 = vmatpush2.msra.mxu0 0.0
      %1035 = vmatprep.subr.mxu0 0.0
      %1036 = vmatpush2.msra.mxu0 0.0
      %1037 = vmatprep.subr.mxu0 0.0
      %1038 = vmatpush2.msra.mxu0 0.0
      %1039 = vmatprep.subr.mxu0 0.0
      %1040 = vmatpush2.msra.mxu0 0.0
      %1041 = vmatprep.subr.mxu0 0.0
      %1042 = vmatpush2.msra.mxu0 0.0
      %1043 = vmatprep.subr.mxu0 0.0
      %1044 = vmatpush2.msra.mxu0 0.0
      %1045 = vmatprep.subr.mxu0 0.0
      %1046 = vmatpush2.msra.mxu0 0.0
      %1047 = vmatprep.mubr.f32.mxu0 0.0
      %v1048 = vand.u32 %v974, 4294901760
      %v1049 = vsub.f32 %v974, %v1048
      %v1050 = vand.u32 %v1049, 4294901760
      %v1051 = vsub.f32 %v1049, %v1050
      %v1052 = vand.u32 %v1051, 4294901760
      %1053 = vmatmul.mubr.f32.gmra.mxu0 %v1052
      %v1054 = vpop.f32.mrf.mxu0
      %v1055 = vadd.f32 %v962, %v1054
      %v1056 = vpop.f32.mrf.mxu0
      %v1057 = vadd.f32 %v964, %v1056
      %1058 = vmatprep.mubr.f32.mxu0 0.0
      %v1059 = vand.u32 %v977, 4294901760
      %v1060 = vsub.f32 %v977, %v1059
      %v1061 = vand.u32 %v1060, 4294901760
      %v1062 = vsub.f32 %v1060, %v1061
      %v1063 = vand.u32 %v1062, 4294901760
      %1064 = vmatmul.mubr.f32.gmra.mxu0 %v1063
      %v1065 = vpop.f32.mrf.mxu0
      %v1066 = vadd.f32 %v969, %v1065
      %v1067 = vpop.f32.mrf.mxu0
      %v1068 = vadd.f32 %v971, %v1067
      %1069 = vdwg.mxu0
      %1070 = vmatprep.subr.mxu0 0.0
      %1071 = vmatpush1.msra.mxu0 0.0
      %1072 = vmatprep.subr.mxu0 0.0
      %1073 = vmatpush1.msra.mxu0 0.0
      %1074 = vmatprep.subr.mxu0 0.0
      %1075 = vmatpush1.msra.mxu0 0.0
      %1076 = vmatprep.subr.mxu0 0.0
      %1077 = vmatpush1.msra.mxu0 0.0
      %1078 = vmatprep.subr.mxu0 0.0
      %1079 = vmatpush1.msra.mxu0 0.0
      %1080 = vmatprep.subr.mxu0 0.0
      %1081 = vmatpush1.msra.mxu0 0.0
      %1082 = vmatprep.subr.mxu0 0.0
      %1083 = vmatpush1.msra.mxu0 0.0
      %1084 = vmatprep.subr.mxu0 0.0
      %1085 = vmatpush1.msra.mxu0 0.0
      %1086 = vmatprep.subr.mxu0 0.0
      %1087 = vmatpush1.msra.mxu0 0.0
      %1088 = vmatprep.subr.mxu0 0.0
      %1089 = vmatpush1.msra.mxu0 0.0
      %1090 = vmatprep.subr.mxu0 0.0
      %1091 = vmatpush1.msra.mxu0 0.0
      %1092 = vmatprep.subr.mxu0 0.0
      %1093 = vmatpush1.msra.mxu0 0.0
      %1094 = vmatprep.subr.mxu0 0.0
      %1095 = vmatpush1.msra.mxu0 0.0
      %1096 = vmatprep.subr.mxu0 0.0
      %1097 = vmatpush1.msra.mxu0 0.0
      %v1098 = vand.u32 %v377, 4294901760
      %v1099 = vsub.f32 %v377, %v1098
      %v1100 = vand.u32 %v1099, 4294901760
      %v1101 = vsub.f32 %v1099, %v1100
      %v1102 = vand.u32 %v1101, 4294901760
      %1103 = vmatprep.subr.mxu0 %v1102
      %v1104 = vand.u32 %v376, 4294901760
      %v1105 = vsub.f32 %v376, %v1104
      %v1106 = vand.u32 %v1105, 4294901760
      %v1107 = vsub.f32 %v1105, %v1106
      %v1108 = vand.u32 %v1107, 4294901760
      %1109 = vmatpush1.msra.mxu0 %v1108
      %v1110 = vand.u32 %v375, 4294901760
      %v1111 = vsub.f32 %v375, %v1110
      %v1112 = vand.u32 %v1111, 4294901760
      %v1113 = vsub.f32 %v1111, %v1112
      %v1114 = vand.u32 %v1113, 4294901760
      %1115 = vmatprep.subr.mxu0 %v1114
      %v1116 = vand.u32 %v374, 4294901760
      %v1117 = vsub.f32 %v374, %v1116
      %v1118 = vand.u32 %v1117, 4294901760
      %v1119 = vsub.f32 %v1117, %v1118
      %v1120 = vand.u32 %v1119, 4294901760
      %1121 = vmatpush1.msra.mxu0 %v1120
      %1122 = vmatprep.subr.mxu0 0.0
      %1123 = vmatpush2.msra.mxu0 0.0
      %1124 = vmatprep.subr.mxu0 0.0
      %1125 = vmatpush2.msra.mxu0 0.0
      %1126 = vmatprep.subr.mxu0 0.0
      %1127 = vmatpush2.msra.mxu0 0.0
      %1128 = vmatprep.subr.mxu0 0.0
      %1129 = vmatpush2.msra.mxu0 0.0
      %1130 = vmatprep.subr.mxu0 0.0
      %1131 = vmatpush2.msra.mxu0 0.0
      %1132 = vmatprep.subr.mxu0 0.0
      %1133 = vmatpush2.msra.mxu0 0.0
      %1134 = vmatprep.subr.mxu0 0.0
      %1135 = vmatpush2.msra.mxu0 0.0
      %1136 = vmatprep.subr.mxu0 0.0
      %1137 = vmatpush2.msra.mxu0 0.0
      %1138 = vmatprep.subr.mxu0 0.0
      %1139 = vmatpush2.msra.mxu0 0.0
      %1140 = vmatprep.subr.mxu0 0.0
      %1141 = vmatpush2.msra.mxu0 0.0
      %1142 = vmatprep.subr.mxu0 0.0
      %1143 = vmatpush2.msra.mxu0 0.0
      %1144 = vmatprep.subr.mxu0 0.0
      %1145 = vmatpush2.msra.mxu0 0.0
      %1146 = vmatprep.subr.mxu0 0.0
      %1147 = vmatpush2.msra.mxu0 0.0
      %1148 = vmatprep.subr.mxu0 0.0
      %1149 = vmatpush2.msra.mxu0 0.0
      %1150 = vmatprep.subr.mxu0 0.0
      %1151 = vmatpush2.msra.mxu0 0.0
      %1152 = vmatprep.subr.mxu0 0.0
      %1153 = vmatpush2.msra.mxu0 0.0
      %1154 = vmatprep.mubr.f32.mxu0 0.0
      %v1155 = vand.u32 %v974, 4294901760
      %1156 = vmatmul.mubr.f32.gmra.mxu0 %v1155
      %v1157 = vpop.f32.mrf.mxu0
      %v1158 = vadd.f32 %v1055, %v1157
      %v1159 = vpop.f32.mrf.mxu0
      %v1160 = vadd.f32 %v1057, %v1159
      %1161 = vmatprep.mubr.f32.mxu0 0.0
      %v1162 = vand.u32 %v977, 4294901760
      %1163 = vmatmul.mubr.f32.gmra.mxu0 %v1162
      %v1164 = vpop.f32.mrf.mxu0
      %v1165 = vadd.f32 %v1066, %v1164
      %v1166 = vpop.f32.mrf.mxu0
      %v1167 = vadd.f32 %v1068, %v1166
      %1168 = vdwg.mxu0
      %1169 = vmatprep.subr.mxu0 0.0
      %1170 = vmatpush1.msra.mxu0 0.0
      %1171 = vmatprep.subr.mxu0 0.0
      %1172 = vmatpush1.msra.mxu0 0.0
      %1173 = vmatprep.subr.mxu0 0.0
      %1174 = vmatpush1.msra.mxu0 0.0
      %1175 = vmatprep.subr.mxu0 0.0
      %1176 = vmatpush1.msra.mxu0 0.0
      %1177 = vmatprep.subr.mxu0 0.0
      %1178 = vmatpush1.msra.mxu0 0.0
      %1179 = vmatprep.subr.mxu0 0.0
      %1180 = vmatpush1.msra.mxu0 0.0
      %1181 = vmatprep.subr.mxu0 0.0
      %1182 = vmatpush1.msra.mxu0 0.0
      %1183 = vmatprep.subr.mxu0 0.0
      %1184 = vmatpush1.msra.mxu0 0.0
      %1185 = vmatprep.subr.mxu0 0.0
      %1186 = vmatpush1.msra.mxu0 0.0
      %1187 = vmatprep.subr.mxu0 0.0
      %1188 = vmatpush1.msra.mxu0 0.0
      %1189 = vmatprep.subr.mxu0 0.0
      %1190 = vmatpush1.msra.mxu0 0.0
      %1191 = vmatprep.subr.mxu0 0.0
      %1192 = vmatpush1.msra.mxu0 0.0
      %1193 = vmatprep.subr.mxu0 0.0
      %1194 = vmatpush1.msra.mxu0 0.0
      %1195 = vmatprep.subr.mxu0 0.0
      %1196 = vmatpush1.msra.mxu0 0.0
      %v1197 = vand.u32 %v377, 4294901760
      %v1198 = vsub.f32 %v377, %v1197
      %1199 = vmatprep.subr.mxu0 %v1198
      %v1200 = vand.u32 %v376, 4294901760
      %v1201 = vsub.f32 %v376, %v1200
      %1202 = vmatpush1.msra.mxu0 %v1201
      %v1203 = vand.u32 %v375, 4294901760
      %v1204 = vsub.f32 %v375, %v1203
      %1205 = vmatprep.subr.mxu0 %v1204
      %v1206 = vand.u32 %v374, 4294901760
      %v1207 = vsub.f32 %v374, %v1206
      %1208 = vmatpush1.msra.mxu0 %v1207
      %1209 = vmatprep.subr.mxu0 0.0
      %1210 = vmatpush2.msra.mxu0 0.0
      %1211 = vmatprep.subr.mxu0 0.0
      %1212 = vmatpush2.msra.mxu0 0.0
      %1213 = vmatprep.subr.mxu0 0.0
      %1214 = vmatpush2.msra.mxu0 0.0
      %1215 = vmatprep.subr.mxu0 0.0
      %1216 = vmatpush2.msra.mxu0 0.0
      %1217 = vmatprep.subr.mxu0 0.0
      %1218 = vmatpush2.msra.mxu0 0.0
      %1219 = vmatprep.subr.mxu0 0.0
      %1220 = vmatpush2.msra.mxu0 0.0
      %1221 = vmatprep.subr.mxu0 0.0
      %1222 = vmatpush2.msra.mxu0 0.0
      %1223 = vmatprep.subr.mxu0 0.0
      %1224 = vmatpush2.msra.mxu0 0.0
      %1225 = vmatprep.subr.mxu0 0.0
      %1226 = vmatpush2.msra.mxu0 0.0
      %1227 = vmatprep.subr.mxu0 0.0
      %1228 = vmatpush2.msra.mxu0 0.0
      %1229 = vmatprep.subr.mxu0 0.0
      %1230 = vmatpush2.msra.mxu0 0.0
      %1231 = vmatprep.subr.mxu0 0.0
      %1232 = vmatpush2.msra.mxu0 0.0
      %1233 = vmatprep.subr.mxu0 0.0
      %1234 = vmatpush2.msra.mxu0 0.0
      %1235 = vmatprep.subr.mxu0 0.0
      %1236 = vmatpush2.msra.mxu0 0.0
      %1237 = vmatprep.subr.mxu0 0.0
      %1238 = vmatpush2.msra.mxu0 0.0
      %1239 = vmatprep.subr.mxu0 0.0
      %1240 = vmatpush2.msra.mxu0 0.0
      %1241 = vmatprep.mubr.f32.mxu0 0.0
      %v1242 = vand.u32 %v974, 4294901760
      %v1243 = vsub.f32 %v974, %v1242
      %1244 = vmatmul.mubr.f32.gmra.mxu0 %v1243
      %v1245 = vpop.f32.mrf.mxu0
      %v1246 = vadd.f32 %v1158, %v1245
      %v1247 = vpop.f32.mrf.mxu0
      %v1248 = vadd.f32 %v1160, %v1247
      %1249 = vmatprep.mubr.f32.mxu0 0.0
      %v1250 = vand.u32 %v977, 4294901760
      %v1251 = vsub.f32 %v977, %v1250
      %1252 = vmatmul.mubr.f32.gmra.mxu0 %v1251
      %v1253 = vpop.f32.mrf.mxu0
      %v1254 = vadd.f32 %v1165, %v1253
      %v1255 = vpop.f32.mrf.mxu0
      %v1256 = vadd.f32 %v1167, %v1255
      %1257 = vdwg.mxu0
      %1258 = vmatprep.subr.mxu0 0.0
      %1259 = vmatpush1.msra.mxu0 0.0
      %1260 = vmatprep.subr.mxu0 0.0
      %1261 = vmatpush1.msra.mxu0 0.0
      %1262 = vmatprep.subr.mxu0 0.0
      %1263 = vmatpush1.msra.mxu0 0.0
      %1264 = vmatprep.subr.mxu0 0.0
      %1265 = vmatpush1.msra.mxu0 0.0
      %1266 = vmatprep.subr.mxu0 0.0
      %1267 = vmatpush1.msra.mxu0 0.0
      %1268 = vmatprep.subr.mxu0 0.0
      %1269 = vmatpush1.msra.mxu0 0.0
      %1270 = vmatprep.subr.mxu0 0.0
      %1271 = vmatpush1.msra.mxu0 0.0
      %1272 = vmatprep.subr.mxu0 0.0
      %1273 = vmatpush1.msra.mxu0 0.0
      %1274 = vmatprep.subr.mxu0 0.0
      %1275 = vmatpush1.msra.mxu0 0.0
      %1276 = vmatprep.subr.mxu0 0.0
      %1277 = vmatpush1.msra.mxu0 0.0
      %1278 = vmatprep.subr.mxu0 0.0
      %1279 = vmatpush1.msra.mxu0 0.0
      %1280 = vmatprep.subr.mxu0 0.0
      %1281 = vmatpush1.msra.mxu0 0.0
      %1282 = vmatprep.subr.mxu0 0.0
      %1283 = vmatpush1.msra.mxu0 0.0
      %1284 = vmatprep.subr.mxu0 0.0
      %1285 = vmatpush1.msra.mxu0 0.0
      %v1286 = vand.u32 %v377, 4294901760
      %1287 = vmatprep.subr.mxu0 %v1286
      %v1288 = vand.u32 %v376, 4294901760
      %1289 = vmatpush1.msra.mxu0 %v1288
      %v1290 = vand.u32 %v375, 4294901760
      %1291 = vmatprep.subr.mxu0 %v1290
      %v1292 = vand.u32 %v374, 4294901760
      %1293 = vmatpush1.msra.mxu0 %v1292
      %1294 = vmatprep.subr.mxu0 0.0
      %1295 = vmatpush2.msra.mxu0 0.0
      %1296 = vmatprep.subr.mxu0 0.0
      %1297 = vmatpush2.msra.mxu0 0.0
      %1298 = vmatprep.subr.mxu0 0.0
      %1299 = vmatpush2.msra.mxu0 0.0
      %1300 = vmatprep.subr.mxu0 0.0
      %1301 = vmatpush2.msra.mxu0 0.0
      %1302 = vmatprep.subr.mxu0 0.0
      %1303 = vmatpush2.msra.mxu0 0.0
      %1304 = vmatprep.subr.mxu0 0.0
      %1305 = vmatpush2.msra.mxu0 0.0
      %1306 = vmatprep.subr.mxu0 0.0
      %1307 = vmatpush2.msra.mxu0 0.0
      %1308 = vmatprep.subr.mxu0 0.0
      %1309 = vmatpush2.msra.mxu0 0.0
      %1310 = vmatprep.subr.mxu0 0.0
      %1311 = vmatpush2.msra.mxu0 0.0
      %1312 = vmatprep.subr.mxu0 0.0
      %1313 = vmatpush2.msra.mxu0 0.0
      %1314 = vmatprep.subr.mxu0 0.0
      %1315 = vmatpush2.msra.mxu0 0.0
      %1316 = vmatprep.subr.mxu0 0.0
      %1317 = vmatpush2.msra.mxu0 0.0
      %1318 = vmatprep.subr.mxu0 0.0
      %1319 = vmatpush2.msra.mxu0 0.0
      %1320 = vmatprep.subr.mxu0 0.0
      %1321 = vmatpush2.msra.mxu0 0.0
      %1322 = vmatprep.subr.mxu0 0.0
      %1323 = vmatpush2.msra.mxu0 0.0
      %1324 = vmatprep.subr.mxu0 0.0
      %1325 = vmatpush2.msra.mxu0 0.0
      %1326 = vmatprep.mubr.f32.mxu0 0.0
      %v1327 = vand.u32 %v974, 4294901760
      %v1328 = vsub.f32 %v974, %v1327
      %v1329 = vand.u32 %v1328, 4294901760
      %1330 = vmatmul.mubr.f32.gmra.mxu0 %v1329
      %v1331 = vpop.f32.mrf.mxu0
      %v1332 = vadd.f32 %v1246, %v1331
      %v1333 = vpop.f32.mrf.mxu0
      %v1334 = vadd.f32 %v1248, %v1333
      %1335 = vmatprep.mubr.f32.mxu0 0.0
      %v1336 = vand.u32 %v977, 4294901760
      %v1337 = vsub.f32 %v977, %v1336
      %v1338 = vand.u32 %v1337, 4294901760
      %1339 = vmatmul.mubr.f32.gmra.mxu0 %v1338
      %v1340 = vpop.f32.mrf.mxu0
      %v1341 = vadd.f32 %v1254, %v1340
      %v1342 = vpop.f32.mrf.mxu0
      %v1343 = vadd.f32 %v1256, %v1342
      %1344 = vdwg.mxu0
      %1345 = vmatprep.subr.mxu0 0.0
      %1346 = vmatpush1.msra.mxu0 0.0
      %1347 = vmatprep.subr.mxu0 0.0
      %1348 = vmatpush1.msra.mxu0 0.0
      %1349 = vmatprep.subr.mxu0 0.0
      %1350 = vmatpush1.msra.mxu0 0.0
      %1351 = vmatprep.subr.mxu0 0.0
      %1352 = vmatpush1.msra.mxu0 0.0
      %1353 = vmatprep.subr.mxu0 0.0
      %1354 = vmatpush1.msra.mxu0 0.0
      %1355 = vmatprep.subr.mxu0 0.0
      %1356 = vmatpush1.msra.mxu0 0.0
      %1357 = vmatprep.subr.mxu0 0.0
      %1358 = vmatpush1.msra.mxu0 0.0
      %1359 = vmatprep.subr.mxu0 0.0
      %1360 = vmatpush1.msra.mxu0 0.0
      %1361 = vmatprep.subr.mxu0 0.0
      %1362 = vmatpush1.msra.mxu0 0.0
      %1363 = vmatprep.subr.mxu0 0.0
      %1364 = vmatpush1.msra.mxu0 0.0
      %1365 = vmatprep.subr.mxu0 0.0
      %1366 = vmatpush1.msra.mxu0 0.0
      %1367 = vmatprep.subr.mxu0 0.0
      %1368 = vmatpush1.msra.mxu0 0.0
      %1369 = vmatprep.subr.mxu0 0.0
      %1370 = vmatpush1.msra.mxu0 0.0
      %1371 = vmatprep.subr.mxu0 0.0
      %1372 = vmatpush1.msra.mxu0 0.0
      %v1373 = vand.u32 %v377, 4294901760
      %v1374 = vsub.f32 %v377, %v1373
      %v1375 = vand.u32 %v1374, 4294901760
      %1376 = vmatprep.subr.mxu0 %v1375
      %v1377 = vand.u32 %v376, 4294901760
      %v1378 = vsub.f32 %v376, %v1377
      %v1379 = vand.u32 %v1378, 4294901760
      %1380 = vmatpush1.msra.mxu0 %v1379
      %v1381 = vand.u32 %v375, 4294901760
      %v1382 = vsub.f32 %v375, %v1381
      %v1383 = vand.u32 %v1382, 4294901760
      %1384 = vmatprep.subr.mxu0 %v1383
      %v1385 = vand.u32 %v374, 4294901760
      %v1386 = vsub.f32 %v374, %v1385
      %v1387 = vand.u32 %v1386, 4294901760
      %1388 = vmatpush1.msra.mxu0 %v1387
      %1389 = vmatprep.subr.mxu0 0.0
      %1390 = vmatpush2.msra.mxu0 0.0
      %1391 = vmatprep.subr.mxu0 0.0
      %1392 = vmatpush2.msra.mxu0 0.0
      %1393 = vmatprep.subr.mxu0 0.0
      %1394 = vmatpush2.msra.mxu0 0.0
      %1395 = vmatprep.subr.mxu0 0.0
      %1396 = vmatpush2.msra.mxu0 0.0
      %1397 = vmatprep.subr.mxu0 0.0
      %1398 = vmatpush2.msra.mxu0 0.0
      %1399 = vmatprep.subr.mxu0 0.0
      %1400 = vmatpush2.msra.mxu0 0.0
      %1401 = vmatprep.subr.mxu0 0.0
      %1402 = vmatpush2.msra.mxu0 0.0
      %1403 = vmatprep.subr.mxu0 0.0
      %1404 = vmatpush2.msra.mxu0 0.0
      %1405 = vmatprep.subr.mxu0 0.0
      %1406 = vmatpush2.msra.mxu0 0.0
      %1407 = vmatprep.subr.mxu0 0.0
      %1408 = vmatpush2.msra.mxu0 0.0
      %1409 = vmatprep.subr.mxu0 0.0
      %1410 = vmatpush2.msra.mxu0 0.0
      %1411 = vmatprep.subr.mxu0 0.0
      %1412 = vmatpush2.msra.mxu0 0.0
      %1413 = vmatprep.subr.mxu0 0.0
      %1414 = vmatpush2.msra.mxu0 0.0
      %1415 = vmatprep.subr.mxu0 0.0
      %1416 = vmatpush2.msra.mxu0 0.0
      %1417 = vmatprep.subr.mxu0 0.0
      %1418 = vmatpush2.msra.mxu0 0.0
      %1419 = vmatprep.subr.mxu0 0.0
      %1420 = vmatpush2.msra.mxu0 0.0
      %1421 = vmatprep.mubr.f32.mxu0 0.0
      %v1422 = vand.u32 %v974, 4294901760
      %1423 = vmatmul.mubr.f32.gmra.mxu0 %v1422
      %v1424 = vpop.f32.mrf.mxu0
      %v1425 = vadd.f32 %v1332, %v1424
      %v1426 = vpop.f32.mrf.mxu0
      %v1427 = vadd.f32 %v1334, %v1426
      %1428 = vmatprep.mubr.f32.mxu0 0.0
      %v1429 = vand.u32 %v977, 4294901760
      %1430 = vmatmul.mubr.f32.gmra.mxu0 %v1429
      %v1431 = vpop.f32.mrf.mxu0
      %v1432 = vadd.f32 %v1341, %v1431
      %v1433 = vpop.f32.mrf.mxu0
      %v1434 = vadd.f32 %v1343, %v1433
      %1435 = vdwg.mxu0
      %1436 = vmatprep.subr.mxu0 0.0
      %1437 = vmatpush1.msra.mxu0 0.0
      %1438 = vmatprep.subr.mxu0 0.0
      %1439 = vmatpush1.msra.mxu0 0.0
      %1440 = vmatprep.subr.mxu0 0.0
      %1441 = vmatpush1.msra.mxu0 0.0
      %1442 = vmatprep.subr.mxu0 0.0
      %1443 = vmatpush1.msra.mxu0 0.0
      %1444 = vmatprep.subr.mxu0 0.0
      %1445 = vmatpush1.msra.mxu0 0.0
      %1446 = vmatprep.subr.mxu0 0.0
      %1447 = vmatpush1.msra.mxu0 0.0
      %1448 = vmatprep.subr.mxu0 0.0
      %1449 = vmatpush1.msra.mxu0 0.0
      %1450 = vmatprep.subr.mxu0 0.0
      %1451 = vmatpush1.msra.mxu0 0.0
      %1452 = vmatprep.subr.mxu0 0.0
      %1453 = vmatpush1.msra.mxu0 0.0
      %1454 = vmatprep.subr.mxu0 0.0
      %1455 = vmatpush1.msra.mxu0 0.0
      %1456 = vmatprep.subr.mxu0 0.0
      %1457 = vmatpush1.msra.mxu0 0.0
      %1458 = vmatprep.subr.mxu0 0.0
      %1459 = vmatpush1.msra.mxu0 0.0
      %1460 = vmatprep.subr.mxu0 0.0
      %1461 = vmatpush1.msra.mxu0 0.0
      %1462 = vmatprep.subr.mxu0 0.0
      %1463 = vmatpush1.msra.mxu0 0.0
      %v1464 = vand.u32 %v377, 4294901760
      %1465 = vmatprep.subr.mxu0 %v1464
      %v1466 = vand.u32 %v376, 4294901760
      %1467 = vmatpush1.msra.mxu0 %v1466
      %v1468 = vand.u32 %v375, 4294901760
      %1469 = vmatprep.subr.mxu0 %v1468
      %v1470 = vand.u32 %v374, 4294901760
      %1471 = vmatpush1.msra.mxu0 %v1470
      %1472 = vmatprep.subr.mxu0 0.0
      %1473 = vmatpush2.msra.mxu0 0.0
      %1474 = vmatprep.subr.mxu0 0.0
      %1475 = vmatpush2.msra.mxu0 0.0
      %1476 = vmatprep.subr.mxu0 0.0
      %1477 = vmatpush2.msra.mxu0 0.0
      %1478 = vmatprep.subr.mxu0 0.0
      %1479 = vmatpush2.msra.mxu0 0.0
      %1480 = vmatprep.subr.mxu0 0.0
      %1481 = vmatpush2.msra.mxu0 0.0
      %1482 = vmatprep.subr.mxu0 0.0
      %1483 = vmatpush2.msra.mxu0 0.0
      %1484 = vmatprep.subr.mxu0 0.0
      %1485 = vmatpush2.msra.mxu0 0.0
      %1486 = vmatprep.subr.mxu0 0.0
      %1487 = vmatpush2.msra.mxu0 0.0
      %1488 = vmatprep.subr.mxu0 0.0
      %1489 = vmatpush2.msra.mxu0 0.0
      %1490 = vmatprep.subr.mxu0 0.0
      %1491 = vmatpush2.msra.mxu0 0.0
      %1492 = vmatprep.subr.mxu0 0.0
      %1493 = vmatpush2.msra.mxu0 0.0
      %1494 = vmatprep.subr.mxu0 0.0
      %1495 = vmatpush2.msra.mxu0 0.0
      %1496 = vmatprep.subr.mxu0 0.0
      %1497 = vmatpush2.msra.mxu0 0.0
      %1498 = vmatprep.subr.mxu0 0.0
      %1499 = vmatpush2.msra.mxu0 0.0
      %1500 = vmatprep.subr.mxu0 0.0
      %1501 = vmatpush2.msra.mxu0 0.0
      %1502 = vmatprep.subr.mxu0 0.0
      %1503 = vmatpush2.msra.mxu0 0.0
      %1504 = vmatprep.mubr.f32.mxu0 0.0
      %v1505 = vand.u32 %v974, 4294901760
      %1506 = vmatmul.mubr.f32.gmra.mxu0 %v1505
      %v1507 = vpop.f32.mrf.mxu0
      %v1508 = vadd.f32 %v1425, %v1507
      %v1509 = vpop.f32.mrf.mxu0
      %v1510 = vadd.f32 %v1427, %v1509
      %1511 = vmatprep.mubr.f32.mxu0 0.0
      %v1512 = vand.u32 %v977, 4294901760
      %1513 = vmatmul.mubr.f32.gmra.mxu0 %v1512
      %v1514 = vpop.f32.mrf.mxu0
      %v1515 = vadd.f32 %v1432, %v1514
      %v1516 = vpop.f32.mrf.mxu0
      %v1517 = vadd.f32 %v1434, %v1516
      %1518 = vdwg.mxu0
      %v1519 = vld [vmem:[%s6] sm:$0xff]
      %v1520 = vld [vmem:[%s6 + $0x8] sm:$0xff]
      %1522 = vset.pattern.permute.xlu0 0
      %1523 = vperm.xlu0 %1522, %v1519
      %v1524 = vpop.permute.xlu0 %1523
      %1527 = vset.pattern.permute.xlu0 0
      %1528 = vperm.xlu0 %1527, %v1520
      %v1529 = vpop.permute.xlu0 %1528
      %v1531 = vadd.f32 %v1508, %v1524
      %v1532 = vadd.f32 %v1510, %v1524
      %v1533 = vadd.f32 %v1515, %v1529
      %v1534 = vadd.f32 %v1517, %v1529
      %v1535 = vmax.f32 %v1531, 0.0
      %v1536 = vmax.f32 %v1532, 0.0
      %v1537 = vmax.f32 %v1533, 0.0
      %v1538 = vmax.f32 %v1534, 0.0
      %1539 = vst [vmem:[%s372] sm:$0xff] %v1535
      %1540 = vst [vmem:[%s372 + $0x8] sm:$0xff] %v1536
      %1541 = vst [vmem:[%s372 + $0x10] sm:$0xff] %v1537
      %1542 = vst [vmem:[%s372 + $0x18] sm:$0xff] %v1538
      %s1543 = smul.u32 2, %s23
      %p1544 = scmp.lt.s32.totalorder %s22, 1
      %s1545 = scalar_select %p1544, %s22, 1
      %p1546 = scmp.lt.s32.totalorder %s1543, 1
      %s1547 = scalar_select %p1546, %s1543, 1
      %s1548 = smul.addr %s1545, 4
      %s1549 = sadd.s32 %s1547, %s1548
      %s1550 = smul.addr %s1549, 8
      %s1551 = scalar_lea.vmem %s7, %s1550
      // Predicated region
      $region49: #{embedding_module3d_forward.5} parent=47 // pred_check
        %p1552 = pneg %p216
      $region50: #{embedding_module3d_forward.5} parent=47 // pred_check_branch
        %1554 = sbr.rel (%p1552) target = $region52
      $region51: #{embedding_module3d_forward.5} parent=47 // pred_region
        %s1555 = smul.u32 2, %s23
      $region52: #{embedding_module3d_forward.5} parent=47 // pred_fallthru
        _
    $region48: #{embedding_module3d_forward.5} parent=5 // pred_fallthru
      _
    %p1556 = scmp.le.s32.totalorder 2, %s13
    // Predicated region
    $region53: #{embedding_module3d_forward.5} parent=5 // pred_check
      %p1557 = pneg %p1556
    $region54: #{embedding_module3d_forward.5} parent=5 // pred_check_branch
      %1559 = sbr.rel (%p1557) target = $region56
    $region55: #{embedding_module3d_forward.5} parent=5 // pred_region
      %s1560 = ssub.s32 %s13, 2
      // Predicated region
      $region57: #{embedding_module3d_forward.5} parent=55 // pred_check
        %p1561 = pneg %p222
      $region58: #{embedding_module3d_forward.5} parent=55 // pred_check_branch
        %1563 = sbr.rel (%p1561) target = $region60
      $region59: #{embedding_module3d_forward.5} parent=55 // pred_region
        %s1564 = smul.u32 2, %s25
        %p1565 = scmp.lt.s32.totalorder %s24, 1
        %s1566 = scalar_select %p1565, %s24, 1
        %p1567 = scmp.lt.s32.totalorder %s1564, 1
        %s1568 = scalar_select %p1567, %s1564, 1
        %s1569 = smul.addr %s1566, 4
        %s1570 = sadd.s32 %s1568, %s1569
        %s1571 = smul.addr %s1570, 8
        %s1572 = scalar_lea.vmem %s7, %s1571
      $region60: #{embedding_module3d_forward.5} parent=55 // pred_fallthru
        _
    $region56: #{embedding_module3d_forward.5} parent=5 // pred_fallthru
      _
  $region6: #{embedding_module3d_forward.5} parent=0 // loop_footer
    %s17 = sadd.s32 1, %s13
  $region7: #{embedding_module3d_forward.5} parent=0 // loop_footer_branch
    %12 = sbr.rel target = $region3
  $region8: #{embedding_module3d_forward.5} parent=0 // loop_exit
    _

// kernel: embedding_module3d_forward.4
$region0: #{embedding_module3d_forward.4}
  #allocation0 [shape = 'u32[]', space=smem, size = 0x4, offset = 0x4, fixed_abs, tag = 'smem constant byte address 0x4 - core index']
  #allocation1 [shape = 'u32[144,128]{1,0:T(1,128)}', space=vmem, size = 0x12000, scoped, tag = 'internal scratch']
  %s0 = inlined_call_operand.vmem [shape: f32[2,16,256], index: 0, kind: input, shape index: {}]
  %s1 = inlined_call_operand.vmem [shape: f32[24,16], index: 1, kind: input, shape index: {}]
  %s2 = inlined_call_operand.vmem [shape: f32[24,16], index: 2, kind: input, shape index: {}]
  %s3 = inlined_call_operand.vmem [shape: f32[2,16,256], index: 3, kind: output, shape index: {0}]
  %s4 = inlined_call_operand.vmem [shape: f32[2,24,16], index: 4, kind: output, shape index: {1}]
  %5 = xla_tuple %s3, %s4
  %s6 = sld [smem:[#allocation0]]
  $region57: #{embedding_module3d_forward.4} parent=0
    _
  %s8 = ssub.s32 1, %s6
  %s9 = scalar_select 0, %s8, %s6
  loop: start=0, step=1, limit=4
  $region2: #{embedding_module3d_forward.4} parent=0 // loop_pre_header
    _
  $region3: #{embedding_module3d_forward.4} parent=0 // loop_header
    %s11 = sphi 0, %s15
    %p12 = scmp.ge.s32.totalorder %s11, 4
    %s18 = sphi 0, %s37
    %s19 = sphi 0, %s33
    %s20 = sphi 0, %s29
    %s21 = sphi 0, %s18
    %s22 = sphi 0, %s19
    %s23 = sphi 0, %s20
    %s24 = sphi 0, %s21
    %s25 = sphi 0, %s22
    %s26 = sphi 0, %s23
    %s44 = sphi 0, %s46
    %s47 = sphi 0, %s44
    %s48 = sphi 0, %s47
    %s64 = sphi 0, %s48
    %s68 = sphi 0, %s68
    %s70 = sphi 0, %s68
    %s71 = sphi 0, %s70
    %s85 = sphi 0, %s71
    %s89 = sphi 0, %s89
    %s91 = sphi 0, %s89
    %s92 = sphi 0, %s91
    %s106 = sphi 0, %s92
    %s116 = sphi 0, %s118
    %s119 = sphi 0, %s116
    %s120 = sphi 0, %s119
    %s136 = sphi 0, %s120
    %s144 = sphi 0, %s146
    %s147 = sphi 0, %s144
    %s148 = sphi 0, %s147
    %s164 = sphi 0, %s148
  $region4: #{embedding_module3d_forward.4} parent=0 // loop_header_branch
    %14 = sbr.rel (%p12) target = $region8
  $region5: #{embedding_module3d_forward.4} parent=0 // loop_body
    %s16 = ssub.s32 %s11, 1
    %s17 = ssub.s32 %s11, 2
    %s27 = sadd.s32 1, %s20
    %p28 = scmp.ge.s32.totalorder %s27, 1
    %s29 = scalar_select %p28, 0, %s27
    %s30 = sadd.s32 1, %s19
    %s31 = scalar_select %p28, %s30, %s19
    %p32 = scmp.ge.s32.totalorder %s31, 1
    %s33 = scalar_select %p32, 0, %s31
    %s34 = sadd.s32 1, %s18
    %s35 = scalar_select %p32, %s34, %s18
    %p36 = scmp.ge.s32.totalorder %s35, 2
    %s37 = scalar_select %p36, 0, %s35
    %s38 = sadd.s32 %s19, %s20
    %s39 = sadd.s32 %s33, %s29
    %s40 = ssub.s32 %s18, %s37
    %s41 = ssub.s32 %s38, %s39
    %s42 = sor.u32 %s40, %s41
    %p43 = scmp.eq.s32.totalorder %s42, 0
    %s45 = sadd.s32 %s44, 1
    %s46 = scalar_select %p43, %s44, %s45
    %p49 = pneg %p43
    %p50 = scmp.eq.s32.totalorder %s11, 1
    %p51 = por %p49, %p50
    %p52 = scmp.ne.s32.totalorder %s44, %s47
    %p53 = scmp.eq.s32.totalorder %s11, 0
    %p54 = por %p52, %p53
    %p55 = scmp.ne.s32.totalorder %s44, %s47
    %p56 = scmp.eq.s32.totalorder %s16, 1
    %p57 = por %p55, %p56
    %p58 = scmp.ne.s32.totalorder %s47, %s48
    %p59 = scmp.eq.s32.totalorder %s16, 0
    %p60 = por %p58, %p59
    %p61 = scmp.ne.s32.totalorder %s47, %s48
    %p62 = scmp.eq.s32.totalorder %s17, 1
    %p63 = por %p61, %p62
    %p65 = scmp.ne.s32.totalorder %s48, %s64
    %p66 = scmp.eq.s32.totalorder %s17, 0
    %p67 = por %p65, %p66
    %s69 = sadd.s32 %s68, 1
    %p72 = scmp.eq.s32.totalorder %s11, 1
    %p73 = scmp.ne.s32.totalorder %s68, %s70
    %p74 = scmp.eq.s32.totalorder %s11, 0
    %p75 = por %p73, %p74
    %p76 = scmp.ne.s32.totalorder %s68, %s70
    %p77 = scmp.eq.s32.totalorder %s16, 1
    %p78 = por %p76, %p77
    %p79 = scmp.ne.s32.totalorder %s70, %s71
    %p80 = scmp.eq.s32.totalorder %s16, 0
    %p81 = por %p79, %p80
    %p82 = scmp.ne.s32.totalorder %s70, %s71
    %p83 = scmp.eq.s32.totalorder %s17, 1
    %p84 = por %p82, %p83
    %p86 = scmp.ne.s32.totalorder %s71, %s85
    %p87 = scmp.eq.s32.totalorder %s17, 0
    %p88 = por %p86, %p87
    %s90 = sadd.s32 %s89, 1
    %p93 = scmp.eq.s32.totalorder %s11, 1
    %p94 = scmp.ne.s32.totalorder %s89, %s91
    %p95 = scmp.eq.s32.totalorder %s11, 0
    %p96 = por %p94, %p95
    %p97 = scmp.ne.s32.totalorder %s89, %s91
    %p98 = scmp.eq.s32.totalorder %s16, 1
    %p99 = por %p97, %p98
    %p100 = scmp.ne.s32.totalorder %s91, %s92
    %p101 = scmp.eq.s32.totalorder %s16, 0
    %p102 = por %p100, %p101
    %p103 = scmp.ne.s32.totalorder %s91, %s92
    %p104 = scmp.eq.s32.totalorder %s17, 1
    %p105 = por %p103, %p104
    %p107 = scmp.ne.s32.totalorder %s92, %s106
    %p108 = scmp.eq.s32.totalorder %s17, 0
    %p109 = por %p107, %p108
    %s110 = sadd.s32 %s19, %s20
    %s111 = sadd.s32 %s33, %s29
    %s112 = ssub.s32 %s18, %s37
    %s113 = ssub.s32 %s110, %s111
    %s114 = sor.u32 %s112, %s113
    %p115 = scmp.eq.s32.totalorder %s114, 0
    %s117 = sadd.s32 %s116, 1
    %s118 = scalar_select %p115, %s116, %s117
    %p121 = pneg %p115
    %p122 = scmp.eq.s32.totalorder %s11, 1
    %p123 = por %p121, %p122
    %p124 = scmp.ne.s32.totalorder %s116, %s119
    %p125 = scmp.eq.s32.totalorder %s11, 0
    %p126 = por %p124, %p125
    %p127 = scmp.ne.s32.totalorder %s116, %s119
    %p128 = scmp.eq.s32.totalorder %s16, 1
    %p129 = por %p127, %p128
    %p130 = scmp.ne.s32.totalorder %s119, %s120
    %p131 = scmp.eq.s32.totalorder %s16, 0
    %p132 = por %p130, %p131
    %p133 = scmp.ne.s32.totalorder %s119, %s120
    %p134 = scmp.eq.s32.totalorder %s17, 1
    %p135 = por %p133, %p134
    %p137 = scmp.ne.s32.totalorder %s120, %s136
    %p138 = scmp.eq.s32.totalorder %s17, 0
    %p139 = por %p137, %p138
    %s140 = sadd.s32 %s18, %s19
    %s141 = sadd.s32 %s37, %s33
    %s142 = ssub.s32 %s140, %s141
    %p143 = scmp.eq.s32.totalorder %s142, 0
    %s145 = sadd.s32 %s144, 1
    %s146 = scalar_select %p143, %s144, %s145
    %p149 = pneg %p143
    %p150 = scmp.eq.s32.totalorder %s11, 1
    %p151 = por %p149, %p150
    %p152 = scmp.ne.s32.totalorder %s144, %s147
    %p153 = scmp.eq.s32.totalorder %s11, 0
    %p154 = por %p152, %p153
    %p155 = scmp.ne.s32.totalorder %s144, %s147
    %p156 = scmp.eq.s32.totalorder %s16, 1
    %p157 = por %p155, %p156
    %p158 = scmp.ne.s32.totalorder %s147, %s148
    %p159 = scmp.eq.s32.totalorder %s16, 0
    %p160 = por %p158, %p159
    %p161 = scmp.ne.s32.totalorder %s147, %s148
    %p162 = scmp.eq.s32.totalorder %s17, 1
    %p163 = por %p161, %p162
    %p165 = scmp.ne.s32.totalorder %s148, %s164
    %p166 = scmp.eq.s32.totalorder %s17, 0
    %p167 = por %p165, %p166
    %p168 = scmp.le.s32.totalorder 1, %s11
    %p169 = scmp.lt.s32.totalorder %s11, 3
    %p170 = pnand %p168, %p169
    %p171 = pneg %p170
    // Predicated region
    $region9: #{embedding_module3d_forward.4} parent=5 // pred_check
      _
    $region10: #{embedding_module3d_forward.4} parent=5 // pred_check_branch
      %173 = sbr.rel (%p170) target = $region12
    $region11: #{embedding_module3d_forward.4} parent=5 // pred_region
      %s174 = ssub.s32 %s11, 1
      // Predicated region
      $region13: #{embedding_module3d_forward.4} parent=11 // pred_check
        %p175 = pneg %p81
      $region14: #{embedding_module3d_forward.4} parent=11 // pred_check_branch
        %177 = sbr.rel (%p175) target = $region16
      $region15: #{embedding_module3d_forward.4} parent=11 // pred_region
        _
      $region16: #{embedding_module3d_forward.4} parent=11 // pred_fallthru
        _
      // Predicated region
      $region17: #{embedding_module3d_forward.4} parent=11 // pred_check
        %p178 = pneg %p102
      $region18: #{embedding_module3d_forward.4} parent=11 // pred_check_branch
        %180 = sbr.rel (%p178) target = $region20
      $region19: #{embedding_module3d_forward.4} parent=11 // pred_region
        _
      $region20: #{embedding_module3d_forward.4} parent=11 // pred_fallthru
        _
    $region12: #{embedding_module3d_forward.4} parent=5 // pred_fallthru
      _
    %p181 = scmp.lt.s32.totalorder %s11, 2
    // Predicated region
    $region21: #{embedding_module3d_forward.4} parent=5 // pred_check
      %p182 = pneg %p181
    $region22: #{embedding_module3d_forward.4} parent=5 // pred_check_branch
      %184 = sbr.rel (%p182) target = $region24
    $region23: #{embedding_module3d_forward.4} parent=5 // pred_region
      // Predicated region
      $region25: #{embedding_module3d_forward.4} parent=23 // pred_check
        %p185 = pneg %p54
      $region26: #{embedding_module3d_forward.4} parent=23 // pred_check_branch
        %187 = sbr.rel (%p185) target = $region28
      $region27: #{embedding_module3d_forward.4} parent=23 // pred_region
        %s188 = sadd.s32 %s19, %s20
        %s189 = smul.u32 2, %s188
        %p190 = scmp.lt.s32.totalorder %s18, 1
        %s191 = scalar_select %p190, %s18, 1
        %p192 = scmp.lt.s32.totalorder %s189, 1
        %s193 = scalar_select %p192, %s189, 1
        %s194 = smul.addr %s191, 4
        %s195 = sadd.s32 %s193, %s194
        %s196 = smul.addr %s195, 8
        %s197 = scalar_lea.vmem %s0, %s196
        %s198 = sadd.s32 %s19, %s20
        %s199 = smul.u32 2, %s198
      $region28: #{embedding_module3d_forward.4} parent=23 // pred_fallthru
        _
    $region24: #{embedding_module3d_forward.4} parent=5 // pred_fallthru
      _
    %p200 = scmp.le.s32.totalorder 1, %s11
    %p201 = scmp.lt.s32.totalorder %s11, 3
    %p202 = pnand %p200, %p201
    %p203 = pneg %p202
    // Predicated region
    $region29: #{embedding_module3d_forward.4} parent=5 // pred_check
      _
    $region30: #{embedding_module3d_forward.4} parent=5 // pred_check_branch
      %205 = sbr.rel (%p202) target = $region32
    $region31: #{embedding_module3d_forward.4} parent=5 // pred_region
      %s206 = ssub.s32 %s11, 1
      %s207 = sadd.s32 %s22, %s23
      %s208 = smul.u32 2, %s207
      %p209 = scmp.lt.s32.totalorder %s21, 1
      %s210 = scalar_select %p209, %s21, 1
      %p211 = scmp.lt.s32.totalorder %s208, 1
      %s212 = scalar_select %p211, %s208, 1
      %s213 = smul.addr %s210, 4
      %s214 = sadd.s32 %s212, %s213
      %s215 = smul.addr %s214, 8
      %s216 = scalar_lea.vmem %s0, %s215
      %p217 = pneg %p60
      %p218 = pneg %p57
      %p219 = pneg %p81
      %p220 = pneg %p78
      %p221 = pneg %p102
      %p222 = pneg %p99
      %p223 = pneg %p132
      %p224 = pneg %p129
      %s225 = sadd.s32 %s22, %s23
      %s226 = smul.u32 2, %s225
      %p227 = scmp.lt.s32.totalorder %s21, 1
      %s228 = scalar_select %p227, %s21, 1
      %p229 = scmp.lt.s32.totalorder %s226, 1
      %s230 = scalar_select %p229, %s226, 1
      %s231 = smul.addr %s228, 4
      %s232 = sadd.s32 %s230, %s231
      %s233 = smul.addr %s232, 8
      %s234 = scalar_lea.vmem %s3, %s233
      %p235 = pneg %p160
      %p236 = pneg %p157
      %s237 = sadd.s32 %s21, %s22
      %p238 = scmp.lt.s32.totalorder %s237, 1
      %s239 = scalar_select %p238, %s237, 1
      %s240 = smul.addr %s239, 3
      %s241 = smul.addr %s240, 8
      %s242 = scalar_lea.vmem %s4, %s241
      %s243 = sadd.s32 %s22, %s23
      %s244 = smul.u32 2, %s243
      %p245 = scmp.lt.s32.totalorder %s21, 1
      %s246 = scalar_select %p245, %s21, 1
      %p247 = scmp.lt.s32.totalorder %s244, 1
      %s248 = scalar_select %p247, %s244, 1
      %s249 = smul.addr %s246, 4
      %s250 = sadd.s32 %s248, %s249
      %s251 = smul.addr %s250, 8
      %s252 = scalar_lea.vmem %s0, %s251
      %s253 = sadd.s32 %s22, %s23
      %s254 = smul.u32 2, %s253
      %s255 = sadd.s32 %s22, %s23
      %s256 = smul.u32 2, %s255
      %p257 = scmp.lt.s32.totalorder %s21, 1
      %s258 = scalar_select %p257, %s21, 1
      %p259 = scmp.lt.s32.totalorder %s256, 1
      %s260 = scalar_select %p259, %s256, 1
      %s261 = smul.addr %s258, 4
      %s262 = sadd.s32 %s260, %s261
      %s263 = smul.addr %s262, 8
      %s264 = scalar_lea.vmem %s3, %s263
      %s265 = sadd.s32 %s22, %s23
      %s266 = smul.u32 2, %s265
      %s267 = sadd.s32 %s21, %s22
      %p268 = scmp.lt.s32.totalorder %s267, 1
      %s269 = scalar_select %p268, %s267, 1
      %s270 = smul.addr %s269, 3
      %s271 = smul.addr %s270, 8
      %s272 = scalar_lea.vmem %s4, %s271
      %s273 = sadd.s32 %s21, %s22
      %v274 = vld [vmem:[%s252] sm:$0xff]
      %v275 = vld [vmem:[%s252 + $0x8] sm:$0xff]
      %v276 = vld [vmem:[%s252 + $0x10] sm:$0xff]
      %v277 = vld [vmem:[%s252 + $0x18] sm:$0xff]
      %v278 = vld [vmem:[%s1] sm:$0xff]
      %v279 = vld [vmem:[%s1 + $0x8] sm:$0xff]
      %v280 = vld [vmem:[%s1 + $0x10] sm:$0xff]
      %v281 = vld [vmem:[%s2] sm:$0xff]
      %v282 = vld [vmem:[%s2 + $0x8] sm:$0xff]
      %v283 = vld [vmem:[%s2 + $0x10] sm:$0xff]
      %v284 = vlaneseq
      %v285 = vshrl.u32 %v284, 7
      %v286 = vsub.s32 0, %v285
      %v287 = vrot.slane %v278, %v286
      %289 = vbcast.lane.b32.xlu0 %v287, 256
      %v290 = vpop.permute.xlu0 %289
      %s292 = sor.u32 256, 8
      %293 = vbcast.lane.b32.xlu0 %v287, %s292
      %v294 = vpop.permute.xlu0 %293
      %v295 = vlaneseq
      %v296 = vshrl.u32 %v295, 7
      %v297 = vsub.s32 1, %v296
      %v298 = vrot.slane %v278, %v297
      %300 = vbcast.lane.b32.xlu0 %v298, 256
      %v301 = vpop.permute.xlu0 %300
      %s303 = sor.u32 256, 8
      %304 = vbcast.lane.b32.xlu0 %v298, %s303
      %v305 = vpop.permute.xlu0 %304
      %v306 = vlaneseq
      %v307 = vshrl.u32 %v306, 7
      %v308 = vsub.s32 2, %v307
      %v309 = vrot.slane %v278, %v308
      %311 = vbcast.lane.b32.xlu0 %v309, 256
      %v312 = vpop.permute.xlu0 %311
      %s314 = sor.u32 256, 8
      %315 = vbcast.lane.b32.xlu0 %v309, %s314
      %v316 = vpop.permute.xlu0 %315
      %v317 = vlaneseq
      %v318 = vshrl.u32 %v317, 7
      %v319 = vsub.s32 3, %v318
      %v320 = vrot.slane %v278, %v319
      %322 = vbcast.lane.b32.xlu0 %v320, 256
      %v323 = vpop.permute.xlu0 %322
      %s325 = sor.u32 256, 8
      %326 = vbcast.lane.b32.xlu0 %v320, %s325
      %v327 = vpop.permute.xlu0 %326
      %v328 = vlaneseq
      %v329 = vshrl.u32 %v328, 7
      %v330 = vsub.s32 4, %v329
      %v331 = vrot.slane %v278, %v330
      %333 = vbcast.lane.b32.xlu0 %v331, 256
      %v334 = vpop.permute.xlu0 %333
      %s336 = sor.u32 256, 8
      %337 = vbcast.lane.b32.xlu0 %v331, %s336
      %v338 = vpop.permute.xlu0 %337
      %v339 = vlaneseq
      %v340 = vshrl.u32 %v339, 7
      %v341 = vsub.s32 5, %v340
      %v342 = vrot.slane %v278, %v341
      %344 = vbcast.lane.b32.xlu0 %v342, 256
      %v345 = vpop.permute.xlu0 %344
      %s347 = sor.u32 256, 8
      %348 = vbcast.lane.b32.xlu0 %v342, %s347
      %v349 = vpop.permute.xlu0 %348
      %v350 = vlaneseq
      %v351 = vshrl.u32 %v350, 7
      %v352 = vsub.s32 6, %v351
      %v353 = vrot.slane %v278, %v352
      %355 = vbcast.lane.b32.xlu0 %v353, 256
      %v356 = vpop.permute.xlu0 %355
      %s358 = sor.u32 256, 8
      %359 = vbcast.lane.b32.xlu0 %v353, %s358
      %v360 = vpop.permute.xlu0 %359
      %v361 = vlaneseq
      %v362 = vshrl.u32 %v361, 7
      %v363 = vsub.s32 7, %v362
      %v364 = vrot.slane %v278, %v363
      %366 = vbcast.lane.b32.xlu0 %v364, 256
      %v367 = vpop.permute.xlu0 %366
      %s369 = sor.u32 256, 8
      %370 = vbcast.lane.b32.xlu0 %v364, %s369
      %v371 = vpop.permute.xlu0 %370
      %v372 = vlaneseq
      %v373 = vshrl.u32 %v372, 7
      %v374 = vsub.s32 0, %v373
      %v375 = vrot.slane %v279, %v374
      %377 = vbcast.lane.b32.xlu0 %v375, 256
      %v378 = vpop.permute.xlu0 %377
      %s380 = sor.u32 256, 8
      %381 = vbcast.lane.b32.xlu0 %v375, %s380
      %v382 = vpop.permute.xlu0 %381
      %v383 = vlaneseq
      %v384 = vshrl.u32 %v383, 7
      %v385 = vsub.s32 1, %v384
      %v386 = vrot.slane %v279, %v385
      %388 = vbcast.lane.b32.xlu0 %v386, 256
      %v389 = vpop.permute.xlu0 %388
      %s391 = sor.u32 256, 8
      %392 = vbcast.lane.b32.xlu0 %v386, %s391
      %v393 = vpop.permute.xlu0 %392
      %v394 = vlaneseq
      %v395 = vshrl.u32 %v394, 7
      %v396 = vsub.s32 2, %v395
      %v397 = vrot.slane %v279, %v396
      %399 = vbcast.lane.b32.xlu0 %v397, 256
      %v400 = vpop.permute.xlu0 %399
      %s402 = sor.u32 256, 8
      %403 = vbcast.lane.b32.xlu0 %v397, %s402
      %v404 = vpop.permute.xlu0 %403
      %v405 = vlaneseq
      %v406 = vshrl.u32 %v405, 7
      %v407 = vsub.s32 3, %v406
      %v408 = vrot.slane %v279, %v407
      %410 = vbcast.lane.b32.xlu0 %v408, 256
      %v411 = vpop.permute.xlu0 %410
      %s413 = sor.u32 256, 8
      %414 = vbcast.lane.b32.xlu0 %v408, %s413
      %v415 = vpop.permute.xlu0 %414
      %v416 = vlaneseq
      %v417 = vshrl.u32 %v416, 7
      %v418 = vsub.s32 4, %v417
      %v419 = vrot.slane %v279, %v418
      %421 = vbcast.lane.b32.xlu0 %v419, 256
      %v422 = vpop.permute.xlu0 %421
      %s424 = sor.u32 256, 8
      %425 = vbcast.lane.b32.xlu0 %v419, %s424
      %v426 = vpop.permute.xlu0 %425
      %v427 = vlaneseq
      %v428 = vshrl.u32 %v427, 7
      %v429 = vsub.s32 5, %v428
      %v430 = vrot.slane %v279, %v429
      %432 = vbcast.lane.b32.xlu0 %v430, 256
      %v433 = vpop.permute.xlu0 %432
      %s435 = sor.u32 256, 8
      %436 = vbcast.lane.b32.xlu0 %v430, %s435
      %v437 = vpop.permute.xlu0 %436
      %v438 = vlaneseq
      %v439 = vshrl.u32 %v438, 7
      %v440 = vsub.s32 6, %v439
      %v441 = vrot.slane %v279, %v440
      %443 = vbcast.lane.b32.xlu0 %v441, 256
      %v444 = vpop.permute.xlu0 %443
      %s446 = sor.u32 256, 8
      %447 = vbcast.lane.b32.xlu0 %v441, %s446
      %v448 = vpop.permute.xlu0 %447
      %v449 = vlaneseq
      %v450 = vshrl.u32 %v449, 7
      %v451 = vsub.s32 7, %v450
      %v452 = vrot.slane %v279, %v451
      %454 = vbcast.lane.b32.xlu0 %v452, 256
      %v455 = vpop.permute.xlu0 %454
      %s457 = sor.u32 256, 8
      %458 = vbcast.lane.b32.xlu0 %v452, %s457
      %v459 = vpop.permute.xlu0 %458
      %v460 = vlaneseq
      %v461 = vshrl.u32 %v460, 7
      %v462 = vsub.s32 0, %v461
      %v463 = vrot.slane %v280, %v462
      %465 = vbcast.lane.b32.xlu0 %v463, 256
      %v466 = vpop.permute.xlu0 %465
      %s468 = sor.u32 256, 8
      %469 = vbcast.lane.b32.xlu0 %v463, %s468
      %v470 = vpop.permute.xlu0 %469
      %v471 = vlaneseq
      %v472 = vshrl.u32 %v471, 7
      %v473 = vsub.s32 1, %v472
      %v474 = vrot.slane %v280, %v473
      %476 = vbcast.lane.b32.xlu0 %v474, 256
      %v477 = vpop.permute.xlu0 %476
      %s479 = sor.u32 256, 8
      %480 = vbcast.lane.b32.xlu0 %v474, %s479
      %v481 = vpop.permute.xlu0 %480
      %v482 = vlaneseq
      %v483 = vshrl.u32 %v482, 7
      %v484 = vsub.s32 2, %v483
      %v485 = vrot.slane %v280, %v484
      %487 = vbcast.lane.b32.xlu0 %v485, 256
      %v488 = vpop.permute.xlu0 %487
      %s490 = sor.u32 256, 8
      %491 = vbcast.lane.b32.xlu0 %v485, %s490
      %v492 = vpop.permute.xlu0 %491
      %v493 = vlaneseq
      %v494 = vshrl.u32 %v493, 7
      %v495 = vsub.s32 3, %v494
      %v496 = vrot.slane %v280, %v495
      %498 = vbcast.lane.b32.xlu0 %v496, 256
      %v499 = vpop.permute.xlu0 %498
      %s501 = sor.u32 256, 8
      %502 = vbcast.lane.b32.xlu0 %v496, %s501
      %v503 = vpop.permute.xlu0 %502
      %v504 = vlaneseq
      %v505 = vshrl.u32 %v504, 7
      %v506 = vsub.s32 4, %v505
      %v507 = vrot.slane %v280, %v506
      %509 = vbcast.lane.b32.xlu0 %v507, 256
      %v510 = vpop.permute.xlu0 %509
      %s512 = sor.u32 256, 8
      %513 = vbcast.lane.b32.xlu0 %v507, %s512
      %v514 = vpop.permute.xlu0 %513
      %v515 = vlaneseq
      %v516 = vshrl.u32 %v515, 7
      %v517 = vsub.s32 5, %v516
      %v518 = vrot.slane %v280, %v517
      %520 = vbcast.lane.b32.xlu0 %v518, 256
      %v521 = vpop.permute.xlu0 %520
      %s523 = sor.u32 256, 8
      %524 = vbcast.lane.b32.xlu0 %v518, %s523
      %v525 = vpop.permute.xlu0 %524
      %v526 = vlaneseq
      %v527 = vshrl.u32 %v526, 7
      %v528 = vsub.s32 6, %v527
      %v529 = vrot.slane %v280, %v528
      %531 = vbcast.lane.b32.xlu0 %v529, 256
      %v532 = vpop.permute.xlu0 %531
      %s534 = sor.u32 256, 8
      %535 = vbcast.lane.b32.xlu0 %v529, %s534
      %v536 = vpop.permute.xlu0 %535
      %v537 = vlaneseq
      %v538 = vshrl.u32 %v537, 7
      %v539 = vsub.s32 7, %v538
      %v540 = vrot.slane %v280, %v539
      %542 = vbcast.lane.b32.xlu0 %v540, 256
      %v543 = vpop.permute.xlu0 %542
      %s545 = sor.u32 256, 8
      %546 = vbcast.lane.b32.xlu0 %v540, %s545
      %v547 = vpop.permute.xlu0 %546
      %v548 = vsub.f32 %v274, %v290
      %v549 = vsub.f32 %v275, %v290
      %v550 = vsub.f32 %v276, %v294
      %v551 = vsub.f32 %v277, %v294
      %v552 = vsub.f32 %v274, %v301
      %v553 = vsub.f32 %v275, %v301
      %v554 = vsub.f32 %v276, %v305
      %v555 = vsub.f32 %v277, %v305
      %v556 = vsub.f32 %v274, %v312
      %v557 = vsub.f32 %v275, %v312
      %v558 = vsub.f32 %v276, %v316
      %v559 = vsub.f32 %v277, %v316
      %v560 = vsub.f32 %v274, %v323
      %v561 = vsub.f32 %v275, %v323
      %v562 = vsub.f32 %v276, %v327
      %v563 = vsub.f32 %v277, %v327
      %v564 = vsub.f32 %v274, %v334
      %v565 = vsub.f32 %v275, %v334
      %v566 = vsub.f32 %v276, %v338
      %v567 = vsub.f32 %v277, %v338
      %v568 = vsub.f32 %v274, %v345
      %v569 = vsub.f32 %v275, %v345
      %v570 = vsub.f32 %v276, %v349
      %v571 = vsub.f32 %v277, %v349
      %v572 = vsub.f32 %v274, %v356
      %v573 = vsub.f32 %v275, %v356
      %v574 = vsub.f32 %v276, %v360
      %v575 = vsub.f32 %v277, %v360
      %v576 = vsub.f32 %v274, %v367
      %v577 = vsub.f32 %v275, %v367
      %v578 = vsub.f32 %v276, %v371
      %v579 = vsub.f32 %v277, %v371
      %v580 = vsub.f32 %v274, %v378
      %v581 = vsub.f32 %v275, %v378
      %v582 = vsub.f32 %v276, %v382
      %v583 = vsub.f32 %v277, %v382
      %v584 = vsub.f32 %v274, %v389
      %v585 = vsub.f32 %v275, %v389
      %v586 = vsub.f32 %v276, %v393
      %v587 = vsub.f32 %v277, %v393
      %v588 = vsub.f32 %v274, %v400
      %v589 = vsub.f32 %v275, %v400
      %v590 = vsub.f32 %v276, %v404
      %v591 = vsub.f32 %v277, %v404
      %v592 = vsub.f32 %v274, %v411
      %v593 = vsub.f32 %v275, %v411
      %v594 = vsub.f32 %v276, %v415
      %v595 = vsub.f32 %v277, %v415
      %v596 = vsub.f32 %v274, %v422
      %v597 = vsub.f32 %v275, %v422
      %v598 = vsub.f32 %v276, %v426
      %v599 = vsub.f32 %v277, %v426
      %v600 = vsub.f32 %v274, %v433
      %v601 = vsub.f32 %v275, %v433
      %v602 = vsub.f32 %v276, %v437
      %v603 = vsub.f32 %v277, %v437
      %v604 = vsub.f32 %v274, %v444
      %v605 = vsub.f32 %v275, %v444
      %v606 = vsub.f32 %v276, %v448
      %v607 = vsub.f32 %v277, %v448
      %v608 = vsub.f32 %v274, %v455
      %v609 = vsub.f32 %v275, %v455
      %v610 = vsub.f32 %v276, %v459
      %v611 = vsub.f32 %v277, %v459
      %v612 = vsub.f32 %v274, %v466
      %v613 = vsub.f32 %v275, %v466
      %v614 = vsub.f32 %v276, %v470
      %v615 = vsub.f32 %v277, %v470
      %v616 = vsub.f32 %v274, %v477
      %v617 = vsub.f32 %v275, %v477
      %v618 = vsub.f32 %v276, %v481
      %v619 = vsub.f32 %v277, %v481
      %v620 = vsub.f32 %v274, %v488
      %v621 = vsub.f32 %v275, %v488
      %v622 = vsub.f32 %v276, %v492
      %v623 = vsub.f32 %v277, %v492
      %v624 = vsub.f32 %v274, %v499
      %v625 = vsub.f32 %v275, %v499
      %v626 = vsub.f32 %v276, %v503
      %v627 = vsub.f32 %v277, %v503
      %v628 = vsub.f32 %v274, %v510
      %v629 = vsub.f32 %v275, %v510
      %v630 = vsub.f32 %v276, %v514
      %v631 = vsub.f32 %v277, %v514
      %v632 = vsub.f32 %v274, %v521
      %v633 = vsub.f32 %v275, %v521
      %v634 = vsub.f32 %v276, %v525
      %v635 = vsub.f32 %v277, %v525
      %v636 = vsub.f32 %v274, %v532
      %v637 = vsub.f32 %v275, %v532
      %v638 = vsub.f32 %v276, %v536
      %v639 = vsub.f32 %v277, %v536
      %v640 = vsub.f32 %v274, %v543
      %v641 = vsub.f32 %v275, %v543
      %v642 = vsub.f32 %v276, %v547
      %v643 = vsub.f32 %v277, %v547
      %v644 = vlaneseq
      %v645 = vshrl.u32 %v644, 7
      %v646 = vsub.s32 0, %v645
      %v647 = vrot.slane %v281, %v646
      %649 = vbcast.lane.b32.xlu0 %v647, 256
      %v650 = vpop.permute.xlu0 %649
      %s652 = sor.u32 256, 8
      %653 = vbcast.lane.b32.xlu0 %v647, %s652
      %v654 = vpop.permute.xlu0 %653
      %v655 = vlaneseq
      %v656 = vshrl.u32 %v655, 7
      %v657 = vsub.s32 1, %v656
      %v658 = vrot.slane %v281, %v657
      %660 = vbcast.lane.b32.xlu0 %v658, 256
      %v661 = vpop.permute.xlu0 %660
      %s663 = sor.u32 256, 8
      %664 = vbcast.lane.b32.xlu0 %v658, %s663
      %v665 = vpop.permute.xlu0 %664
      %v666 = vlaneseq
      %v667 = vshrl.u32 %v666, 7
      %v668 = vsub.s32 2, %v667
      %v669 = vrot.slane %v281, %v668
      %671 = vbcast.lane.b32.xlu0 %v669, 256
      %v672 = vpop.permute.xlu0 %671
      %s674 = sor.u32 256, 8
      %675 = vbcast.lane.b32.xlu0 %v669, %s674
      %v676 = vpop.permute.xlu0 %675
      %v677 = vlaneseq
      %v678 = vshrl.u32 %v677, 7
      %v679 = vsub.s32 3, %v678
      %v680 = vrot.slane %v281, %v679
      %682 = vbcast.lane.b32.xlu0 %v680, 256
      %v683 = vpop.permute.xlu0 %682
      %s685 = sor.u32 256, 8
      %686 = vbcast.lane.b32.xlu0 %v680, %s685
      %v687 = vpop.permute.xlu0 %686
      %v688 = vlaneseq
      %v689 = vshrl.u32 %v688, 7
      %v690 = vsub.s32 4, %v689
      %v691 = vrot.slane %v281, %v690
      %693 = vbcast.lane.b32.xlu0 %v691, 256
      %v694 = vpop.permute.xlu0 %693
      %s696 = sor.u32 256, 8
      %697 = vbcast.lane.b32.xlu0 %v691, %s696
      %v698 = vpop.permute.xlu0 %697
      %v699 = vlaneseq
      %v700 = vshrl.u32 %v699, 7
      %v701 = vsub.s32 5, %v700
      %v702 = vrot.slane %v281, %v701
      %704 = vbcast.lane.b32.xlu0 %v702, 256
      %v705 = vpop.permute.xlu0 %704
      %s707 = sor.u32 256, 8
      %708 = vbcast.lane.b32.xlu0 %v702, %s707
      %v709 = vpop.permute.xlu0 %708
      %v710 = vlaneseq
      %v711 = vshrl.u32 %v710, 7
      %v712 = vsub.s32 6, %v711
      %v713 = vrot.slane %v281, %v712
      %715 = vbcast.lane.b32.xlu0 %v713, 256
      %v716 = vpop.permute.xlu0 %715
      %s718 = sor.u32 256, 8
      %719 = vbcast.lane.b32.xlu0 %v713, %s718
      %v720 = vpop.permute.xlu0 %719
      %v721 = vlaneseq
      %v722 = vshrl.u32 %v721, 7
      %v723 = vsub.s32 7, %v722
      %v724 = vrot.slane %v281, %v723
      %726 = vbcast.lane.b32.xlu0 %v724, 256
      %v727 = vpop.permute.xlu0 %726
      %s729 = sor.u32 256, 8
      %730 = vbcast.lane.b32.xlu0 %v724, %s729
      %v731 = vpop.permute.xlu0 %730
      %v732 = vlaneseq
      %v733 = vshrl.u32 %v732, 7
      %v734 = vsub.s32 0, %v733
      %v735 = vrot.slane %v282, %v734
      %737 = vbcast.lane.b32.xlu0 %v735, 256
      %v738 = vpop.permute.xlu0 %737
      %s740 = sor.u32 256, 8
      %741 = vbcast.lane.b32.xlu0 %v735, %s740
      %v742 = vpop.permute.xlu0 %741
      %v743 = vlaneseq
      %v744 = vshrl.u32 %v743, 7
      %v745 = vsub.s32 1, %v744
      %v746 = vrot.slane %v282, %v745
      %748 = vbcast.lane.b32.xlu0 %v746, 256
      %v749 = vpop.permute.xlu0 %748
      %s751 = sor.u32 256, 8
      %752 = vbcast.lane.b32.xlu0 %v746, %s751
      %v753 = vpop.permute.xlu0 %752
      %v754 = vlaneseq
      %v755 = vshrl.u32 %v754, 7
      %v756 = vsub.s32 2, %v755
      %v757 = vrot.slane %v282, %v756
      %759 = vbcast.lane.b32.xlu0 %v757, 256
      %v760 = vpop.permute.xlu0 %759
      %s762 = sor.u32 256, 8
      %763 = vbcast.lane.b32.xlu0 %v757, %s762
      %v764 = vpop.permute.xlu0 %763
      %v765 = vlaneseq
      %v766 = vshrl.u32 %v765, 7
      %v767 = vsub.s32 3, %v766
      %v768 = vrot.slane %v282, %v767
      %770 = vbcast.lane.b32.xlu0 %v768, 256
      %v771 = vpop.permute.xlu0 %770
      %s773 = sor.u32 256, 8
      %774 = vbcast.lane.b32.xlu0 %v768, %s773
      %v775 = vpop.permute.xlu0 %774
      %v776 = vlaneseq
      %v777 = vshrl.u32 %v776, 7
      %v778 = vsub.s32 4, %v777
      %v779 = vrot.slane %v282, %v778
      %781 = vbcast.lane.b32.xlu0 %v779, 256
      %v782 = vpop.permute.xlu0 %781
      %s784 = sor.u32 256, 8
      %785 = vbcast.lane.b32.xlu0 %v779, %s784
      %v786 = vpop.permute.xlu0 %785
      %v787 = vlaneseq
      %v788 = vshrl.u32 %v787, 7
      %v789 = vsub.s32 5, %v788
      %v790 = vrot.slane %v282, %v789
      %792 = vbcast.lane.b32.xlu0 %v790, 256
      %v793 = vpop.permute.xlu0 %792
      %s795 = sor.u32 256, 8
      %796 = vbcast.lane.b32.xlu0 %v790, %s795
      %v797 = vpop.permute.xlu0 %796
      %v798 = vlaneseq
      %v799 = vshrl.u32 %v798, 7
      %v800 = vsub.s32 6, %v799
      %v801 = vrot.slane %v282, %v800
      %803 = vbcast.lane.b32.xlu0 %v801, 256
      %v804 = vpop.permute.xlu0 %803
      %s806 = sor.u32 256, 8
      %807 = vbcast.lane.b32.xlu0 %v801, %s806
      %v808 = vpop.permute.xlu0 %807
      %v809 = vlaneseq
      %v810 = vshrl.u32 %v809, 7
      %v811 = vsub.s32 7, %v810
      %v812 = vrot.slane %v282, %v811
      %814 = vbcast.lane.b32.xlu0 %v812, 256
      %v815 = vpop.permute.xlu0 %814
      %s817 = sor.u32 256, 8
      %818 = vbcast.lane.b32.xlu0 %v812, %s817
      %v819 = vpop.permute.xlu0 %818
      %v820 = vlaneseq
      %v821 = vshrl.u32 %v820, 7
      %v822 = vsub.s32 0, %v821
      %v823 = vrot.slane %v283, %v822
      %825 = vbcast.lane.b32.xlu0 %v823, 256
      %v826 = vpop.permute.xlu0 %825
      %s828 = sor.u32 256, 8
      %829 = vbcast.lane.b32.xlu0 %v823, %s828
      %v830 = vpop.permute.xlu0 %829
      %v831 = vlaneseq
      %v832 = vshrl.u32 %v831, 7
      %v833 = vsub.s32 1, %v832
      %v834 = vrot.slane %v283, %v833
      %836 = vbcast.lane.b32.xlu0 %v834, 256
      %v837 = vpop.permute.xlu0 %836
      %s839 = sor.u32 256, 8
      %840 = vbcast.lane.b32.xlu0 %v834, %s839
      %v841 = vpop.permute.xlu0 %840
      %v842 = vlaneseq
      %v843 = vshrl.u32 %v842, 7
      %v844 = vsub.s32 2, %v843
      %v845 = vrot.slane %v283, %v844
      %847 = vbcast.lane.b32.xlu0 %v845, 256
      %v848 = vpop.permute.xlu0 %847
      %s850 = sor.u32 256, 8
      %851 = vbcast.lane.b32.xlu0 %v845, %s850
      %v852 = vpop.permute.xlu0 %851
      %v853 = vlaneseq
      %v854 = vshrl.u32 %v853, 7
      %v855 = vsub.s32 3, %v854
      %v856 = vrot.slane %v283, %v855
      %858 = vbcast.lane.b32.xlu0 %v856, 256
      %v859 = vpop.permute.xlu0 %858
      %s861 = sor.u32 256, 8
      %862 = vbcast.lane.b32.xlu0 %v856, %s861
      %v863 = vpop.permute.xlu0 %862
      %v864 = vlaneseq
      %v865 = vshrl.u32 %v864, 7
      %v866 = vsub.s32 4, %v865
      %v867 = vrot.slane %v283, %v866
      %869 = vbcast.lane.b32.xlu0 %v867, 256
      %v870 = vpop.permute.xlu0 %869
      %s872 = sor.u32 256, 8
      %873 = vbcast.lane.b32.xlu0 %v867, %s872
      %v874 = vpop.permute.xlu0 %873
      %v875 = vlaneseq
      %v876 = vshrl.u32 %v875, 7
      %v877 = vsub.s32 5, %v876
      %v878 = vrot.slane %v283, %v877
      %880 = vbcast.lane.b32.xlu0 %v878, 256
      %v881 = vpop.permute.xlu0 %880
      %s883 = sor.u32 256, 8
      %884 = vbcast.lane.b32.xlu0 %v878, %s883
      %v885 = vpop.permute.xlu0 %884
      %v886 = vlaneseq
      %v887 = vshrl.u32 %v886, 7
      %v888 = vsub.s32 6, %v887
      %v889 = vrot.slane %v283, %v888
      %891 = vbcast.lane.b32.xlu0 %v889, 256
      %v892 = vpop.permute.xlu0 %891
      %s894 = sor.u32 256, 8
      %895 = vbcast.lane.b32.xlu0 %v889, %s894
      %v896 = vpop.permute.xlu0 %895
      %v897 = vlaneseq
      %v898 = vshrl.u32 %v897, 7
      %v899 = vsub.s32 7, %v898
      %v900 = vrot.slane %v283, %v899
      %902 = vbcast.lane.b32.xlu0 %v900, 256
      %v903 = vpop.permute.xlu0 %902
      %s905 = sor.u32 256, 8
      %906 = vbcast.lane.b32.xlu0 %v900, %s905
      %v907 = vpop.permute.xlu0 %906
      %v908 = vmul.f32 %v548, %v548
      %v909 = vmul.f32 %v549, %v549
      %v910 = vmul.f32 %v550, %v550
      %v911 = vmul.f32 %v551, %v551
      %v912 = vmul.f32 %v552, %v552
      %v913 = vmul.f32 %v553, %v553
      %v914 = vmul.f32 %v554, %v554
      %v915 = vmul.f32 %v555, %v555
      %v916 = vmul.f32 %v556, %v556
      %v917 = vmul.f32 %v557, %v557
      %v918 = vmul.f32 %v558, %v558
      %v919 = vmul.f32 %v559, %v559
      %v920 = vmul.f32 %v560, %v560
      %v921 = vmul.f32 %v561, %v561
      %v922 = vmul.f32 %v562, %v562
      %v923 = vmul.f32 %v563, %v563
      %v924 = vmul.f32 %v564, %v564
      %v925 = vmul.f32 %v565, %v565
      %v926 = vmul.f32 %v566, %v566
      %v927 = vmul.f32 %v567, %v567
      %v928 = vmul.f32 %v568, %v568
      %v929 = vmul.f32 %v569, %v569
      %v930 = vmul.f32 %v570, %v570
      %v931 = vmul.f32 %v571, %v571
      %v932 = vmul.f32 %v572, %v572
      %v933 = vmul.f32 %v573, %v573
      %v934 = vmul.f32 %v574, %v574
      %v935 = vmul.f32 %v575, %v575
      %v936 = vmul.f32 %v576, %v576
      %v937 = vmul.f32 %v577, %v577
      %v938 = vmul.f32 %v578, %v578
      %v939 = vmul.f32 %v579, %v579
      %v940 = vmul.f32 %v580, %v580
      %v941 = vmul.f32 %v581, %v581
      %v942 = vmul.f32 %v582, %v582
      %v943 = vmul.f32 %v583, %v583
      %v944 = vmul.f32 %v584, %v584
      %v945 = vmul.f32 %v585, %v585
      %v946 = vmul.f32 %v586, %v586
      %v947 = vmul.f32 %v587, %v587
      %v948 = vmul.f32 %v588, %v588
      %v949 = vmul.f32 %v589, %v589
      %v950 = vmul.f32 %v590, %v590
      %v951 = vmul.f32 %v591, %v591
      %v952 = vmul.f32 %v592, %v592
      %v953 = vmul.f32 %v593, %v593
      %v954 = vmul.f32 %v594, %v594
      %v955 = vmul.f32 %v595, %v595
      %v956 = vmul.f32 %v596, %v596
      %v957 = vmul.f32 %v597, %v597
      %v958 = vmul.f32 %v598, %v598
      %v959 = vmul.f32 %v599, %v599
      %v960 = vmul.f32 %v600, %v600
      %v961 = vmul.f32 %v601, %v601
      %v962 = vmul.f32 %v602, %v602
      %v963 = vmul.f32 %v603, %v603
      %v964 = vmul.f32 %v604, %v604
      %v965 = vmul.f32 %v605, %v605
      %v966 = vmul.f32 %v606, %v606
      %v967 = vmul.f32 %v607, %v607
      %v968 = vmul.f32 %v608, %v608
      %v969 = vmul.f32 %v609, %v609
      %v970 = vmul.f32 %v610, %v610
      %v971 = vmul.f32 %v611, %v611
      %v972 = vmul.f32 %v612, %v612
      %v973 = vmul.f32 %v613, %v613
      %v974 = vmul.f32 %v614, %v614
      %v975 = vmul.f32 %v615, %v615
      %v976 = vmul.f32 %v616, %v616
      %v977 = vmul.f32 %v617, %v617
      %v978 = vmul.f32 %v618, %v618
      %v979 = vmul.f32 %v619, %v619
      %v980 = vmul.f32 %v620, %v620
      %v981 = vmul.f32 %v621, %v621
      %v982 = vmul.f32 %v622, %v622
      %v983 = vmul.f32 %v623, %v623
      %v984 = vmul.f32 %v624, %v624
      %v985 = vmul.f32 %v625, %v625
      %v986 = vmul.f32 %v626, %v626
      %v987 = vmul.f32 %v627, %v627
      %v988 = vmul.f32 %v628, %v628
      %v989 = vmul.f32 %v629, %v629
      %v990 = vmul.f32 %v630, %v630
      %v991 = vmul.f32 %v631, %v631
      %v992 = vmul.f32 %v632, %v632
      %v993 = vmul.f32 %v633, %v633
      %v994 = vmul.f32 %v634, %v634
      %v995 = vmul.f32 %v635, %v635
      %v996 = vmul.f32 %v636, %v636
      %v997 = vmul.f32 %v637, %v637
      %v998 = vmul.f32 %v638, %v638
      %v999 = vmul.f32 %v639, %v639
      %v1000 = vmul.f32 %v640, %v640
      %v1001 = vmul.f32 %v641, %v641
      %v1002 = vmul.f32 %v642, %v642
      %v1003 = vmul.f32 %v643, %v643
      %v1004 = vmul.f32 %v650, %v908
      %v1005 = vmul.f32 %v650, %v909
      %v1006 = vmul.f32 %v654, %v910
      %v1007 = vmul.f32 %v654, %v911
      %v1008 = vmul.f32 %v661, %v912
      %v1009 = vmul.f32 %v661, %v913
      %v1010 = vmul.f32 %v665, %v914
      %v1011 = vmul.f32 %v665, %v915
      %v1012 = vmul.f32 %v672, %v916
      %v1013 = vmul.f32 %v672, %v917
      %v1014 = vmul.f32 %v676, %v918
      %v1015 = vmul.f32 %v676, %v919
      %v1016 = vmul.f32 %v683, %v920
      %v1017 = vmul.f32 %v683, %v921
      %v1018 = vmul.f32 %v687, %v922
      %v1019 = vmul.f32 %v687, %v923
      %v1020 = vmul.f32 %v694, %v924
      %v1021 = vmul.f32 %v694, %v925
      %v1022 = vmul.f32 %v698, %v926
      %v1023 = vmul.f32 %v698, %v927
      %v1024 = vmul.f32 %v705, %v928
      %v1025 = vmul.f32 %v705, %v929
      %v1026 = vmul.f32 %v709, %v930
      %v1027 = vmul.f32 %v709, %v931
      %v1028 = vmul.f32 %v716, %v932
      %v1029 = vmul.f32 %v716, %v933
      %v1030 = vmul.f32 %v720, %v934
      %v1031 = vmul.f32 %v720, %v935
      %v1032 = vmul.f32 %v727, %v936
      %v1033 = vmul.f32 %v727, %v937
      %v1034 = vmul.f32 %v731, %v938
      %v1035 = vmul.f32 %v731, %v939
      %v1036 = vmul.f32 %v738, %v940
      %v1037 = vmul.f32 %v738, %v941
      %v1038 = vmul.f32 %v742, %v942
      %v1039 = vmul.f32 %v742, %v943
      %v1040 = vmul.f32 %v749, %v944
      %v1041 = vmul.f32 %v749, %v945
      %v1042 = vmul.f32 %v753, %v946
      %v1043 = vmul.f32 %v753, %v947
      %v1044 = vmul.f32 %v760, %v948
      %v1045 = vmul.f32 %v760, %v949
      %v1046 = vmul.f32 %v764, %v950
      %v1047 = vmul.f32 %v764, %v951
      %v1048 = vmul.f32 %v771, %v952
      %v1049 = vmul.f32 %v771, %v953
      %v1050 = vmul.f32 %v775, %v954
      %v1051 = vmul.f32 %v775, %v955
      %v1052 = vmul.f32 %v782, %v956
      %v1053 = vmul.f32 %v782, %v957
      %v1054 = vmul.f32 %v786, %v958
      %v1055 = vmul.f32 %v786, %v959
      %v1056 = vmul.f32 %v793, %v960
      %v1057 = vmul.f32 %v793, %v961
      %v1058 = vmul.f32 %v797, %v962
      %v1059 = vmul.f32 %v797, %v963
      %v1060 = vmul.f32 %v804, %v964
      %v1061 = vmul.f32 %v804, %v965
      %v1062 = vmul.f32 %v808, %v966
      %v1063 = vmul.f32 %v808, %v967
      %v1064 = vmul.f32 %v815, %v968
      %v1065 = vmul.f32 %v815, %v969
      %v1066 = vmul.f32 %v819, %v970
      %v1067 = vmul.f32 %v819, %v971
      %v1068 = vmul.f32 %v826, %v972
      %v1069 = vmul.f32 %v826, %v973
      %v1070 = vmul.f32 %v830, %v974
      %v1071 = vmul.f32 %v830, %v975
      %v1072 = vmul.f32 %v837, %v976
      %v1073 = vmul.f32 %v837, %v977
      %v1074 = vmul.f32 %v841, %v978
      %v1075 = vmul.f32 %v841, %v979
      %v1076 = vmul.f32 %v848, %v980
      %v1077 = vmul.f32 %v848, %v981
      %v1078 = vmul.f32 %v852, %v982
      %v1079 = vmul.f32 %v852, %v983
      %v1080 = vmul.f32 %v859, %v984
      %v1081 = vmul.f32 %v859, %v985
      %v1082 = vmul.f32 %v863, %v986
      %v1083 = vmul.f32 %v863, %v987
      %v1084 = vmul.f32 %v870, %v988
      %v1085 = vmul.f32 %v870, %v989
      %v1086 = vmul.f32 %v874, %v990
      %v1087 = vmul.f32 %v874, %v991
      %v1088 = vmul.f32 %v881, %v992
      %v1089 = vmul.f32 %v881, %v993
      %v1090 = vmul.f32 %v885, %v994
      %v1091 = vmul.f32 %v885, %v995
      %v1092 = vmul.f32 %v892, %v996
      %v1093 = vmul.f32 %v892, %v997
      %v1094 = vmul.f32 %v896, %v998
      %v1095 = vmul.f32 %v896, %v999
      %v1096 = vmul.f32 %v903, %v1000
      %v1097 = vmul.f32 %v903, %v1001
      %v1098 = vmul.f32 %v907, %v1002
      %v1099 = vmul.f32 %v907, %v1003
      %v1100 = vmax.f32 %v1004, %v1008
      %v1101 = vmax.f32 %v1100, %v1012
      %v1102 = vmax.f32 %v1101, %v1016
      %v1103 = vmax.f32 %v1102, %v1020
      %v1104 = vmax.f32 %v1103, %v1024
      %v1105 = vmax.f32 %v1104, %v1028
      %v1106 = vmax.f32 %v1105, %v1032
      %v1107 = vmax.f32 %v1106, %v1036
      %v1108 = vmax.f32 %v1107, %v1040
      %v1109 = vmax.f32 %v1108, %v1044
      %v1110 = vmax.f32 %v1109, %v1048
      %v1111 = vmax.f32 %v1110, %v1052
      %v1112 = vmax.f32 %v1111, %v1056
      %v1113 = vmax.f32 %v1112, %v1060
      %v1114 = vmax.f32 %v1113, %v1064
      %v1115 = vmax.f32 %v1114, %v1068
      %v1116 = vmax.f32 %v1115, %v1072
      %v1117 = vmax.f32 %v1116, %v1076
      %v1118 = vmax.f32 %v1117, %v1080
      %v1119 = vmax.f32 %v1118, %v1084
      %v1120 = vmax.f32 %v1119, %v1088
      %v1121 = vmax.f32 %v1120, %v1092
      %v1122 = vmax.f32 %v1121, %v1096
      %v1123 = vmax.f32 %v1005, %v1009
      %v1124 = vmax.f32 %v1123, %v1013
      %v1125 = vmax.f32 %v1124, %v1017
      %v1126 = vmax.f32 %v1125, %v1021
      %v1127 = vmax.f32 %v1126, %v1025
      %v1128 = vmax.f32 %v1127, %v1029
      %v1129 = vmax.f32 %v1128, %v1033
      %v1130 = vmax.f32 %v1129, %v1037
      %v1131 = vmax.f32 %v1130, %v1041
      %v1132 = vmax.f32 %v1131, %v1045
      %v1133 = vmax.f32 %v1132, %v1049
      %v1134 = vmax.f32 %v1133, %v1053
      %v1135 = vmax.f32 %v1134, %v1057
      %v1136 = vmax.f32 %v1135, %v1061
      %v1137 = vmax.f32 %v1136, %v1065
      %v1138 = vmax.f32 %v1137, %v1069
      %v1139 = vmax.f32 %v1138, %v1073
      %v1140 = vmax.f32 %v1139, %v1077
      %v1141 = vmax.f32 %v1140, %v1081
      %v1142 = vmax.f32 %v1141, %v1085
      %v1143 = vmax.f32 %v1142, %v1089
      %v1144 = vmax.f32 %v1143, %v1093
      %v1145 = vmax.f32 %v1144, %v1097
      %v1146 = vmax.f32 %v1006, %v1010
      %v1147 = vmax.f32 %v1146, %v1014
      %v1148 = vmax.f32 %v1147, %v1018
      %v1149 = vmax.f32 %v1148, %v1022
      %v1150 = vmax.f32 %v1149, %v1026
      %v1151 = vmax.f32 %v1150, %v1030
      %v1152 = vmax.f32 %v1151, %v1034
      %v1153 = vmax.f32 %v1152, %v1038
      %v1154 = vmax.f32 %v1153, %v1042
      %v1155 = vmax.f32 %v1154, %v1046
      %v1156 = vmax.f32 %v1155, %v1050
      %v1157 = vmax.f32 %v1156, %v1054
      %v1158 = vmax.f32 %v1157, %v1058
      %v1159 = vmax.f32 %v1158, %v1062
      %v1160 = vmax.f32 %v1159, %v1066
      %v1161 = vmax.f32 %v1160, %v1070
      %v1162 = vmax.f32 %v1161, %v1074
      %v1163 = vmax.f32 %v1162, %v1078
      %v1164 = vmax.f32 %v1163, %v1082
      %v1165 = vmax.f32 %v1164, %v1086
      %v1166 = vmax.f32 %v1165, %v1090
      %v1167 = vmax.f32 %v1166, %v1094
      %v1168 = vmax.f32 %v1167, %v1098
      %v1169 = vmax.f32 %v1007, %v1011
      %v1170 = vmax.f32 %v1169, %v1015
      %v1171 = vmax.f32 %v1170, %v1019
      %v1172 = vmax.f32 %v1171, %v1023
      %v1173 = vmax.f32 %v1172, %v1027
      %v1174 = vmax.f32 %v1173, %v1031
      %v1175 = vmax.f32 %v1174, %v1035
      %v1176 = vmax.f32 %v1175, %v1039
      %v1177 = vmax.f32 %v1176, %v1043
      %v1178 = vmax.f32 %v1177, %v1047
      %v1179 = vmax.f32 %v1178, %v1051
      %v1180 = vmax.f32 %v1179, %v1055
      %v1181 = vmax.f32 %v1180, %v1059
      %v1182 = vmax.f32 %v1181, %v1063
      %v1183 = vmax.f32 %v1182, %v1067
      %v1184 = vmax.f32 %v1183, %v1071
      %v1185 = vmax.f32 %v1184, %v1075
      %v1186 = vmax.f32 %v1185, %v1079
      %v1187 = vmax.f32 %v1186, %v1083
      %v1188 = vmax.f32 %v1187, %v1087
      %v1189 = vmax.f32 %v1188, %v1091
      %v1190 = vmax.f32 %v1189, %v1095
      %v1191 = vmax.f32 %v1190, %v1099
      %v1192 = vsub.f32 %v1004, %v1122
      %v1193 = vsub.f32 %v1005, %v1145
      %v1194 = vsub.f32 %v1006, %v1168
      %v1195 = vsub.f32 %v1007, %v1191
      %v1196 = vsub.f32 %v1008, %v1122
      %v1197 = vsub.f32 %v1009, %v1145
      %v1198 = vsub.f32 %v1010, %v1168
      %v1199 = vsub.f32 %v1011, %v1191
      %v1200 = vsub.f32 %v1012, %v1122
      %v1201 = vsub.f32 %v1013, %v1145
      %v1202 = vsub.f32 %v1014, %v1168
      %v1203 = vsub.f32 %v1015, %v1191
      %v1204 = vsub.f32 %v1016, %v1122
      %v1205 = vsub.f32 %v1017, %v1145
      %v1206 = vsub.f32 %v1018, %v1168
      %v1207 = vsub.f32 %v1019, %v1191
      %v1208 = vsub.f32 %v1020, %v1122
      %v1209 = vsub.f32 %v1021, %v1145
      %v1210 = vsub.f32 %v1022, %v1168
      %v1211 = vsub.f32 %v1023, %v1191
      %v1212 = vsub.f32 %v1024, %v1122
      %v1213 = vsub.f32 %v1025, %v1145
      %v1214 = vsub.f32 %v1026, %v1168
      %v1215 = vsub.f32 %v1027, %v1191
      %v1216 = vsub.f32 %v1028, %v1122
      %v1217 = vsub.f32 %v1029, %v1145
      %v1218 = vsub.f32 %v1030, %v1168
      %v1219 = vsub.f32 %v1031, %v1191
      %v1220 = vsub.f32 %v1032, %v1122
      %v1221 = vsub.f32 %v1033, %v1145
      %v1222 = vsub.f32 %v1034, %v1168
      %v1223 = vsub.f32 %v1035, %v1191
      %v1224 = vsub.f32 %v1036, %v1122
      %v1225 = vsub.f32 %v1037, %v1145
      %v1226 = vsub.f32 %v1038, %v1168
      %v1227 = vsub.f32 %v1039, %v1191
      %v1228 = vsub.f32 %v1040, %v1122
      %v1229 = vsub.f32 %v1041, %v1145
      %v1230 = vsub.f32 %v1042, %v1168
      %v1231 = vsub.f32 %v1043, %v1191
      %v1232 = vsub.f32 %v1044, %v1122
      %v1233 = vsub.f32 %v1045, %v1145
      %v1234 = vsub.f32 %v1046, %v1168
      %v1235 = vsub.f32 %v1047, %v1191
      %v1236 = vsub.f32 %v1048, %v1122
      %v1237 = vsub.f32 %v1049, %v1145
      %v1238 = vsub.f32 %v1050, %v1168
      %v1239 = vsub.f32 %v1051, %v1191
      %v1240 = vsub.f32 %v1052, %v1122
      %v1241 = vsub.f32 %v1053, %v1145
      %v1242 = vsub.f32 %v1054, %v1168
      %v1243 = vsub.f32 %v1055, %v1191
      %v1244 = vsub.f32 %v1056, %v1122
      %v1245 = vsub.f32 %v1057, %v1145
      %v1246 = vsub.f32 %v1058, %v1168
      %v1247 = vsub.f32 %v1059, %v1191
      %v1248 = vsub.f32 %v1060, %v1122
      %v1249 = vsub.f32 %v1061, %v1145
      %v1250 = vsub.f32 %v1062, %v1168
      %v1251 = vsub.f32 %v1063, %v1191
      %v1252 = vsub.f32 %v1064, %v1122
      %v1253 = vsub.f32 %v1065, %v1145
      %v1254 = vsub.f32 %v1066, %v1168
      %v1255 = vsub.f32 %v1067, %v1191
      %v1256 = vsub.f32 %v1068, %v1122
      %v1257 = vsub.f32 %v1069, %v1145
      %v1258 = vsub.f32 %v1070, %v1168
      %v1259 = vsub.f32 %v1071, %v1191
      %v1260 = vsub.f32 %v1072, %v1122
      %v1261 = vsub.f32 %v1073, %v1145
      %v1262 = vsub.f32 %v1074, %v1168
      %v1263 = vsub.f32 %v1075, %v1191
      %v1264 = vsub.f32 %v1076, %v1122
      %v1265 = vsub.f32 %v1077, %v1145
      %v1266 = vsub.f32 %v1078, %v1168
      %v1267 = vsub.f32 %v1079, %v1191
      %v1268 = vsub.f32 %v1080, %v1122
      %v1269 = vsub.f32 %v1081, %v1145
      %v1270 = vsub.f32 %v1082, %v1168
      %v1271 = vsub.f32 %v1083, %v1191
      %v1272 = vsub.f32 %v1084, %v1122
      %v1273 = vsub.f32 %v1085, %v1145
      %v1274 = vsub.f32 %v1086, %v1168
      %v1275 = vsub.f32 %v1087, %v1191
      %v1276 = vsub.f32 %v1088, %v1122
      %v1277 = vsub.f32 %v1089, %v1145
      %v1278 = vsub.f32 %v1090, %v1168
      %v1279 = vsub.f32 %v1091, %v1191
      %v1280 = vsub.f32 %v1092, %v1122
      %v1281 = vsub.f32 %v1093, %v1145
      %v1282 = vsub.f32 %v1094, %v1168
      %v1283 = vsub.f32 %v1095, %v1191
      %v1284 = vsub.f32 %v1096, %v1122
      %v1285 = vsub.f32 %v1097, %v1145
      %v1286 = vsub.f32 %v1098, %v1168
      %v1287 = vsub.f32 %v1099, %v1191
      %v1288 = vmul.f32 %v1192, 1.442695
      %v1289 = vpow.pop %v1288
      %v1290 = vmul.f32 %v1193, 1.442695
      %v1291 = vpow.pop %v1290
      %v1292 = vmul.f32 %v1194, 1.442695
      %v1293 = vpow.pop %v1292
      %v1294 = vmul.f32 %v1195, 1.442695
      %v1295 = vpow.pop %v1294
      %v1296 = vmul.f32 %v1196, 1.442695
      %v1297 = vpow.pop %v1296
      %v1298 = vmul.f32 %v1197, 1.442695
      %v1299 = vpow.pop %v1298
      %v1300 = vmul.f32 %v1198, 1.442695
      %v1301 = vpow.pop %v1300
      %v1302 = vmul.f32 %v1199, 1.442695
      %v1303 = vpow.pop %v1302
      %v1304 = vmul.f32 %v1200, 1.442695
      %v1305 = vpow.pop %v1304
      %v1306 = vmul.f32 %v1201, 1.442695
      %v1307 = vpow.pop %v1306
      %v1308 = vmul.f32 %v1202, 1.442695
      %v1309 = vpow.pop %v1308
      %v1310 = vmul.f32 %v1203, 1.442695
      %v1311 = vpow.pop %v1310
      %v1312 = vmul.f32 %v1204, 1.442695
      %v1313 = vpow.pop %v1312
      %v1314 = vmul.f32 %v1205, 1.442695
      %v1315 = vpow.pop %v1314
      %v1316 = vmul.f32 %v1206, 1.442695
      %v1317 = vpow.pop %v1316
      %v1318 = vmul.f32 %v1207, 1.442695
      %v1319 = vpow.pop %v1318
      %v1320 = vmul.f32 %v1208, 1.442695
      %v1321 = vpow.pop %v1320
      %v1322 = vmul.f32 %v1209, 1.442695
      %v1323 = vpow.pop %v1322
      %v1324 = vmul.f32 %v1210, 1.442695
      %v1325 = vpow.pop %v1324
      %v1326 = vmul.f32 %v1211, 1.442695
      %v1327 = vpow.pop %v1326
      %v1328 = vmul.f32 %v1212, 1.442695
      %v1329 = vpow.pop %v1328
      %v1330 = vmul.f32 %v1213, 1.442695
      %v1331 = vpow.pop %v1330
      %v1332 = vmul.f32 %v1214, 1.442695
      %v1333 = vpow.pop %v1332
      %v1334 = vmul.f32 %v1215, 1.442695
      %v1335 = vpow.pop %v1334
      %v1336 = vmul.f32 %v1216, 1.442695
      %v1337 = vpow.pop %v1336
      %v1338 = vmul.f32 %v1217, 1.442695
      %v1339 = vpow.pop %v1338
      %v1340 = vmul.f32 %v1218, 1.442695
      %v1341 = vpow.pop %v1340
      %v1342 = vmul.f32 %v1219, 1.442695
      %v1343 = vpow.pop %v1342
      %v1344 = vmul.f32 %v1220, 1.442695
      %v1345 = vpow.pop %v1344
      %v1346 = vmul.f32 %v1221, 1.442695
      %v1347 = vpow.pop %v1346
      %v1348 = vmul.f32 %v1222, 1.442695
      %v1349 = vpow.pop %v1348
      %v1350 = vmul.f32 %v1223, 1.442695
      %v1351 = vpow.pop %v1350
      %v1352 = vmul.f32 %v1224, 1.442695
      %v1353 = vpow.pop %v1352
      %v1354 = vmul.f32 %v1225, 1.442695
      %v1355 = vpow.pop %v1354
      %v1356 = vmul.f32 %v1226, 1.442695
      %v1357 = vpow.pop %v1356
      %v1358 = vmul.f32 %v1227, 1.442695
      %v1359 = vpow.pop %v1358
      %v1360 = vmul.f32 %v1228, 1.442695
      %v1361 = vpow.pop %v1360
      %v1362 = vmul.f32 %v1229, 1.442695
      %v1363 = vpow.pop %v1362
      %v1364 = vmul.f32 %v1230, 1.442695
      %v1365 = vpow.pop %v1364
      %v1366 = vmul.f32 %v1231, 1.442695
      %v1367 = vpow.pop %v1366
      %v1368 = vmul.f32 %v1232, 1.442695
      %v1369 = vpow.pop %v1368
      %v1370 = vmul.f32 %v1233, 1.442695
      %v1371 = vpow.pop %v1370
      %v1372 = vmul.f32 %v1234, 1.442695
      %v1373 = vpow.pop %v1372
      %v1374 = vmul.f32 %v1235, 1.442695
      %v1375 = vpow.pop %v1374
      %v1376 = vmul.f32 %v1236, 1.442695
      %v1377 = vpow.pop %v1376
      %v1378 = vmul.f32 %v1237, 1.442695
      %v1379 = vpow.pop %v1378
      %v1380 = vmul.f32 %v1238, 1.442695
      %v1381 = vpow.pop %v1380
      %v1382 = vmul.f32 %v1239, 1.442695
      %v1383 = vpow.pop %v1382
      %v1384 = vmul.f32 %v1240, 1.442695
      %v1385 = vpow.pop %v1384
      %v1386 = vmul.f32 %v1241, 1.442695
      %v1387 = vpow.pop %v1386
      %v1388 = vmul.f32 %v1242, 1.442695
      %v1389 = vpow.pop %v1388
      %v1390 = vmul.f32 %v1243, 1.442695
      %v1391 = vpow.pop %v1390
      %v1392 = vmul.f32 %v1244, 1.442695
      %v1393 = vpow.pop %v1392
      %v1394 = vmul.f32 %v1245, 1.442695
      %v1395 = vpow.pop %v1394
      %v1396 = vmul.f32 %v1246, 1.442695
      %v1397 = vpow.pop %v1396
      %v1398 = vmul.f32 %v1247, 1.442695
      %v1399 = vpow.pop %v1398
      %v1400 = vmul.f32 %v1248, 1.442695
      %v1401 = vpow.pop %v1400
      %v1402 = vmul.f32 %v1249, 1.442695
      %v1403 = vpow.pop %v1402
      %v1404 = vmul.f32 %v1250, 1.442695
      %v1405 = vpow.pop %v1404
      %v1406 = vmul.f32 %v1251, 1.442695
      %v1407 = vpow.pop %v1406
      %v1408 = vmul.f32 %v1252, 1.442695
      %v1409 = vpow.pop %v1408
      %v1410 = vmul.f32 %v1253, 1.442695
      %v1411 = vpow.pop %v1410
      %v1412 = vmul.f32 %v1254, 1.442695
      %v1413 = vpow.pop %v1412
      %v1414 = vmul.f32 %v1255, 1.442695
      %v1415 = vpow.pop %v1414
      %v1416 = vmul.f32 %v1256, 1.442695
      %v1417 = vpow.pop %v1416
      %v1418 = vmul.f32 %v1257, 1.442695
      %v1419 = vpow.pop %v1418
      %v1420 = vmul.f32 %v1258, 1.442695
      %v1421 = vpow.pop %v1420
      %v1422 = vmul.f32 %v1259, 1.442695
      %v1423 = vpow.pop %v1422
      %v1424 = vmul.f32 %v1260, 1.442695
      %v1425 = vpow.pop %v1424
      %v1426 = vmul.f32 %v1261, 1.442695
      %v1427 = vpow.pop %v1426
      %v1428 = vmul.f32 %v1262, 1.442695
      %v1429 = vpow.pop %v1428
      %v1430 = vmul.f32 %v1263, 1.442695
      %v1431 = vpow.pop %v1430
      %v1432 = vmul.f32 %v1264, 1.442695
      %v1433 = vpow.pop %v1432
      %v1434 = vmul.f32 %v1265, 1.442695
      %v1435 = vpow.pop %v1434
      %v1436 = vmul.f32 %v1266, 1.442695
      %v1437 = vpow.pop %v1436
      %v1438 = vmul.f32 %v1267, 1.442695
      %v1439 = vpow.pop %v1438
      %v1440 = vmul.f32 %v1268, 1.442695
      %v1441 = vpow.pop %v1440
      %v1442 = vmul.f32 %v1269, 1.442695
      %v1443 = vpow.pop %v1442
      %v1444 = vmul.f32 %v1270, 1.442695
      %v1445 = vpow.pop %v1444
      %v1446 = vmul.f32 %v1271, 1.442695
      %v1447 = vpow.pop %v1446
      %v1448 = vmul.f32 %v1272, 1.442695
      %v1449 = vpow.pop %v1448
      %v1450 = vmul.f32 %v1273, 1.442695
      %v1451 = vpow.pop %v1450
      %v1452 = vmul.f32 %v1274, 1.442695
      %v1453 = vpow.pop %v1452
      %v1454 = vmul.f32 %v1275, 1.442695
      %v1455 = vpow.pop %v1454
      %v1456 = vmul.f32 %v1276, 1.442695
      %v1457 = vpow.pop %v1456
      %v1458 = vmul.f32 %v1277, 1.442695
      %v1459 = vpow.pop %v1458
      %v1460 = vmul.f32 %v1278, 1.442695
      %v1461 = vpow.pop %v1460
      %v1462 = vmul.f32 %v1279, 1.442695
      %v1463 = vpow.pop %v1462
      %v1464 = vmul.f32 %v1280, 1.442695
      %v1465 = vpow.pop %v1464
      %v1466 = vmul.f32 %v1281, 1.442695
      %v1467 = vpow.pop %v1466
      %v1468 = vmul.f32 %v1282, 1.442695
      %v1469 = vpow.pop %v1468
      %v1470 = vmul.f32 %v1283, 1.442695
      %v1471 = vpow.pop %v1470
      %v1472 = vmul.f32 %v1284, 1.442695
      %v1473 = vpow.pop %v1472
      %v1474 = vmul.f32 %v1285, 1.442695
      %v1475 = vpow.pop %v1474
      %v1476 = vmul.f32 %v1286, 1.442695
      %v1477 = vpow.pop %v1476
      %v1478 = vmul.f32 %v1287, 1.442695
      %v1479 = vpow.pop %v1478
      %v1480 = vadd.f32 %v1289, %v1297
      %v1481 = vadd.f32 %v1480, %v1305
      %v1482 = vadd.f32 %v1481, %v1313
      %v1483 = vadd.f32 %v1482, %v1321
      %v1484 = vadd.f32 %v1483, %v1329
      %v1485 = vadd.f32 %v1484, %v1337
      %v1486 = vadd.f32 %v1485, %v1345
      %v1487 = vadd.f32 %v1486, %v1353
      %v1488 = vadd.f32 %v1487, %v1361
      %v1489 = vadd.f32 %v1488, %v1369
      %v1490 = vadd.f32 %v1489, %v1377
      %v1491 = vadd.f32 %v1490, %v1385
      %v1492 = vadd.f32 %v1491, %v1393
      %v1493 = vadd.f32 %v1492, %v1401
      %v1494 = vadd.f32 %v1493, %v1409
      %v1495 = vadd.f32 %v1494, %v1417
      %v1496 = vadd.f32 %v1495, %v1425
      %v1497 = vadd.f32 %v1496, %v1433
      %v1498 = vadd.f32 %v1497, %v1441
      %v1499 = vadd.f32 %v1498, %v1449
      %v1500 = vadd.f32 %v1499, %v1457
      %v1501 = vadd.f32 %v1500, %v1465
      %v1502 = vadd.f32 %v1501, %v1473
      %v1503 = vadd.f32 %v1291, %v1299
      %v1504 = vadd.f32 %v1503, %v1307
      %v1505 = vadd.f32 %v1504, %v1315
      %v1506 = vadd.f32 %v1505, %v1323
      %v1507 = vadd.f32 %v1506, %v1331
      %v1508 = vadd.f32 %v1507, %v1339
      %v1509 = vadd.f32 %v1508, %v1347
      %v1510 = vadd.f32 %v1509, %v1355
      %v1511 = vadd.f32 %v1510, %v1363
      %v1512 = vadd.f32 %v1511, %v1371
      %v1513 = vadd.f32 %v1512, %v1379
      %v1514 = vadd.f32 %v1513, %v1387
      %v1515 = vadd.f32 %v1514, %v1395
      %v1516 = vadd.f32 %v1515, %v1403
      %v1517 = vadd.f32 %v1516, %v1411
      %v1518 = vadd.f32 %v1517, %v1419
      %v1519 = vadd.f32 %v1518, %v1427
      %v1520 = vadd.f32 %v1519, %v1435
      %v1521 = vadd.f32 %v1520, %v1443
      %v1522 = vadd.f32 %v1521, %v1451
      %v1523 = vadd.f32 %v1522, %v1459
      %v1524 = vadd.f32 %v1523, %v1467
      %v1525 = vadd.f32 %v1524, %v1475
      %v1526 = vadd.f32 %v1293, %v1301
      %v1527 = vadd.f32 %v1526, %v1309
      %v1528 = vadd.f32 %v1527, %v1317
      %v1529 = vadd.f32 %v1528, %v1325
      %v1530 = vadd.f32 %v1529, %v1333
      %v1531 = vadd.f32 %v1530, %v1341
      %v1532 = vadd.f32 %v1531, %v1349
      %v1533 = vadd.f32 %v1532, %v1357
      %v1534 = vadd.f32 %v1533, %v1365
      %v1535 = vadd.f32 %v1534, %v1373
      %v1536 = vadd.f32 %v1535, %v1381
      %v1537 = vadd.f32 %v1536, %v1389
      %v1538 = vadd.f32 %v1537, %v1397
      %v1539 = vadd.f32 %v1538, %v1405
      %v1540 = vadd.f32 %v1539, %v1413
      %v1541 = vadd.f32 %v1540, %v1421
      %v1542 = vadd.f32 %v1541, %v1429
      %v1543 = vadd.f32 %v1542, %v1437
      %v1544 = vadd.f32 %v1543, %v1445
      %v1545 = vadd.f32 %v1544, %v1453
      %v1546 = vadd.f32 %v1545, %v1461
      %v1547 = vadd.f32 %v1546, %v1469
      %v1548 = vadd.f32 %v1547, %v1477
      %v1549 = vadd.f32 %v1295, %v1303
      %v1550 = vadd.f32 %v1549, %v1311
      %v1551 = vadd.f32 %v1550, %v1319
      %v1552 = vadd.f32 %v1551, %v1327
      %v1553 = vadd.f32 %v1552, %v1335
      %v1554 = vadd.f32 %v1553, %v1343
      %v1555 = vadd.f32 %v1554, %v1351
      %v1556 = vadd.f32 %v1555, %v1359
      %v1557 = vadd.f32 %v1556, %v1367
      %v1558 = vadd.f32 %v1557, %v1375
      %v1559 = vadd.f32 %v1558, %v1383
      %v1560 = vadd.f32 %v1559, %v1391
      %v1561 = vadd.f32 %v1560, %v1399
      %v1562 = vadd.f32 %v1561, %v1407
      %v1563 = vadd.f32 %v1562, %v1415
      %v1564 = vadd.f32 %v1563, %v1423
      %v1565 = vadd.f32 %v1564, %v1431
      %v1566 = vadd.f32 %v1565, %v1439
      %v1567 = vadd.f32 %v1566, %v1447
      %v1568 = vadd.f32 %v1567, %v1455
      %v1569 = vadd.f32 %v1568, %v1463
      %v1570 = vadd.f32 %v1569, %v1471
      %v1571 = vadd.f32 %v1570, %v1479
      %v1572 = vrcp.pop %v1502
      %v1573 = vrcp.pop %v1525
      %v1574 = vrcp.pop %v1548
      %v1575 = vrcp.pop %v1571
      %v1576 = vmul.f32 %v1289, %v1572
      %v1577 = vmul.f32 %v1291, %v1573
      %v1578 = vmul.f32 %v1293, %v1574
      %v1579 = vmul.f32 %v1295, %v1575
      %v1580 = vmul.f32 %v1297, %v1572
      %v1581 = vmul.f32 %v1299, %v1573
      %v1582 = vmul.f32 %v1301, %v1574
      %v1583 = vmul.f32 %v1303, %v1575
      %v1584 = vmul.f32 %v1305, %v1572
      %v1585 = vmul.f32 %v1307, %v1573
      %v1586 = vmul.f32 %v1309, %v1574
      %v1587 = vmul.f32 %v1311, %v1575
      %v1588 = vmul.f32 %v1313, %v1572
      %v1589 = vmul.f32 %v1315, %v1573
      %v1590 = vmul.f32 %v1317, %v1574
      %v1591 = vmul.f32 %v1319, %v1575
      %v1592 = vmul.f32 %v1321, %v1572
      %v1593 = vmul.f32 %v1323, %v1573
      %v1594 = vmul.f32 %v1325, %v1574
      %v1595 = vmul.f32 %v1327, %v1575
      %v1596 = vmul.f32 %v1329, %v1572
      %v1597 = vmul.f32 %v1331, %v1573
      %v1598 = vmul.f32 %v1333, %v1574
      %v1599 = vmul.f32 %v1335, %v1575
      %v1600 = vmul.f32 %v1337, %v1572
      %v1601 = vmul.f32 %v1339, %v1573
      %v1602 = vmul.f32 %v1341, %v1574
      %v1603 = vmul.f32 %v1343, %v1575
      %v1604 = vmul.f32 %v1345, %v1572
      %v1605 = vmul.f32 %v1347, %v1573
      %v1606 = vmul.f32 %v1349, %v1574
      %v1607 = vmul.f32 %v1351, %v1575
      %v1608 = vmul.f32 %v1353, %v1572
      %v1609 = vmul.f32 %v1355, %v1573
      %v1610 = vmul.f32 %v1357, %v1574
      %v1611 = vmul.f32 %v1359, %v1575
      %v1612 = vmul.f32 %v1361, %v1572
      %v1613 = vmul.f32 %v1363, %v1573
      %v1614 = vmul.f32 %v1365, %v1574
      %v1615 = vmul.f32 %v1367, %v1575
      %v1616 = vmul.f32 %v1369, %v1572
      %v1617 = vmul.f32 %v1371, %v1573
      %v1618 = vmul.f32 %v1373, %v1574
      %v1619 = vmul.f32 %v1375, %v1575
      %v1620 = vmul.f32 %v1377, %v1572
      %v1621 = vmul.f32 %v1379, %v1573
      %v1622 = vmul.f32 %v1381, %v1574
      %v1623 = vmul.f32 %v1383, %v1575
      %v1624 = vmul.f32 %v1385, %v1572
      %v1625 = vmul.f32 %v1387, %v1573
      %v1626 = vmul.f32 %v1389, %v1574
      %v1627 = vmul.f32 %v1391, %v1575
      %v1628 = vmul.f32 %v1393, %v1572
      %v1629 = vmul.f32 %v1395, %v1573
      %v1630 = vmul.f32 %v1397, %v1574
      %v1631 = vmul.f32 %v1399, %v1575
      %v1632 = vmul.f32 %v1401, %v1572
      %v1633 = vmul.f32 %v1403, %v1573
      %v1634 = vmul.f32 %v1405, %v1574
      %v1635 = vmul.f32 %v1407, %v1575
      %v1636 = vmul.f32 %v1409, %v1572
      %v1637 = vmul.f32 %v1411, %v1573
      %v1638 = vmul.f32 %v1413, %v1574
      %v1639 = vmul.f32 %v1415, %v1575
      %v1640 = vmul.f32 %v1417, %v1572
      %v1641 = vmul.f32 %v1419, %v1573
      %v1642 = vmul.f32 %v1421, %v1574
      %v1643 = vmul.f32 %v1423, %v1575
      %v1644 = vmul.f32 %v1425, %v1572
      %v1645 = vmul.f32 %v1427, %v1573
      %v1646 = vmul.f32 %v1429, %v1574
      %v1647 = vmul.f32 %v1431, %v1575
      %v1648 = vmul.f32 %v1433, %v1572
      %v1649 = vmul.f32 %v1435, %v1573
      %v1650 = vmul.f32 %v1437, %v1574
      %v1651 = vmul.f32 %v1439, %v1575
      %v1652 = vmul.f32 %v1441, %v1572
      %v1653 = vmul.f32 %v1443, %v1573
      %v1654 = vmul.f32 %v1445, %v1574
      %v1655 = vmul.f32 %v1447, %v1575
      %v1656 = vmul.f32 %v1449, %v1572
      %v1657 = vmul.f32 %v1451, %v1573
      %v1658 = vmul.f32 %v1453, %v1574
      %v1659 = vmul.f32 %v1455, %v1575
      %v1660 = vmul.f32 %v1457, %v1572
      %v1661 = vmul.f32 %v1459, %v1573
      %v1662 = vmul.f32 %v1461, %v1574
      %v1663 = vmul.f32 %v1463, %v1575
      %v1664 = vmul.f32 %v1465, %v1572
      %v1665 = vmul.f32 %v1467, %v1573
      %v1666 = vmul.f32 %v1469, %v1574
      %v1667 = vmul.f32 %v1471, %v1575
      %v1668 = vmul.f32 %v1473, %v1572
      %v1669 = vmul.f32 %v1475, %v1573
      %v1670 = vmul.f32 %v1477, %v1574
      %v1671 = vmul.f32 %v1479, %v1575
      %v1672 = vmul.f32 %v1576, %v548
      %v1673 = vmul.f32 %v1577, %v549
      %v1674 = vmul.f32 %v1578, %v550
      %v1675 = vmul.f32 %v1579, %v551
      %v1676 = vmul.f32 %v1580, %v552
      %v1677 = vmul.f32 %v1581, %v553
      %v1678 = vmul.f32 %v1582, %v554
      %v1679 = vmul.f32 %v1583, %v555
      %v1680 = vmul.f32 %v1584, %v556
      %v1681 = vmul.f32 %v1585, %v557
      %v1682 = vmul.f32 %v1586, %v558
      %v1683 = vmul.f32 %v1587, %v559
      %v1684 = vmul.f32 %v1588, %v560
      %v1685 = vmul.f32 %v1589, %v561
      %v1686 = vmul.f32 %v1590, %v562
      %v1687 = vmul.f32 %v1591, %v563
      %v1688 = vmul.f32 %v1592, %v564
      %v1689 = vmul.f32 %v1593, %v565
      %v1690 = vmul.f32 %v1594, %v566
      %v1691 = vmul.f32 %v1595, %v567
      %v1692 = vmul.f32 %v1596, %v568
      %v1693 = vmul.f32 %v1597, %v569
      %v1694 = vmul.f32 %v1598, %v570
      %v1695 = vmul.f32 %v1599, %v571
      %v1696 = vmul.f32 %v1600, %v572
      %v1697 = vmul.f32 %v1601, %v573
      %v1698 = vmul.f32 %v1602, %v574
      %v1699 = vmul.f32 %v1603, %v575
      %v1700 = vmul.f32 %v1604, %v576
      %v1701 = vmul.f32 %v1605, %v577
      %v1702 = vmul.f32 %v1606, %v578
      %v1703 = vmul.f32 %v1607, %v579
      %v1704 = vmul.f32 %v1608, %v580
      %v1705 = vmul.f32 %v1609, %v581
      %v1706 = vmul.f32 %v1610, %v582
      %v1707 = vmul.f32 %v1611, %v583
      %v1708 = vmul.f32 %v1612, %v584
      %v1709 = vmul.f32 %v1613, %v585
      %v1710 = vmul.f32 %v1614, %v586
      %v1711 = vmul.f32 %v1615, %v587
      %v1712 = vmul.f32 %v1616, %v588
      %v1713 = vmul.f32 %v1617, %v589
      %v1714 = vmul.f32 %v1618, %v590
      %v1715 = vmul.f32 %v1619, %v591
      %v1716 = vmul.f32 %v1620, %v592
      %v1717 = vmul.f32 %v1621, %v593
      %v1718 = vmul.f32 %v1622, %v594
      %v1719 = vmul.f32 %v1623, %v595
      %v1720 = vmul.f32 %v1624, %v596
      %v1721 = vmul.f32 %v1625, %v597
      %v1722 = vmul.f32 %v1626, %v598
      %v1723 = vmul.f32 %v1627, %v599
      %v1724 = vmul.f32 %v1628, %v600
      %v1725 = vmul.f32 %v1629, %v601
      %v1726 = vmul.f32 %v1630, %v602
      %v1727 = vmul.f32 %v1631, %v603
      %v1728 = vmul.f32 %v1632, %v604
      %v1729 = vmul.f32 %v1633, %v605
      %v1730 = vmul.f32 %v1634, %v606
      %v1731 = vmul.f32 %v1635, %v607
      %v1732 = vmul.f32 %v1636, %v608
      %v1733 = vmul.f32 %v1637, %v609
      %v1734 = vmul.f32 %v1638, %v610
      %v1735 = vmul.f32 %v1639, %v611
      %v1736 = vmul.f32 %v1640, %v612
      %v1737 = vmul.f32 %v1641, %v613
      %v1738 = vmul.f32 %v1642, %v614
      %v1739 = vmul.f32 %v1643, %v615
      %v1740 = vmul.f32 %v1644, %v616
      %v1741 = vmul.f32 %v1645, %v617
      %v1742 = vmul.f32 %v1646, %v618
      %v1743 = vmul.f32 %v1647, %v619
      %v1744 = vmul.f32 %v1648, %v620
      %v1745 = vmul.f32 %v1649, %v621
      %v1746 = vmul.f32 %v1650, %v622
      %v1747 = vmul.f32 %v1651, %v623
      %v1748 = vmul.f32 %v1652, %v624
      %v1749 = vmul.f32 %v1653, %v625
      %v1750 = vmul.f32 %v1654, %v626
      %v1751 = vmul.f32 %v1655, %v627
      %v1752 = vmul.f32 %v1656, %v628
      %v1753 = vmul.f32 %v1657, %v629
      %v1754 = vmul.f32 %v1658, %v630
      %v1755 = vmul.f32 %v1659, %v631
      %v1756 = vmul.f32 %v1660, %v632
      %v1757 = vmul.f32 %v1661, %v633
      %v1758 = vmul.f32 %v1662, %v634
      %v1759 = vmul.f32 %v1663, %v635
      %v1760 = vmul.f32 %v1664, %v636
      %v1761 = vmul.f32 %v1665, %v637
      %v1762 = vmul.f32 %v1666, %v638
      %v1763 = vmul.f32 %v1667, %v639
      %v1764 = vmul.f32 %v1668, %v640
      %v1765 = vmul.f32 %v1669, %v641
      %v1766 = vmul.f32 %v1670, %v642
      %v1767 = vmul.f32 %v1671, %v643
      %v1768 = vadd.f32 %v1672, %v1676
      %v1769 = vadd.f32 %v1768, %v1680
      %v1770 = vadd.f32 %v1769, %v1684
      %v1771 = vadd.f32 %v1770, %v1688
      %v1772 = vadd.f32 %v1771, %v1692
      %v1773 = vadd.f32 %v1772, %v1696
      %v1774 = vadd.f32 %v1773, %v1700
      %v1775 = vadd.f32 %v1774, %v1704
      %v1776 = vadd.f32 %v1775, %v1708
      %v1777 = vadd.f32 %v1776, %v1712
      %v1778 = vadd.f32 %v1777, %v1716
      %v1779 = vadd.f32 %v1778, %v1720
      %v1780 = vadd.f32 %v1779, %v1724
      %v1781 = vadd.f32 %v1780, %v1728
      %v1782 = vadd.f32 %v1781, %v1732
      %v1783 = vadd.f32 %v1782, %v1736
      %v1784 = vadd.f32 %v1783, %v1740
      %v1785 = vadd.f32 %v1784, %v1744
      %v1786 = vadd.f32 %v1785, %v1748
      %v1787 = vadd.f32 %v1786, %v1752
      %v1788 = vadd.f32 %v1787, %v1756
      %v1789 = vadd.f32 %v1788, %v1760
      %v1790 = vadd.f32 %v1789, %v1764
      %v1791 = vadd.f32 %v1673, %v1677
      %v1792 = vadd.f32 %v1791, %v1681
      %v1793 = vadd.f32 %v1792, %v1685
      %v1794 = vadd.f32 %v1793, %v1689
      %v1795 = vadd.f32 %v1794, %v1693
      %v1796 = vadd.f32 %v1795, %v1697
      %v1797 = vadd.f32 %v1796, %v1701
      %v1798 = vadd.f32 %v1797, %v1705
      %v1799 = vadd.f32 %v1798, %v1709
      %v1800 = vadd.f32 %v1799, %v1713
      %v1801 = vadd.f32 %v1800, %v1717
      %v1802 = vadd.f32 %v1801, %v1721
      %v1803 = vadd.f32 %v1802, %v1725
      %v1804 = vadd.f32 %v1803, %v1729
      %v1805 = vadd.f32 %v1804, %v1733
      %v1806 = vadd.f32 %v1805, %v1737
      %v1807 = vadd.f32 %v1806, %v1741
      %v1808 = vadd.f32 %v1807, %v1745
      %v1809 = vadd.f32 %v1808, %v1749
      %v1810 = vadd.f32 %v1809, %v1753
      %v1811 = vadd.f32 %v1810, %v1757
      %v1812 = vadd.f32 %v1811, %v1761
      %v1813 = vadd.f32 %v1812, %v1765
      %v1814 = vadd.f32 %v1674, %v1678
      %v1815 = vadd.f32 %v1814, %v1682
      %v1816 = vadd.f32 %v1815, %v1686
      %v1817 = vadd.f32 %v1816, %v1690
      %v1818 = vadd.f32 %v1817, %v1694
      %v1819 = vadd.f32 %v1818, %v1698
      %v1820 = vadd.f32 %v1819, %v1702
      %v1821 = vadd.f32 %v1820, %v1706
      %v1822 = vadd.f32 %v1821, %v1710
      %v1823 = vadd.f32 %v1822, %v1714
      %v1824 = vadd.f32 %v1823, %v1718
      %v1825 = vadd.f32 %v1824, %v1722
      %v1826 = vadd.f32 %v1825, %v1726
      %v1827 = vadd.f32 %v1826, %v1730
      %v1828 = vadd.f32 %v1827, %v1734
      %v1829 = vadd.f32 %v1828, %v1738
      %v1830 = vadd.f32 %v1829, %v1742
      %v1831 = vadd.f32 %v1830, %v1746
      %v1832 = vadd.f32 %v1831, %v1750
      %v1833 = vadd.f32 %v1832, %v1754
      %v1834 = vadd.f32 %v1833, %v1758
      %v1835 = vadd.f32 %v1834, %v1762
      %v1836 = vadd.f32 %v1835, %v1766
      %v1837 = vadd.f32 %v1675, %v1679
      %v1838 = vadd.f32 %v1837, %v1683
      %v1839 = vadd.f32 %v1838, %v1687
      %v1840 = vadd.f32 %v1839, %v1691
      %v1841 = vadd.f32 %v1840, %v1695
      %v1842 = vadd.f32 %v1841, %v1699
      %v1843 = vadd.f32 %v1842, %v1703
      %v1844 = vadd.f32 %v1843, %v1707
      %v1845 = vadd.f32 %v1844, %v1711
      %v1846 = vadd.f32 %v1845, %v1715
      %v1847 = vadd.f32 %v1846, %v1719
      %v1848 = vadd.f32 %v1847, %v1723
      %v1849 = vadd.f32 %v1848, %v1727
      %v1850 = vadd.f32 %v1849, %v1731
      %v1851 = vadd.f32 %v1850, %v1735
      %v1852 = vadd.f32 %v1851, %v1739
      %v1853 = vadd.f32 %v1852, %v1743
      %v1854 = vadd.f32 %v1853, %v1747
      %v1855 = vadd.f32 %v1854, %v1751
      %v1856 = vadd.f32 %v1855, %v1755
      %v1857 = vadd.f32 %v1856, %v1759
      %v1858 = vadd.f32 %v1857, %v1763
      %v1859 = vadd.f32 %v1858, %v1767
      %1860 = vst [vmem:[%s264] sm:$0xff] %v1790
      %1861 = vst [vmem:[%s264 + $0x8] sm:$0xff] %v1813
      %1862 = vst [vmem:[%s264 + $0x10] sm:$0xff] %v1836
      %1863 = vst [vmem:[%s264 + $0x18] sm:$0xff] %v1859
      %p1864 = scmp.eq.s32.totalorder %s23, 0
      // Predicated region
      $region33: #{embedding_module3d_forward.4} parent=31 // pred_check
        %p1865 = pneg %p1864
      $region34: #{embedding_module3d_forward.4} parent=31 // pred_check_branch
        %1867 = sbr.rel (%p1865) target = $region36
      $region35: #{embedding_module3d_forward.4} parent=31 // pred_region
        %vm1868 = vcmask 130048
        %1869 = vst.msk [vmem:[%s272] sm:$0xff] %vm1868, 0.0
        %1870 = vst.msk [vmem:[%s272 + $0x8] sm:$0xff] %vm1868, 0.0
        %1871 = vst.msk [vmem:[%s272 + $0x10] sm:$0xff] %vm1868, 0.0
      $region36: #{embedding_module3d_forward.4} parent=31 // pred_fallthru
        _
      %v1872 = vld [vmem:[%s272] sm:$0xff]
      %v1873 = vld [vmem:[%s272 + $0x8] sm:$0xff]
      %v1874 = vld [vmem:[%s272 + $0x10] sm:$0xff]
      %v1875 = vadd.f32 %v1672, %v1673
      %1876 = vadd.xlane.f32.xlu0 %v1875
      %v1877 = vpop.xlane.xlu0 %1876
      %v1878 = vadd.f32 %v1674, %v1675
      %1879 = vadd.xlane.f32.xlu0 %v1878
      %v1880 = vpop.xlane.xlu0 %1879
      %v1881 = vadd.f32 %v1676, %v1677
      %1882 = vadd.xlane.f32.xlu0 %v1881
      %v1883 = vpop.xlane.xlu0 %1882
      %v1884 = vadd.f32 %v1678, %v1679
      %1885 = vadd.xlane.f32.xlu0 %v1884
      %v1886 = vpop.xlane.xlu0 %1885
      %v1887 = vadd.f32 %v1680, %v1681
      %1888 = vadd.xlane.f32.xlu0 %v1887
      %v1889 = vpop.xlane.xlu0 %1888
      %v1890 = vadd.f32 %v1682, %v1683
      %1891 = vadd.xlane.f32.xlu0 %v1890
      %v1892 = vpop.xlane.xlu0 %1891
      %v1893 = vadd.f32 %v1684, %v1685
      %1894 = vadd.xlane.f32.xlu0 %v1893
      %v1895 = vpop.xlane.xlu0 %1894
      %v1896 = vadd.f32 %v1686, %v1687
      %1897 = vadd.xlane.f32.xlu0 %v1896
      %v1898 = vpop.xlane.xlu0 %1897
      %v1899 = vadd.f32 %v1688, %v1689
      %1900 = vadd.xlane.f32.xlu0 %v1899
      %v1901 = vpop.xlane.xlu0 %1900
      %v1902 = vadd.f32 %v1690, %v1691
      %1903 = vadd.xlane.f32.xlu0 %v1902
      %v1904 = vpop.xlane.xlu0 %1903
      %v1905 = vadd.f32 %v1692, %v1693
      %1906 = vadd.xlane.f32.xlu0 %v1905
      %v1907 = vpop.xlane.xlu0 %1906
      %v1908 = vadd.f32 %v1694, %v1695
      %1909 = vadd.xlane.f32.xlu0 %v1908
      %v1910 = vpop.xlane.xlu0 %1909
      %v1911 = vadd.f32 %v1696, %v1697
      %1912 = vadd.xlane.f32.xlu0 %v1911
      %v1913 = vpop.xlane.xlu0 %1912
      %v1914 = vadd.f32 %v1698, %v1699
      %1915 = vadd.xlane.f32.xlu0 %v1914
      %v1916 = vpop.xlane.xlu0 %1915
      %v1917 = vadd.f32 %v1700, %v1701
      %1918 = vadd.xlane.f32.xlu0 %v1917
      %v1919 = vpop.xlane.xlu0 %1918
      %v1920 = vadd.f32 %v1702, %v1703
      %1921 = vadd.xlane.f32.xlu0 %v1920
      %v1922 = vpop.xlane.xlu0 %1921
      %v1923 = vadd.f32 %v1704, %v1705
      %1924 = vadd.xlane.f32.xlu0 %v1923
      %v1925 = vpop.xlane.xlu0 %1924
      %v1926 = vadd.f32 %v1706, %v1707
      %1927 = vadd.xlane.f32.xlu0 %v1926
      %v1928 = vpop.xlane.xlu0 %1927
      %v1929 = vadd.f32 %v1708, %v1709
      %1930 = vadd.xlane.f32.xlu0 %v1929
      %v1931 = vpop.xlane.xlu0 %1930
      %v1932 = vadd.f32 %v1710, %v1711
      %1933 = vadd.xlane.f32.xlu0 %v1932
      %v1934 = vpop.xlane.xlu0 %1933
      %v1935 = vadd.f32 %v1712, %v1713
      %1936 = vadd.xlane.f32.xlu0 %v1935
      %v1937 = vpop.xlane.xlu0 %1936
      %v1938 = vadd.f32 %v1714, %v1715
      %1939 = vadd.xlane.f32.xlu0 %v1938
      %v1940 = vpop.xlane.xlu0 %1939
      %v1941 = vadd.f32 %v1716, %v1717
      %1942 = vadd.xlane.f32.xlu0 %v1941
      %v1943 = vpop.xlane.xlu0 %1942
      %v1944 = vadd.f32 %v1718, %v1719
      %1945 = vadd.xlane.f32.xlu0 %v1944
      %v1946 = vpop.xlane.xlu0 %1945
      %v1947 = vadd.f32 %v1720, %v1721
      %1948 = vadd.xlane.f32.xlu0 %v1947
      %v1949 = vpop.xlane.xlu0 %1948
      %v1950 = vadd.f32 %v1722, %v1723
      %1951 = vadd.xlane.f32.xlu0 %v1950
      %v1952 = vpop.xlane.xlu0 %1951
      %v1953 = vadd.f32 %v1724, %v1725
      %1954 = vadd.xlane.f32.xlu0 %v1953
      %v1955 = vpop.xlane.xlu0 %1954
      %v1956 = vadd.f32 %v1726, %v1727
      %1957 = vadd.xlane.f32.xlu0 %v1956
      %v1958 = vpop.xlane.xlu0 %1957
      %v1959 = vadd.f32 %v1728, %v1729
      %1960 = vadd.xlane.f32.xlu0 %v1959
      %v1961 = vpop.xlane.xlu0 %1960
      %v1962 = vadd.f32 %v1730, %v1731
      %1963 = vadd.xlane.f32.xlu0 %v1962
      %v1964 = vpop.xlane.xlu0 %1963
      %v1965 = vadd.f32 %v1732, %v1733
      %1966 = vadd.xlane.f32.xlu0 %v1965
      %v1967 = vpop.xlane.xlu0 %1966
      %v1968 = vadd.f32 %v1734, %v1735
      %1969 = vadd.xlane.f32.xlu0 %v1968
      %v1970 = vpop.xlane.xlu0 %1969
      %v1971 = vadd.f32 %v1736, %v1737
      %1972 = vadd.xlane.f32.xlu0 %v1971
      %v1973 = vpop.xlane.xlu0 %1972
      %v1974 = vadd.f32 %v1738, %v1739
      %1975 = vadd.xlane.f32.xlu0 %v1974
      %v1976 = vpop.xlane.xlu0 %1975
      %v1977 = vadd.f32 %v1740, %v1741
      %1978 = vadd.xlane.f32.xlu0 %v1977
      %v1979 = vpop.xlane.xlu0 %1978
      %v1980 = vadd.f32 %v1742, %v1743
      %1981 = vadd.xlane.f32.xlu0 %v1980
      %v1982 = vpop.xlane.xlu0 %1981
      %v1983 = vadd.f32 %v1744, %v1745
      %1984 = vadd.xlane.f32.xlu0 %v1983
      %v1985 = vpop.xlane.xlu0 %1984
      %v1986 = vadd.f32 %v1746, %v1747
      %1987 = vadd.xlane.f32.xlu0 %v1986
      %v1988 = vpop.xlane.xlu0 %1987
      %v1989 = vadd.f32 %v1748, %v1749
      %1990 = vadd.xlane.f32.xlu0 %v1989
      %v1991 = vpop.xlane.xlu0 %1990
      %v1992 = vadd.f32 %v1750, %v1751
      %1993 = vadd.xlane.f32.xlu0 %v1992
      %v1994 = vpop.xlane.xlu0 %1993
      %v1995 = vadd.f32 %v1752, %v1753
      %1996 = vadd.xlane.f32.xlu0 %v1995
      %v1997 = vpop.xlane.xlu0 %1996
      %v1998 = vadd.f32 %v1754, %v1755
      %1999 = vadd.xlane.f32.xlu0 %v1998
      %v2000 = vpop.xlane.xlu0 %1999
      %v2001 = vadd.f32 %v1756, %v1757
      %2002 = vadd.xlane.f32.xlu0 %v2001
      %v2003 = vpop.xlane.xlu0 %2002
      %v2004 = vadd.f32 %v1758, %v1759
      %2005 = vadd.xlane.f32.xlu0 %v2004
      %v2006 = vpop.xlane.xlu0 %2005
      %v2007 = vadd.f32 %v1760, %v1761
      %2008 = vadd.xlane.f32.xlu0 %v2007
      %v2009 = vpop.xlane.xlu0 %2008
      %v2010 = vadd.f32 %v1762, %v1763
      %2011 = vadd.xlane.f32.xlu0 %v2010
      %v2012 = vpop.xlane.xlu0 %2011
      %v2013 = vadd.f32 %v1764, %v1765
      %2014 = vadd.xlane.f32.xlu0 %v2013
      %v2015 = vpop.xlane.xlu0 %2014
      %v2016 = vadd.f32 %v1766, %v1767
      %2017 = vadd.xlane.f32.xlu0 %v2016
      %v2018 = vpop.xlane.xlu0 %2017
      %v2067 = vlaneseq
      %v2068 = vand.u32 %v2067, 127
      %v2069 = vlaneseq
      %v2070 = vshrl.u32 %v2069, 7
      %v2071 = vsub.s32 %v2068, %v2070
      %v2072 = vrot.slane %v1877, %v2071
      %v2073 = vadd.s32 %v2068, 4294967288
      %v2074 = vlaneseq
      %v2075 = vshrl.u32 %v2074, 7
      %v2076 = vsub.s32 %v2073, %v2075
      %v2077 = vrot.slane %v1880, %v2076
      %vm2078 = vcmask 130112
      %v2079 = vsel %vm2078, %v2077, %v2072
      %v2080 = vlaneseq
      %v2081 = vshrl.u32 %v2080, 7
      %v2082 = vsub.s32 %v2068, %v2081
      %v2083 = vrot.slane %v1883, %v2082
      %v2084 = vlaneseq
      %v2085 = vshrl.u32 %v2084, 7
      %v2086 = vsub.s32 %v2073, %v2085
      %v2087 = vrot.slane %v1886, %v2086
      %v2088 = vsel %vm2078, %v2087, %v2083
      %v2089 = vlaneseq
      %v2090 = vshrl.u32 %v2089, 7
      %v2091 = vsub.s32 %v2068, %v2090
      %v2092 = vrot.slane %v1889, %v2091
      %v2093 = vlaneseq
      %v2094 = vshrl.u32 %v2093, 7
      %v2095 = vsub.s32 %v2073, %v2094
      %v2096 = vrot.slane %v1892, %v2095
      %v2097 = vsel %vm2078, %v2096, %v2092
      %v2098 = vlaneseq
      %v2099 = vshrl.u32 %v2098, 7
      %v2100 = vsub.s32 %v2068, %v2099
      %v2101 = vrot.slane %v1895, %v2100
      %v2102 = vlaneseq
      %v2103 = vshrl.u32 %v2102, 7
      %v2104 = vsub.s32 %v2073, %v2103
      %v2105 = vrot.slane %v1898, %v2104
      %v2106 = vsel %vm2078, %v2105, %v2101
      %v2107 = vlaneseq
      %v2108 = vshrl.u32 %v2107, 7
      %v2109 = vsub.s32 %v2068, %v2108
      %v2110 = vrot.slane %v1901, %v2109
      %v2111 = vlaneseq
      %v2112 = vshrl.u32 %v2111, 7
      %v2113 = vsub.s32 %v2073, %v2112
      %v2114 = vrot.slane %v1904, %v2113
      %v2115 = vsel %vm2078, %v2114, %v2110
      %v2116 = vlaneseq
      %v2117 = vshrl.u32 %v2116, 7
      %v2118 = vsub.s32 %v2068, %v2117
      %v2119 = vrot.slane %v1907, %v2118
      %v2120 = vlaneseq
      %v2121 = vshrl.u32 %v2120, 7
      %v2122 = vsub.s32 %v2073, %v2121
      %v2123 = vrot.slane %v1910, %v2122
      %v2124 = vsel %vm2078, %v2123, %v2119
      %v2125 = vlaneseq
      %v2126 = vshrl.u32 %v2125, 7
      %v2127 = vsub.s32 %v2068, %v2126
      %v2128 = vrot.slane %v1913, %v2127
      %v2129 = vlaneseq
      %v2130 = vshrl.u32 %v2129, 7
      %v2131 = vsub.s32 %v2073, %v2130
      %v2132 = vrot.slane %v1916, %v2131
      %v2133 = vsel %vm2078, %v2132, %v2128
      %v2134 = vlaneseq
      %v2135 = vshrl.u32 %v2134, 7
      %v2136 = vsub.s32 %v2068, %v2135
      %v2137 = vrot.slane %v1919, %v2136
      %v2138 = vlaneseq
      %v2139 = vshrl.u32 %v2138, 7
      %v2140 = vsub.s32 %v2073, %v2139
      %v2141 = vrot.slane %v1922, %v2140
      %v2142 = vsel %vm2078, %v2141, %v2137
      %v2143 = vlaneseq
      %v2144 = vshrl.u32 %v2143, 7
      %v2145 = vsub.s32 %v2068, %v2144
      %v2146 = vrot.slane %v1925, %v2145
      %v2147 = vlaneseq
      %v2148 = vshrl.u32 %v2147, 7
      %v2149 = vsub.s32 %v2073, %v2148
      %v2150 = vrot.slane %v1928, %v2149
      %v2151 = vsel %vm2078, %v2150, %v2146
      %v2152 = vlaneseq
      %v2153 = vshrl.u32 %v2152, 7
      %v2154 = vsub.s32 %v2068, %v2153
      %v2155 = vrot.slane %v1931, %v2154
      %v2156 = vlaneseq
      %v2157 = vshrl.u32 %v2156, 7
      %v2158 = vsub.s32 %v2073, %v2157
      %v2159 = vrot.slane %v1934, %v2158
      %v2160 = vsel %vm2078, %v2159, %v2155
      %v2161 = vlaneseq
      %v2162 = vshrl.u32 %v2161, 7
      %v2163 = vsub.s32 %v2068, %v2162
      %v2164 = vrot.slane %v1937, %v2163
      %v2165 = vlaneseq
      %v2166 = vshrl.u32 %v2165, 7
      %v2167 = vsub.s32 %v2073, %v2166
      %v2168 = vrot.slane %v1940, %v2167
      %v2169 = vsel %vm2078, %v2168, %v2164
      %v2170 = vlaneseq
      %v2171 = vshrl.u32 %v2170, 7
      %v2172 = vsub.s32 %v2068, %v2171
      %v2173 = vrot.slane %v1943, %v2172
      %v2174 = vlaneseq
      %v2175 = vshrl.u32 %v2174, 7
      %v2176 = vsub.s32 %v2073, %v2175
      %v2177 = vrot.slane %v1946, %v2176
      %v2178 = vsel %vm2078, %v2177, %v2173
      %v2179 = vlaneseq
      %v2180 = vshrl.u32 %v2179, 7
      %v2181 = vsub.s32 %v2068, %v2180
      %v2182 = vrot.slane %v1949, %v2181
      %v2183 = vlaneseq
      %v2184 = vshrl.u32 %v2183, 7
      %v2185 = vsub.s32 %v2073, %v2184
      %v2186 = vrot.slane %v1952, %v2185
      %v2187 = vsel %vm2078, %v2186, %v2182
      %v2188 = vlaneseq
      %v2189 = vshrl.u32 %v2188, 7
      %v2190 = vsub.s32 %v2068, %v2189
      %v2191 = vrot.slane %v1955, %v2190
      %v2192 = vlaneseq
      %v2193 = vshrl.u32 %v2192, 7
      %v2194 = vsub.s32 %v2073, %v2193
      %v2195 = vrot.slane %v1958, %v2194
      %v2196 = vsel %vm2078, %v2195, %v2191
      %v2197 = vlaneseq
      %v2198 = vshrl.u32 %v2197, 7
      %v2199 = vsub.s32 %v2068, %v2198
      %v2200 = vrot.slane %v1961, %v2199
      %v2201 = vlaneseq
      %v2202 = vshrl.u32 %v2201, 7
      %v2203 = vsub.s32 %v2073, %v2202
      %v2204 = vrot.slane %v1964, %v2203
      %v2205 = vsel %vm2078, %v2204, %v2200
      %v2206 = vlaneseq
      %v2207 = vshrl.u32 %v2206, 7
      %v2208 = vsub.s32 %v2068, %v2207
      %v2209 = vrot.slane %v1967, %v2208
      %v2210 = vlaneseq
      %v2211 = vshrl.u32 %v2210, 7
      %v2212 = vsub.s32 %v2073, %v2211
      %v2213 = vrot.slane %v1970, %v2212
      %v2214 = vsel %vm2078, %v2213, %v2209
      %v2215 = vlaneseq
      %v2216 = vshrl.u32 %v2215, 7
      %v2217 = vsub.s32 %v2068, %v2216
      %v2218 = vrot.slane %v1973, %v2217
      %v2219 = vlaneseq
      %v2220 = vshrl.u32 %v2219, 7
      %v2221 = vsub.s32 %v2073, %v2220
      %v2222 = vrot.slane %v1976, %v2221
      %v2223 = vsel %vm2078, %v2222, %v2218
      %v2224 = vlaneseq
      %v2225 = vshrl.u32 %v2224, 7
      %v2226 = vsub.s32 %v2068, %v2225
      %v2227 = vrot.slane %v1979, %v2226
      %v2228 = vlaneseq
      %v2229 = vshrl.u32 %v2228, 7
      %v2230 = vsub.s32 %v2073, %v2229
      %v2231 = vrot.slane %v1982, %v2230
      %v2232 = vsel %vm2078, %v2231, %v2227
      %v2233 = vlaneseq
      %v2234 = vshrl.u32 %v2233, 7
      %v2235 = vsub.s32 %v2068, %v2234
      %v2236 = vrot.slane %v1985, %v2235
      %v2237 = vlaneseq
      %v2238 = vshrl.u32 %v2237, 7
      %v2239 = vsub.s32 %v2073, %v2238
      %v2240 = vrot.slane %v1988, %v2239
      %v2241 = vsel %vm2078, %v2240, %v2236
      %v2242 = vlaneseq
      %v2243 = vshrl.u32 %v2242, 7
      %v2244 = vsub.s32 %v2068, %v2243
      %v2245 = vrot.slane %v1991, %v2244
      %v2246 = vlaneseq
      %v2247 = vshrl.u32 %v2246, 7
      %v2248 = vsub.s32 %v2073, %v2247
      %v2249 = vrot.slane %v1994, %v2248
      %v2250 = vsel %vm2078, %v2249, %v2245
      %v2251 = vlaneseq
      %v2252 = vshrl.u32 %v2251, 7
      %v2253 = vsub.s32 %v2068, %v2252
      %v2254 = vrot.slane %v1997, %v2253
      %v2255 = vlaneseq
      %v2256 = vshrl.u32 %v2255, 7
      %v2257 = vsub.s32 %v2073, %v2256
      %v2258 = vrot.slane %v2000, %v2257
      %v2259 = vsel %vm2078, %v2258, %v2254
      %v2260 = vlaneseq
      %v2261 = vshrl.u32 %v2260, 7
      %v2262 = vsub.s32 %v2068, %v2261
      %v2263 = vrot.slane %v2003, %v2262
      %v2264 = vlaneseq
      %v2265 = vshrl.u32 %v2264, 7
      %v2266 = vsub.s32 %v2073, %v2265
      %v2267 = vrot.slane %v2006, %v2266
      %v2268 = vsel %vm2078, %v2267, %v2263
      %v2269 = vlaneseq
      %v2270 = vshrl.u32 %v2269, 7
      %v2271 = vsub.s32 %v2068, %v2270
      %v2272 = vrot.slane %v2009, %v2271
      %v2273 = vlaneseq
      %v2274 = vshrl.u32 %v2273, 7
      %v2275 = vsub.s32 %v2073, %v2274
      %v2276 = vrot.slane %v2012, %v2275
      %v2277 = vsel %vm2078, %v2276, %v2272
      %v2278 = vlaneseq
      %v2279 = vshrl.u32 %v2278, 7
      %v2280 = vsub.s32 %v2068, %v2279
      %v2281 = vrot.slane %v2015, %v2280
      %v2282 = vlaneseq
      %v2283 = vshrl.u32 %v2282, 7
      %v2284 = vsub.s32 %v2073, %v2283
      %v2285 = vrot.slane %v2018, %v2284
      %v2286 = vsel %vm2078, %v2285, %v2281
      %vm2287 = vcmask 1041409
      %v2288 = vsel %vm2287, %v2088, %v2079
      %vm2289 = vcmask 1042434
      %v2290 = vsel %vm2289, %v2097, %v2288
      %vm2291 = vcmask 1043459
      %v2292 = vsel %vm2291, %v2106, %v2290
      %vm2293 = vcmask 1044484
      %v2294 = vsel %vm2293, %v2115, %v2292
      %vm2295 = vcmask 1045509
      %v2296 = vsel %vm2295, %v2124, %v2294
      %vm2297 = vcmask 1046534
      %v2298 = vsel %vm2297, %v2133, %v2296
      %vm2299 = vcmask 1047559
      %v2300 = vsel %vm2299, %v2142, %v2298
      %v2301 = vsel %vm2287, %v2160, %v2151
      %v2302 = vsel %vm2289, %v2169, %v2301
      %v2303 = vsel %vm2291, %v2178, %v2302
      %v2304 = vsel %vm2293, %v2187, %v2303
      %v2305 = vsel %vm2295, %v2196, %v2304
      %v2306 = vsel %vm2297, %v2205, %v2305
      %v2307 = vsel %vm2299, %v2214, %v2306
      %v2308 = vsel %vm2287, %v2232, %v2223
      %v2309 = vsel %vm2289, %v2241, %v2308
      %v2310 = vsel %vm2291, %v2250, %v2309
      %v2311 = vsel %vm2293, %v2259, %v2310
      %v2312 = vsel %vm2295, %v2268, %v2311
      %v2313 = vsel %vm2297, %v2277, %v2312
      %v2314 = vsel %vm2299, %v2286, %v2313
      %v2318 = vadd.f32 %v1872, %v2300
      %v2319 = vadd.f32 %v1873, %v2307
      %v2320 = vadd.f32 %v1874, %v2314
      %vm2321 = vcmask 130048
      %2322 = vst.msk [vmem:[%s272] sm:$0xff] %vm2321, %v2318
      %2323 = vst.msk [vmem:[%s272 + $0x8] sm:$0xff] %vm2321, %v2319
      %2324 = vst.msk [vmem:[%s272 + $0x10] sm:$0xff] %vm2321, %v2320
      %s2325 = sadd.s32 %s22, %s23
      %s2326 = smul.u32 2, %s2325
      %p2327 = scmp.lt.s32.totalorder %s21, 1
      %s2328 = scalar_select %p2327, %s21, 1
      %p2329 = scmp.lt.s32.totalorder %s2326, 1
      %s2330 = scalar_select %p2329, %s2326, 1
      %s2331 = smul.addr %s2328, 4
      %s2332 = sadd.s32 %s2330, %s2331
      %s2333 = smul.addr %s2332, 8
      %s2334 = scalar_lea.vmem %s3, %s2333
      %s2335 = sadd.s32 %s21, %s22
      %p2336 = scmp.lt.s32.totalorder %s2335, 1
      %s2337 = scalar_select %p2336, %s2335, 1
      %s2338 = smul.addr %s2337, 3
      %s2339 = smul.addr %s2338, 8
      %s2340 = scalar_lea.vmem %s4, %s2339
      // Predicated region
      $region37: #{embedding_module3d_forward.4} parent=31 // pred_check
        %p2341 = pneg %p129
      $region38: #{embedding_module3d_forward.4} parent=31 // pred_check_branch
        %2343 = sbr.rel (%p2341) target = $region40
      $region39: #{embedding_module3d_forward.4} parent=31 // pred_region
        %s2344 = sadd.s32 %s22, %s23
        %s2345 = smul.u32 2, %s2344
      $region40: #{embedding_module3d_forward.4} parent=31 // pred_fallthru
        _
      // Predicated region
      $region41: #{embedding_module3d_forward.4} parent=31 // pred_check
        %p2346 = pneg %p157
      $region42: #{embedding_module3d_forward.4} parent=31 // pred_check_branch
        %2348 = sbr.rel (%p2346) target = $region44
      $region43: #{embedding_module3d_forward.4} parent=31 // pred_region
        %s2349 = sadd.s32 %s21, %s22
      $region44: #{embedding_module3d_forward.4} parent=31 // pred_fallthru
        _
    $region32: #{embedding_module3d_forward.4} parent=5 // pred_fallthru
      _
    %p2350 = scmp.le.s32.totalorder 2, %s11
    // Predicated region
    $region45: #{embedding_module3d_forward.4} parent=5 // pred_check
      %p2351 = pneg %p2350
    $region46: #{embedding_module3d_forward.4} parent=5 // pred_check_branch
      %2353 = sbr.rel (%p2351) target = $region48
    $region47: #{embedding_module3d_forward.4} parent=5 // pred_region
      %s2354 = ssub.s32 %s11, 2
      // Predicated region
      $region49: #{embedding_module3d_forward.4} parent=47 // pred_check
        %p2355 = pneg %p135
      $region50: #{embedding_module3d_forward.4} parent=47 // pred_check_branch
        %2357 = sbr.rel (%p2355) target = $region52
      $region51: #{embedding_module3d_forward.4} parent=47 // pred_region
        %s2358 = sadd.s32 %s25, %s26
        %s2359 = smul.u32 2, %s2358
        %p2360 = scmp.lt.s32.totalorder %s24, 1
        %s2361 = scalar_select %p2360, %s24, 1
        %p2362 = scmp.lt.s32.totalorder %s2359, 1
        %s2363 = scalar_select %p2362, %s2359, 1
        %s2364 = smul.addr %s2361, 4
        %s2365 = sadd.s32 %s2363, %s2364
        %s2366 = smul.addr %s2365, 8
        %s2367 = scalar_lea.vmem %s3, %s2366
      $region52: #{embedding_module3d_forward.4} parent=47 // pred_fallthru
        _
      // Predicated region
      $region53: #{embedding_module3d_forward.4} parent=47 // pred_check
        %p2368 = pneg %p163
      $region54: #{embedding_module3d_forward.4} parent=47 // pred_check_branch
        %2370 = sbr.rel (%p2368) target = $region56
      $region55: #{embedding_module3d_forward.4} parent=47 // pred_region
        %s2371 = sadd.s32 %s24, %s25
        %p2372 = scmp.lt.s32.totalorder %s2371, 1
        %s2373 = scalar_select %p2372, %s2371, 1
        %s2374 = smul.addr %s2373, 3
        %s2375 = smul.addr %s2374, 8
        %s2376 = scalar_lea.vmem %s4, %s2375
      $region56: #{embedding_module3d_forward.4} parent=47 // pred_fallthru
        _
    $region48: #{embedding_module3d_forward.4} parent=5 // pred_fallthru
      _
  $region6: #{embedding_module3d_forward.4} parent=0 // loop_footer
    %s15 = sadd.s32 1, %s11
  $region7: #{embedding_module3d_forward.4} parent=0 // loop_footer_branch
    %10 = sbr.rel target = $region3
  $region8: #{embedding_module3d_forward.4} parent=0 // loop_exit
    _

</llo_original>
